<compile_context>
chip_gen: v6e
topology: v6e:2x2x1
jax: 0.10.0
libtpu: 0.0.40
codegen_flags: <defaults>
</compile_context>

<pallas_src>
import functools

import jax
import jax.numpy as jnp
from jax import lax
from jax.experimental import pallas as pl
from jax.experimental.pallas import tpu as pltpu

LANE = 128


def _round_up(x, m):
    return (x + m - 1) // m * m


def _pick_tile_h(h, wp, target_rows=1024):
    """Largest divisor d of h with d*wp <= target_rows and (d*wp) % 8 == 0 (or d == h)."""
    cands = [d for d in range(1, h + 1)
             if h % d == 0 and (d == h or (d * wp) % 8 == 0)]
    fit = [d for d in cands if d * wp <= target_rows]
    if fit:
        return max(fit)
    return min(cands, key=lambda d: d * wp)   # pathological shapes: smallest legal tile


def convblock_kernel(x_ref, w_ref, sb_ref, o_ref, acc_ref, *stage_scratch,
                     wp, compute_dtype):
    """Fused 3x3 conv (stride=1, pad=1, no bias) + BatchNorm(eval) + ReLU.

    x_ref:   (1, Lp, Cin_k)     zero-padded, spatially-flattened NHWC input
    w_ref:   (9, Cin_k, CT)     3x3 taps (HWIO order), Cout-padded
    sb_ref:  (2, CT)            folded BN [scale; bias] (f32)
    o_ref:   (1, tile_m, CT)    output rows [m0, m0+tile_m) of the flat (H*Wp) grid
    acc_ref: (tile_m, CT) f32   VMEM accumulator scratch
    stage_scratch (optional): (Lp, Cin_k) f32 staging copy of the x block so every shifted
        sublane load happens at 32-bit granularity even when compute_dtype is 16-bit.
    """
    tile_m = o_ref.shape[1]

    m0 = pl.program_id(2) * tile_m
    if tile_m % 8 == 0:
        m0 = pl.multiple_of(m0, 8)

    if stage_scratch:
        x = stage_scratch[0]
        # The x block index only changes with grid axis 0 (n); axes 1/2 are "arbitrary",
        # so the (c == 0, m == 0) step always runs first for each n on its core.
        @pl.when((pl.program_id(1) == 0) & (pl.program_id(2) == 0))
        def _stage():
            x[...] = x_ref[0].astype(jnp.float32)
    else:
        x = x_ref.at[0]                                   # (Lp, Cin_k) f32 ref view

    def tap(kh, kw):
        # 3x3 conv as 9 shifted contiguous-window matmuls: tap (kh, kw) reads the flat
        # buffer at row offset kh*Wp + kw (pure sublane shift, no strided re-gather).
        patch = x[pl.ds(m0 + kh * wp + kw, tile_m), :]    # (tile_m, Cin_k) f32
        return jnp.dot(patch.astype(compute_dtype), w_ref[kh * 3 + kw],
                       preferred_element_type=jnp.float32)

    acc_ref[...] = tap(0, 0)
    for kh in range(3):
        for kw in range(3):
            if kh == 0 and kw == 0:
                continue
            acc_ref[...] += tap(kh, kw)

    sb = sb_ref[...]                                      # (2, CT) f32
    y = acc_ref[...] * sb[0:1, :] + sb[1:2, :]            # fused BatchNorm (eval), f32
    o_ref[0] = jnp.maximum(y, 0.0).astype(o_ref.dtype)    # ReLU


@functools.partial(jax.jit, static_argnames=("compute_dtype",))
def conv_block_forward(x_nchw, w_oihw, gamma, beta, running_mean, running_var,
                       compute_dtype=jnp.bfloat16):
    """Forward pass matching ConvBlock(in_ch, out_ch, stride=1) in eval mode.

    compute_dtype: MXU operand dtype (default bfloat16; accumulation and the BN/ReLU
    epilogue stay float32 either way; pass jnp.float32 for a bit-exact-ish path).
    """
    eps = 1e-5
    N, Cin, H, W = x_nchw.shape
    Cout = w_oihw.shape[0]

    item = jnp.dtype(compute_dtype).itemsize
    stage = jnp.dtype(compute_dtype) != jnp.dtype(jnp.float32)

    Cin_k = _round_up(Cin, 8)            # sublane granule only -- NOT padded to 128 anymore
    Cout_p = _round_up(Cout, LANE)
    cout_tile = 256 if Cout_p % 256 == 0 else LANE   # fill the 256-wide MXU on v6e/v7x
    Wp = W + 2                           # conv pad=1: one zero column on each side
    Lp = (H + 3) * Wp                    # 1 top pad row + 2 bottom rows of tap-offset slack
    M = H * Wp                           # flat output rows (garbage cols j>=W sliced later)

    # ---- glue (plain JAX): layout + one fused zero-pad + BN folding ----
    x_nhwc = jnp.transpose(x_nchw, (0, 2, 3, 1))
    x_pad = jnp.pad(x_nhwc, ((0, 0), (1, 2), (1, 1), (0, Cin_k - Cin)))
    x_flat = x_pad.reshape(N, Lp, Cin_k).astype(compute_dtype)

    w_hwio = jnp.transpose(w_oihw, (2, 3, 1, 0)).reshape(9, Cin, Cout)
    w_p = jnp.pad(w_hwio, ((0, 0), (0, Cin_k - Cin),
                           (0, Cout_p - Cout))).astype(compute_dtype)

    scale = gamma / jnp.sqrt(running_var + eps)
    bias = beta - running_mean * scale
    sb = jnp.pad(jnp.stack([scale, bias]).astype(jnp.float32),
                 ((0, 0), (0, Cout_p - Cout)))

    tile_h = _pick_tile_h(H, Wp)
    tile_m = tile_h * Wp
    n_m = H // tile_h
    n_ct = Cout_p // cout_tile

    # ---- explicit VMEM budget: 2x (double-buffered) per pipelined block + scratch ----
    def _vmem(rows, cols, itemsize, sub=8):
        return _round_up(rows, sub) * _round_up(cols, LANE) * itemsize

    vmem_needed = (
        2 * _vmem(Lp, Cin_k, item, sub=16)                 # x block
        + 2 * 9 * _vmem(Cin_k, cout_tile, item, sub=16)    # w block
        + 2 * _vmem(2, cout_tile, 4)                       # scale/bias block
        + 2 * _vmem(tile_m, cout_tile, 4)                  # out block
        + _vmem(tile_m, cout_tile, 4)                      # f32 accumulator scratch
        + (_vmem(Lp, Cin_k, 4) if stage else 0))           # f32 staging scratch
    vmem_limit = min(max(vmem_needed * 5 // 4 + (6 << 20), 16 << 20), 100 << 20)

    scratch_shapes = [pltpu.VMEM((tile_m, cout_tile), jnp.float32)]
    if stage:
        scratch_shapes.append(pltpu.VMEM((Lp, Cin_k), jnp.float32))

    # Only the batch axis may be core-split: the staging guard must see (c==0, m==0) for
    # every n a core owns, and splitting m would duplicate the whole-image x DMA per core.
    dims = (("parallel", "arbitrary", "arbitrary") if stage
            else ("parallel", "parallel", "arbitrary"))

    cost = pl.CostEstimate(
        flops=2 * 9 * N * H * W * Cin_k * Cout_p,
        transcendentals=0,
        bytes_accessed=(N * Lp * Cin_k * item + 9 * Cin_k * Cout_p * item
                        + 2 * Cout_p * 4 + N * M * Cout_p * 4))

    # ---- hot path: fused conv + BN + ReLU ----
    out_flat = pl.pallas_call(
        functools.partial(convblock_kernel, wp=Wp, compute_dtype=compute_dtype),
        out_shape=jax.ShapeDtypeStruct((N, M, Cout_p), jnp.float32),
        grid_spec=pltpu.PrefetchScalarGridSpec(
            num_scalar_prefetch=0,
            grid=(N, n_ct, n_m),
            in_specs=[
                # whole flat image per batch element: block index constant across (c, m),
                # so it is DMA'd to VMEM once per n and stays resident.
                pl.BlockSpec((1, Lp, Cin_k), lambda n, c, m: (n, 0, 0)),
                pl.BlockSpec((9, Cin_k, cout_tile), lambda n, c, m: (0, 0, c)),
                pl.BlockSpec((2, cout_tile), lambda n, c, m: (0, c)),
            ],
            out_specs=pl.BlockSpec((1, tile_m, cout_tile),
                                   lambda n, c, m: (n, m, c)),
            scratch_shapes=scratch_shapes),
        compiler_params=pltpu.CompilerParams(
            dimension_semantics=dims, vmem_limit_bytes=vmem_limit),
        cost_estimate=cost,
    )(x_flat, w_p, sb)

    # Drop padded columns / channels and return NCHW to match the nn.Module contract.
    out = out_flat.reshape(N, H, Wp, Cout_p)[:, :, :W, :Cout]
    return jnp.transpose(out, (0, 3, 1, 2))


def _reference(x_nchw, w_oihw, gamma, beta, running_mean, running_var):
    """Pure-JAX reference (lax conv + BN eval + ReLU)."""
    eps = 1e-5
    y = lax.conv_general_dilated(
        x_nchw, w_oihw, window_strides=(1, 1), padding=((1, 1), (1, 1)),
        dimension_numbers=("NCHW", "OIHW", "NCHW"))
    scale = (gamma / jnp.sqrt(running_var + eps)).reshape(1, -1, 1, 1)
    bias = (beta - running_mean * gamma / jnp.sqrt(running_var + eps)).reshape(1, -1, 1, 1)
    return jnp.maximum(y * scale + bias, 0.0)


if __name__ == "__main__":
    def run_case(key, N, Cin, H, W, Cout, compute_dtype, atol, rtol):
        k_x, k_w, k_g, k_b, k_m, k_v = jax.random.split(key, 6)
        x = jax.random.normal(k_x, (N, Cin, H, W), dtype=jnp.float32)
        w = jax.random.normal(k_w, (Cout, Cin, 3, 3), dtype=jnp.float32) * 0.1
        gamma = 1.0 + 0.1 * jax.random.normal(k_g, (Cout,), dtype=jnp.float32)
        beta = 0.1 * jax.random.normal(k_b, (Cout,), dtype=jnp.float32)
        rm = 0.1 * jax.random.normal(k_m, (Cout,), dtype=jnp.float32)
        rv = 1.0 + 0.1 * jax.random.uniform(k_v, (Cout,), dtype=jnp.float32)

        out = jax.block_until_ready(
            conv_block_forward(x, w, gamma, beta, rm, rv, compute_dtype=compute_dtype))
        assert out.shape == (N, Cout, H, W)

        if jnp.dtype(compute_dtype) == jnp.dtype(jnp.bfloat16):
            # compare against a reference whose conv operands saw the same bf16 rounding
            xr = x.astype(jnp.bfloat16).astype(jnp.float32)
            wr = w.astype(jnp.bfloat16).astype(jnp.float32)
        else:
            xr, wr = x, w
        ref = _reference(xr, wr, gamma, beta, rm, rv)
        assert jnp.allclose(out, ref, atol=atol, rtol=rtol), \
            f"mismatch vs reference (max abs err {jnp.max(jnp.abs(out - ref))})"

    key = jax.random.PRNGKey(0)
    k1, k2, k3, k4 = jax.random.split(key, 4)
    # spec-sized toy shape, default bf16 path
    run_case(k1, N=2, Cin=4, H=16, W=16, Cout=8,
             compute_dtype=jnp.bfloat16, atol=1e-2, rtol=1e-2)
    # 256-wide Cout tile (Cout_p = 256) and tiny first-layer Cin
    run_case(k2, N=1, Cin=3, H=12, W=12, Cout=160,
             compute_dtype=jnp.bfloat16, atol=1e-2, rtol=1e-2)
    # multiple M tiles (dynamic m0) and multiple Cout tiles
    run_case(k3, N=1, Cin=8, H=32, W=32, Cout=320,
             compute_dtype=jnp.bfloat16, atol=1e-2, rtol=1e-2)
    # exact f32 path (no staging scratch), multiple M tiles
    run_case(k4, N=1, Cin=4, H=32, W=32, Cout=8,
             compute_dtype=jnp.float32, atol=2e-4, rtol=2e-4)
    print("KERNEL_OK")
</pallas_src>

<mosaic_0001>
module attributes {stable_mosaic.version = 11 : i64} {
  func.func @convblock_kernel(%arg0: i32, %arg1: i32, %arg2: i32, %arg3: memref<1x342x8xbf16, #tpu.memory_space<vmem>>, %arg4: memref<9x8x128xbf16, #tpu.memory_space<vmem>>, %arg5: memref<2x128xf32, #tpu.memory_space<vmem>>, %arg6: memref<1x288x128xf32, #tpu.memory_space<vmem>>, %arg7: memref<288x128xf32, #tpu.memory_space<vmem>>, %arg8: memref<342x8xf32, #tpu.memory_space<vmem>>) attributes {dimension_semantics = [#tpu.dimension_semantics<parallel>, #tpu.dimension_semantics<arbitrary>, #tpu.dimension_semantics<arbitrary>], iteration_bounds = array<i64: 2, 1, 1>, scalar_prefetch = 0 : i64, scratch_operands = 2 : i64, tpu.core_type = #tpu.core_type<tc>, window_params = [{transform_indices = @transform_0, window_bounds = array<i64: 1, 342, 8>}, {transform_indices = @transform_1, window_bounds = array<i64: 9, 8, 128>}, {transform_indices = @transform_2, window_bounds = array<i64: 2, 128>}, {transform_indices = @transform_3, window_bounds = array<i64: 1, 288, 128>}]} {
    %c288_i32 = arith.constant 288 : i32
    %0 = arith.muli %arg2, %c288_i32 : i32
    %1 = tpu.assume_multiple %0, 8 : i32
    %c0_i32 = arith.constant 0 : i32
    %2 = arith.cmpi eq, %arg1, %c0_i32 : i32
    %c0_i32_0 = arith.constant 0 : i32
    %3 = arith.cmpi eq, %arg2, %c0_i32_0 : i32
    %4 = arith.andi %2, %3 : i1
    %5 = arith.extui %4 : i1 to i32
    %c0_i32_1 = arith.constant 0 : i32
    %6 = arith.cmpi ne, %5, %c0_i32_1 : i32
    scf.if %6 {
      %c0_93 = arith.constant 0 : index
      %c0_94 = arith.constant 0 : index
      %c0_95 = arith.constant 0 : index
      %117 = vector.load %arg3[%c0_93, %c0_94, %c0_95] : memref<1x342x8xbf16, #tpu.memory_space<vmem>>, vector<1x342x8xbf16>
      %118 = vector.shape_cast %117 : vector<1x342x8xbf16> to vector<342x8xbf16>
      %119 = arith.extf %118 : vector<342x8xbf16> to vector<342x8xf32>
      %c0_96 = arith.constant 0 : index
      %c0_97 = arith.constant 0 : index
      %120 = vector.load %arg8[%c0_96, %c0_97] : memref<342x8xf32, #tpu.memory_space<vmem>>, vector<342x8xf32>
      tpu.vector_store %arg8[%c0_96, %c0_97], %119 {strides = array<i32>} : memref<342x8xf32, #tpu.memory_space<vmem>>, vector<342x8xf32>,
    } else {
    }
    %c0_i32_2 = arith.constant 0 : i32
    %7 = arith.addi %1, %c0_i32_2 : i32
    %c0_i32_3 = arith.constant 0 : i32
    %8 = arith.addi %7, %c0_i32_3 : i32
    %9 = arith.index_cast %8 : i32 to index
    %c0 = arith.constant 0 : index
    %10 = vector.load %arg8[%9, %c0] : memref<342x8xf32, #tpu.memory_space<vmem>>, vector<288x8xf32>
    %11 = arith.truncf %10 : vector<288x8xf32> to vector<288x8xbf16>
    %c0_4 = arith.constant 0 : index
    %c0_5 = arith.constant 0 : index
    %c0_6 = arith.constant 0 : index
    %12 = vector.load %arg4[%c0_4, %c0_5, %c0_6] : memref<9x8x128xbf16, #tpu.memory_space<vmem>>, vector<1x8x128xbf16>
    %13 = vector.shape_cast %12 : vector<1x8x128xbf16> to vector<8x128xbf16>
    %cst = arith.constant dense<0.000000e+00> : vector<288x128xf32>
    %14 = tpu.matmul %11, %13, %cst {dimension_numbers = #tpu.dot_dimension_numbers<[1], [0], [0], [1], [0, 0, 1, 1], [], []>} : vector<288x8xbf16>, vector<8x128xbf16>, vector<288x128xf32> -> vector<288x128xf32>
    %c0_7 = arith.constant 0 : index
    %c0_8 = arith.constant 0 : index
    %15 = vector.load %arg7[%c0_7, %c0_8] : memref<288x128xf32, #tpu.memory_space<vmem>>, vector<288x128xf32>
    tpu.vector_store %arg7[%c0_7, %c0_8], %14 {strides = array<i32>} : memref<288x128xf32, #tpu.memory_space<vmem>>, vector<288x128xf32>,
    %c0_9 = arith.constant 0 : index
    %c0_10 = arith.constant 0 : index
    %16 = vector.load %arg7[%c0_9, %c0_10] : memref<288x128xf32, #tpu.memory_space<vmem>>, vector<288x128xf32>
    %c0_i32_11 = arith.constant 0 : i32
    %17 = arith.addi %1, %c0_i32_11 : i32
    %c1_i32 = arith.constant 1 : i32
    %18 = arith.addi %17, %c1_i32 : i32
    %19 = arith.index_cast %18 : i32 to index
    %c0_12 = arith.constant 0 : index
    %20 = vector.load %arg8[%19, %c0_12] : memref<342x8xf32, #tpu.memory_space<vmem>>, vector<288x8xf32>
    %21 = arith.truncf %20 : vector<288x8xf32> to vector<288x8xbf16>
    %c1 = arith.constant 1 : index
    %c0_13 = arith.constant 0 : index
    %c0_14 = arith.constant 0 : index
    %22 = vector.load %arg4[%c1, %c0_13, %c0_14] : memref<9x8x128xbf16, #tpu.memory_space<vmem>>, vector<1x8x128xbf16>
    %23 = vector.shape_cast %22 : vector<1x8x128xbf16> to vector<8x128xbf16>
    %cst_15 = arith.constant dense<0.000000e+00> : vector<288x128xf32>
    %24 = tpu.matmul %21, %23, %cst_15 {dimension_numbers = #tpu.dot_dimension_numbers<[1], [0], [0], [1], [0, 0, 1, 1], [], []>} : vector<288x8xbf16>, vector<8x128xbf16>, vector<288x128xf32> -> vector<288x128xf32>
    %25 = arith.addf %16, %24 : vector<288x128xf32>
    %c0_16 = arith.constant 0 : index
    %c0_17 = arith.constant 0 : index
    %26 = vector.load %arg7[%c0_16, %c0_17] : memref<288x128xf32, #tpu.memory_space<vmem>>, vector<288x128xf32>
    tpu.vector_store %arg7[%c0_16, %c0_17], %25 {strides = array<i32>} : memref<288x128xf32, #tpu.memory_space<vmem>>, vector<288x128xf32>,
    %c0_18 = arith.constant 0 : index
    %c0_19 = arith.constant 0 : index
    %27 = vector.load %arg7[%c0_18, %c0_19] : memref<288x128xf32, #tpu.memory_space<vmem>>, vector<288x128xf32>
    %c0_i32_20 = arith.constant 0 : i32
    %28 = arith.addi %1, %c0_i32_20 : i32
    %c2_i32 = arith.constant 2 : i32
    %29 = arith.addi %28, %c2_i32 : i32
    %30 = arith.index_cast %29 : i32 to index
    %c0_21 = arith.constant 0 : index
    %31 = vector.load %arg8[%30, %c0_21] : memref<342x8xf32, #tpu.memory_space<vmem>>, vector<288x8xf32>
    %32 = arith.truncf %31 : vector<288x8xf32> to vector<288x8xbf16>
    %c2 = arith.constant 2 : index
    %c0_22 = arith.constant 0 : index
    %c0_23 = arith.constant 0 : index
    %33 = vector.load %arg4[%c2, %c0_22, %c0_23] : memref<9x8x128xbf16, #tpu.memory_space<vmem>>, vector<1x8x128xbf16>
    %34 = vector.shape_cast %33 : vector<1x8x128xbf16> to vector<8x128xbf16>
    %cst_24 = arith.constant dense<0.000000e+00> : vector<288x128xf32>
    %35 = tpu.matmul %32, %34, %cst_24 {dimension_numbers = #tpu.dot_dimension_numbers<[1], [0], [0], [1], [0, 0, 1, 1], [], []>} : vector<288x8xbf16>, vector<8x128xbf16>, vector<288x128xf32> -> vector<288x128xf32>
    %36 = arith.addf %27, %35 : vector<288x128xf32>
    %c0_25 = arith.constant 0 : index
    %c0_26 = arith.constant 0 : index
    %37 = vector.load %arg7[%c0_25, %c0_26] : memref<288x128xf32, #tpu.memory_space<vmem>>, vector<288x128xf32>
    tpu.vector_store %arg7[%c0_25, %c0_26], %36 {strides = array<i32>} : memref<288x128xf32, #tpu.memory_space<vmem>>, vector<288x128xf32>,
    %c0_27 = arith.constant 0 : index
    %c0_28 = arith.constant 0 : index
    %38 = vector.load %arg7[%c0_27, %c0_28] : memref<288x128xf32, #tpu.memory_space<vmem>>, vector<288x128xf32>
    %c18_i32 = arith.constant 18 : i32
    %39 = arith.addi %1, %c18_i32 : i32
    %c0_i32_29 = arith.constant 0 : i32
    %40 = arith.addi %39, %c0_i32_29 : i32
    %41 = arith.index_cast %40 : i32 to index
    %c0_30 = arith.constant 0 : index
    %42 = vector.load %arg8[%41, %c0_30] : memref<342x8xf32, #tpu.memory_space<vmem>>, vector<288x8xf32>
    %43 = arith.truncf %42 : vector<288x8xf32> to vector<288x8xbf16>
    %c3 = arith.constant 3 : index
    %c0_31 = arith.constant 0 : index
    %c0_32 = arith.constant 0 : index
    %44 = vector.load %arg4[%c3, %c0_31, %c0_32] : memref<9x8x128xbf16, #tpu.memory_space<vmem>>, vector<1x8x128xbf16>
    %45 = vector.shape_cast %44 : vector<1x8x128xbf16> to vector<8x128xbf16>
    %cst_33 = arith.constant dense<0.000000e+00> : vector<288x128xf32>
    %46 = tpu.matmul %43, %45, %cst_33 {dimension_numbers = #tpu.dot_dimension_numbers<[1], [0], [0], [1], [0, 0, 1, 1], [], []>} : vector<288x8xbf16>, vector<8x128xbf16>, vector<288x128xf32> -> vector<288x128xf32>
    %47 = arith.addf %38, %46 : vector<288x128xf32>
    %c0_34 = arith.constant 0 : index
    %c0_35 = arith.constant 0 : index
    %48 = vector.load %arg7[%c0_34, %c0_35] : memref<288x128xf32, #tpu.memory_space<vmem>>, vector<288x128xf32>
    tpu.vector_store %arg7[%c0_34, %c0_35], %47 {strides = array<i32>} : memref<288x128xf32, #tpu.memory_space<vmem>>, vector<288x128xf32>,
    %c0_36 = arith.constant 0 : index
    %c0_37 = arith.constant 0 : index
    %49 = vector.load %arg7[%c0_36, %c0_37] : memref<288x128xf32, #tpu.memory_space<vmem>>, vector<288x128xf32>
    %c18_i32_38 = arith.constant 18 : i32
    %50 = arith.addi %1, %c18_i32_38 : i32
    %c1_i32_39 = arith.constant 1 : i32
    %51 = arith.addi %50, %c1_i32_39 : i32
    %52 = arith.index_cast %51 : i32 to index
    %c0_40 = arith.constant 0 : index
    %53 = vector.load %arg8[%52, %c0_40] : memref<342x8xf32, #tpu.memory_space<vmem>>, vector<288x8xf32>
    %54 = arith.truncf %53 : vector<288x8xf32> to vector<288x8xbf16>
    %c4 = arith.constant 4 : index
    %c0_41 = arith.constant 0 : index
    %c0_42 = arith.constant 0 : index
    %55 = vector.load %arg4[%c4, %c0_41, %c0_42] : memref<9x8x128xbf16, #tpu.memory_space<vmem>>, vector<1x8x128xbf16>
    %56 = vector.shape_cast %55 : vector<1x8x128xbf16> to vector<8x128xbf16>
    %cst_43 = arith.constant dense<0.000000e+00> : vector<288x128xf32>
    %57 = tpu.matmul %54, %56, %cst_43 {dimension_numbers = #tpu.dot_dimension_numbers<[1], [0], [0], [1], [0, 0, 1, 1], [], []>} : vector<288x8xbf16>, vector<8x128xbf16>, vector<288x128xf32> -> vector<288x128xf32>
    %58 = arith.addf %49, %57 : vector<288x128xf32>
    %c0_44 = arith.constant 0 : index
    %c0_45 = arith.constant 0 : index
    %59 = vector.load %arg7[%c0_44, %c0_45] : memref<288x128xf32, #tpu.memory_space<vmem>>, vector<288x128xf32>
    tpu.vector_store %arg7[%c0_44, %c0_45], %58 {strides = array<i32>} : memref<288x128xf32, #tpu.memory_space<vmem>>, vector<288x128xf32>,
    %c0_46 = arith.constant 0 : index
    %c0_47 = arith.constant 0 : index
    %60 = vector.load %arg7[%c0_46, %c0_47] : memref<288x128xf32, #tpu.memory_space<vmem>>, vector<288x128xf32>
    %c18_i32_48 = arith.constant 18 : i32
    %61 = arith.addi %1, %c18_i32_48 : i32
    %c2_i32_49 = arith.constant 2 : i32
    %62 = arith.addi %61, %c2_i32_49 : i32
    %63 = arith.index_cast %62 : i32 to index
    %c0_50 = arith.constant 0 : index
    %64 = vector.load %arg8[%63, %c0_50] : memref<342x8xf32, #tpu.memory_space<vmem>>, vector<288x8xf32>
    %65 = arith.truncf %64 : vector<288x8xf32> to vector<288x8xbf16>
    %c5 = arith.constant 5 : index
    %c0_51 = arith.constant 0 : index
    %c0_52 = arith.constant 0 : index
    %66 = vector.load %arg4[%c5, %c0_51, %c0_52] : memref<9x8x128xbf16, #tpu.memory_space<vmem>>, vector<1x8x128xbf16>
    %67 = vector.shape_cast %66 : vector<1x8x128xbf16> to vector<8x128xbf16>
    %cst_53 = arith.constant dense<0.000000e+00> : vector<288x128xf32>
    %68 = tpu.matmul %65, %67, %cst_53 {dimension_numbers = #tpu.dot_dimension_numbers<[1], [0], [0], [1], [0, 0, 1, 1], [], []>} : vector<288x8xbf16>, vector<8x128xbf16>, vector<288x128xf32> -> vector<288x128xf32>
    %69 = arith.addf %60, %68 : vector<288x128xf32>
    %c0_54 = arith.constant 0 : index
    %c0_55 = arith.constant 0 : index
    %70 = vector.load %arg7[%c0_54, %c0_55] : memref<288x128xf32, #tpu.memory_space<vmem>>, vector<288x128xf32>
    tpu.vector_store %arg7[%c0_54, %c0_55], %69 {strides = array<i32>} : memref<288x128xf32, #tpu.memory_space<vmem>>, vector<288x128xf32>,
    %c0_56 = arith.constant 0 : index
    %c0_57 = arith.constant 0 : index
    %71 = vector.load %arg7[%c0_56, %c0_57] : memref<288x128xf32, #tpu.memory_space<vmem>>, vector<288x128xf32>
    %c36_i32 = arith.constant 36 : i32
    %72 = arith.addi %1, %c36_i32 : i32
    %c0_i32_58 = arith.constant 0 : i32
    %73 = arith.addi %72, %c0_i32_58 : i32
    %74 = arith.index_cast %73 : i32 to index
    %c0_59 = arith.constant 0 : index
    %75 = vector.load %arg8[%74, %c0_59] : memref<342x8xf32, #tpu.memory_space<vmem>>, vector<288x8xf32>
    %76 = arith.truncf %75 : vector<288x8xf32> to vector<288x8xbf16>
    %c6 = arith.constant 6 : index
    %c0_60 = arith.constant 0 : index
    %c0_61 = arith.constant 0 : index
    %77 = vector.load %arg4[%c6, %c0_60, %c0_61] : memref<9x8x128xbf16, #tpu.memory_space<vmem>>, vector<1x8x128xbf16>
    %78 = vector.shape_cast %77 : vector<1x8x128xbf16> to vector<8x128xbf16>
    %cst_62 = arith.constant dense<0.000000e+00> : vector<288x128xf32>
    %79 = tpu.matmul %76, %78, %cst_62 {dimension_numbers = #tpu.dot_dimension_numbers<[1], [0], [0], [1], [0, 0, 1, 1], [], []>} : vector<288x8xbf16>, vector<8x128xbf16>, vector<288x128xf32> -> vector<288x128xf32>
    %80 = arith.addf %71, %79 : vector<288x128xf32>
    %c0_63 = arith.constant 0 : index
    %c0_64 = arith.constant 0 : index
    %81 = vector.load %arg7[%c0_63, %c0_64] : memref<288x128xf32, #tpu.memory_space<vmem>>, vector<288x128xf32>
    tpu.vector_store %arg7[%c0_63, %c0_64], %80 {strides = array<i32>} : memref<288x128xf32, #tpu.memory_space<vmem>>, vector<288x128xf32>,
    %c0_65 = arith.constant 0 : index
    %c0_66 = arith.constant 0 : index
    %82 = vector.load %arg7[%c0_65, %c0_66] : memref<288x128xf32, #tpu.memory_space<vmem>>, vector<288x128xf32>
    %c36_i32_67 = arith.constant 36 : i32
    %83 = arith.addi %1, %c36_i32_67 : i32
    %c1_i32_68 = arith.constant 1 : i32
    %84 = arith.addi %83, %c1_i32_68 : i32
    %85 = arith.index_cast %84 : i32 to index
    %c0_69 = arith.constant 0 : index
    %86 = vector.load %arg8[%85, %c0_69] : memref<342x8xf32, #tpu.memory_space<vmem>>, vector<288x8xf32>
    %87 = arith.truncf %86 : vector<288x8xf32> to vector<288x8xbf16>
    %c7 = arith.constant 7 : index
    %c0_70 = arith.constant 0 : index
    %c0_71 = arith.constant 0 : index
    %88 = vector.load %arg4[%c7, %c0_70, %c0_71] : memref<9x8x128xbf16, #tpu.memory_space<vmem>>, vector<1x8x128xbf16>
    %89 = vector.shape_cast %88 : vector<1x8x128xbf16> to vector<8x128xbf16>
    %cst_72 = arith.constant dense<0.000000e+00> : vector<288x128xf32>
    %90 = tpu.matmul %87, %89, %cst_72 {dimension_numbers = #tpu.dot_dimension_numbers<[1], [0], [0], [1], [0, 0, 1, 1], [], []>} : vector<288x8xbf16>, vector<8x128xbf16>, vector<288x128xf32> -> vector<288x128xf32>
    %91 = arith.addf %82, %90 : vector<288x128xf32>
    %c0_73 = arith.constant 0 : index
    %c0_74 = arith.constant 0 : index
    %92 = vector.load %arg7[%c0_73, %c0_74] : memref<288x128xf32, #tpu.memory_space<vmem>>, vector<288x128xf32>
    tpu.vector_store %arg7[%c0_73, %c0_74], %91 {strides = array<i32>} : memref<288x128xf32, #tpu.memory_space<vmem>>, vector<288x128xf32>,
    %c0_75 = arith.constant 0 : index
    %c0_76 = arith.constant 0 : index
    %93 = vector.load %arg7[%c0_75, %c0_76] : memref<288x128xf32, #tpu.memory_space<vmem>>, vector<288x128xf32>
    %c36_i32_77 = arith.constant 36 : i32
    %94 = arith.addi %1, %c36_i32_77 : i32
    %c2_i32_78 = arith.constant 2 : i32
    %95 = arith.addi %94, %c2_i32_78 : i32
    %96 = arith.index_cast %95 : i32 to index
    %c0_79 = arith.constant 0 : index
    %97 = vector.load %arg8[%96, %c0_79] : memref<342x8xf32, #tpu.memory_space<vmem>>, vector<288x8xf32>
    %98 = arith.truncf %97 : vector<288x8xf32> to vector<288x8xbf16>
    %c8 = arith.constant 8 : index
    %c0_80 = arith.constant 0 : index
    %c0_81 = arith.constant 0 : index
    %99 = vector.load %arg4[%c8, %c0_80, %c0_81] : memref<9x8x128xbf16, #tpu.memory_space<vmem>>, vector<1x8x128xbf16>
    %100 = vector.shape_cast %99 : vector<1x8x128xbf16> to vector<8x128xbf16>
    %cst_82 = arith.constant dense<0.000000e+00> : vector<288x128xf32>
    %101 = tpu.matmul %98, %100, %cst_82 {dimension_numbers = #tpu.dot_dimension_numbers<[1], [0], [0], [1], [0, 0, 1, 1], [], []>} : vector<288x8xbf16>, vector<8x128xbf16>, vector<288x128xf32> -> vector<288x128xf32>
    %102 = arith.addf %93, %101 : vector<288x128xf32>
    %c0_83 = arith.constant 0 : index
    %c0_84 = arith.constant 0 : index
    %103 = vector.load %arg7[%c0_83, %c0_84] : memref<288x128xf32, #tpu.memory_space<vmem>>, vector<288x128xf32>
    tpu.vector_store %arg7[%c0_83, %c0_84], %102 {strides = array<i32>} : memref<288x128xf32, #tpu.memory_space<vmem>>, vector<288x128xf32>,
    %c0_85 = arith.constant 0 : index
    %c0_86 = arith.constant 0 : index
    %104 = vector.load %arg5[%c0_85, %c0_86] : memref<2x128xf32, #tpu.memory_space<vmem>>, vector<2x128xf32>
    %c0_87 = arith.constant 0 : index
    %c0_88 = arith.constant 0 : index
    %105 = vector.load %arg7[%c0_87, %c0_88] : memref<288x128xf32, #tpu.memory_space<vmem>>, vector<288x128xf32>
    %106 = vector.extract_strided_slice %104 {offsets = [0, 0], sizes = [1, 128], strides = [1, 1]} : vector<2x128xf32> to vector<1x128xf32>
    %107 = vector.broadcast %106 : vector<1x128xf32> to vector<288x128xf32>
    %108 = arith.mulf %105, %107 : vector<288x128xf32>
    %109 = vector.extract_strided_slice %104 {offsets = [1, 0], sizes = [1, 128], strides = [1, 1]} : vector<2x128xf32> to vector<1x128xf32>
    %110 = vector.broadcast %109 : vector<1x128xf32> to vector<288x128xf32>
    %111 = arith.addf %108, %110 : vector<288x128xf32>
    %cst_89 = arith.constant 0.000000e+00 : f32
    %112 = vector.broadcast %cst_89 : f32 to vector<288x128xf32>
    %113 = arith.maximumf %111, %112 : vector<288x128xf32>
    %c0_90 = arith.constant 0 : index
    %c0_91 = arith.constant 0 : index
    %c0_92 = arith.constant 0 : index
    %114 = vector.load %arg6[%c0_90, %c0_91, %c0_92] : memref<1x288x128xf32, #tpu.memory_space<vmem>>, vector<1x288x128xf32>
    %115 = vector.shape_cast %114 : vector<1x288x128xf32> to vector<288x128xf32>
    %116 = vector.shape_cast %113 : vector<288x128xf32> to vector<1x288x128xf32>
    tpu.vector_store %arg6[%c0_90, %c0_91, %c0_92], %116 {strides = array<i32>} : memref<1x288x128xf32, #tpu.memory_space<vmem>>, vector<1x288x128xf32>,
    return
  }
  func.func @transform_0(%arg0: i32, %arg1: i32, %arg2: i32) -> (i32, i32, i32) {
    %c0_i32 = arith.constant 0 : i32
    %c0_i32_0 = arith.constant 0 : i32
    %c0_i32_1 = arith.constant 0 : i32
    return %arg0, %c0_i32, %c0_i32_0 : i32, i32, i32
  }
  func.func @transform_1(%arg0: i32, %arg1: i32, %arg2: i32) -> (i32, i32, i32) {
    %c0_i32 = arith.constant 0 : i32
    %c0_i32_0 = arith.constant 0 : i32
    %c0_i32_1 = arith.constant 0 : i32
    return %c0_i32, %c0_i32_0, %arg1 : i32, i32, i32
  }
  func.func @transform_2(%arg0: i32, %arg1: i32, %arg2: i32) -> (i32, i32) {
    %c0_i32 = arith.constant 0 : i32
    %c0_i32_0 = arith.constant 0 : i32
    return %c0_i32, %arg1 : i32, i32
  }
  func.func @transform_3(%arg0: i32, %arg1: i32, %arg2: i32) -> (i32, i32, i32) {
    %c0_i32 = arith.constant 0 : i32
    return %arg0, %arg2, %arg1 : i32, i32, i32
  }
}

</mosaic_0001>

<llo_original>
// kernel: conv_block_forward.1
$region0: #{conv_block_forward.1}
  #allocation0 [shape = 'u32[]', space=smem, size = 0x4, offset = 0x4, fixed_abs, tag = 'smem constant byte address 0x4 - core index']
  #allocation1 [shape = 'u32[144,128]{1,0:T(1,128)}', space=vmem, size = 0x12000, scoped, tag = 'internal scratch']
  #allocation2 [shape = 'f32[288,128]{1,0:T(8,128)}', space=vmem, size = 0x24000, scoped, tag = 'scratch operand']
  #allocation3 [shape = 'f32[342,8]{1,0:T(8,128)}', space=vmem, size = 0x2b000, scoped, tag = 'scratch operand']
  %s0 = inlined_call_operand.vmem [shape: bf16[2,342,8], index: 0, kind: input, shape index: {}]
  %s1 = inlined_call_operand.vmem [shape: bf16[9,8,128], index: 1, kind: input, shape index: {}]
  %s2 = inlined_call_operand.vmem [shape: f32[2,128], index: 2, kind: input, shape index: {}]
  %s3 = inlined_call_operand.vmem [shape: f32[2,288,128], index: 3, kind: output, shape index: {}]
  %s4 = sld [smem:[#allocation0]]
  $region49: #{conv_block_forward.1} parent=0
    _
  %s6 = ssub.s32 1, %s4
  %s7 = scalar_select 0, %s6, %s4
  loop: start=0, step=1, limit=4
  $region2: #{conv_block_forward.1} parent=0 // loop_pre_header
    _
  $region3: #{conv_block_forward.1} parent=0 // loop_header
    %s9 = sphi 0, %s13
    %p10 = scmp.ge.s32.totalorder %s9, 4
    %s16 = sphi 0, %s35
    %s17 = sphi 0, %s31
    %s18 = sphi 0, %s27
    %s19 = sphi 0, %s16
    %s20 = sphi 0, %s17
    %s21 = sphi 0, %s18
    %s22 = sphi 0, %s19
    %s23 = sphi 0, %s20
    %s24 = sphi 0, %s21
    %s38 = sphi 0, %s40
    %s41 = sphi 0, %s38
    %s42 = sphi 0, %s41
    %s58 = sphi 0, %s42
    %s64 = sphi 0, %s66
    %s67 = sphi 0, %s64
    %s68 = sphi 0, %s67
    %s84 = sphi 0, %s68
    %s90 = sphi 0, %s92
    %s93 = sphi 0, %s90
    %s94 = sphi 0, %s93
    %s110 = sphi 0, %s94
    %s120 = sphi 0, %s122
    %s123 = sphi 0, %s120
    %s124 = sphi 0, %s123
    %s140 = sphi 0, %s124
  $region4: #{conv_block_forward.1} parent=0 // loop_header_branch
    %12 = sbr.rel (%p10) target = $region8
  $region5: #{conv_block_forward.1} parent=0 // loop_body
    %s14 = ssub.s32 %s9, 1
    %s15 = ssub.s32 %s9, 2
    %s25 = sadd.s32 1, %s18
    %p26 = scmp.ge.s32.totalorder %s25, 1
    %s27 = scalar_select %p26, 0, %s25
    %s28 = sadd.s32 1, %s17
    %s29 = scalar_select %p26, %s28, %s17
    %p30 = scmp.ge.s32.totalorder %s29, 1
    %s31 = scalar_select %p30, 0, %s29
    %s32 = sadd.s32 1, %s16
    %s33 = scalar_select %p30, %s32, %s16
    %p34 = scmp.ge.s32.totalorder %s33, 2
    %s35 = scalar_select %p34, 0, %s33
    %s36 = ssub.s32 %s16, %s35
    %p37 = scmp.eq.s32.totalorder %s36, 0
    %s39 = sadd.s32 %s38, 1
    %s40 = scalar_select %p37, %s38, %s39
    %p43 = pneg %p37
    %p44 = scmp.eq.s32.totalorder %s9, 1
    %p45 = por %p43, %p44
    %p46 = scmp.ne.s32.totalorder %s38, %s41
    %p47 = scmp.eq.s32.totalorder %s9, 0
    %p48 = por %p46, %p47
    %p49 = scmp.ne.s32.totalorder %s38, %s41
    %p50 = scmp.eq.s32.totalorder %s14, 1
    %p51 = por %p49, %p50
    %p52 = scmp.ne.s32.totalorder %s41, %s42
    %p53 = scmp.eq.s32.totalorder %s14, 0
    %p54 = por %p52, %p53
    %p55 = scmp.ne.s32.totalorder %s41, %s42
    %p56 = scmp.eq.s32.totalorder %s15, 1
    %p57 = por %p55, %p56
    %p59 = scmp.ne.s32.totalorder %s42, %s58
    %p60 = scmp.eq.s32.totalorder %s15, 0
    %p61 = por %p59, %p60
    %s62 = ssub.s32 %s17, %s31
    %p63 = scmp.eq.s32.totalorder %s62, 0
    %s65 = sadd.s32 %s64, 1
    %s66 = scalar_select %p63, %s64, %s65
    %p69 = pneg %p63
    %p70 = scmp.eq.s32.totalorder %s9, 1
    %p71 = por %p69, %p70
    %p72 = scmp.ne.s32.totalorder %s64, %s67
    %p73 = scmp.eq.s32.totalorder %s9, 0
    %p74 = por %p72, %p73
    %p75 = scmp.ne.s32.totalorder %s64, %s67
    %p76 = scmp.eq.s32.totalorder %s14, 1
    %p77 = por %p75, %p76
    %p78 = scmp.ne.s32.totalorder %s67, %s68
    %p79 = scmp.eq.s32.totalorder %s14, 0
    %p80 = por %p78, %p79
    %p81 = scmp.ne.s32.totalorder %s67, %s68
    %p82 = scmp.eq.s32.totalorder %s15, 1
    %p83 = por %p81, %p82
    %p85 = scmp.ne.s32.totalorder %s68, %s84
    %p86 = scmp.eq.s32.totalorder %s15, 0
    %p87 = por %p85, %p86
    %s88 = ssub.s32 %s17, %s31
    %p89 = scmp.eq.s32.totalorder %s88, 0
    %s91 = sadd.s32 %s90, 1
    %s92 = scalar_select %p89, %s90, %s91
    %p95 = pneg %p89
    %p96 = scmp.eq.s32.totalorder %s9, 1
    %p97 = por %p95, %p96
    %p98 = scmp.ne.s32.totalorder %s90, %s93
    %p99 = scmp.eq.s32.totalorder %s9, 0
    %p100 = por %p98, %p99
    %p101 = scmp.ne.s32.totalorder %s90, %s93
    %p102 = scmp.eq.s32.totalorder %s14, 1
    %p103 = por %p101, %p102
    %p104 = scmp.ne.s32.totalorder %s93, %s94
    %p105 = scmp.eq.s32.totalorder %s14, 0
    %p106 = por %p104, %p105
    %p107 = scmp.ne.s32.totalorder %s93, %s94
    %p108 = scmp.eq.s32.totalorder %s15, 1
    %p109 = por %p107, %p108
    %p111 = scmp.ne.s32.totalorder %s94, %s110
    %p112 = scmp.eq.s32.totalorder %s15, 0
    %p113 = por %p111, %p112
    %s114 = ssub.s32 %s16, %s35
    %s115 = ssub.s32 %s18, %s27
    %s116 = sor.u32 %s114, %s115
    %s117 = ssub.s32 %s17, %s31
    %s118 = sor.u32 %s116, %s117
    %p119 = scmp.eq.s32.totalorder %s118, 0
    %s121 = sadd.s32 %s120, 1
    %s122 = scalar_select %p119, %s120, %s121
    %p125 = pneg %p119
    %p126 = scmp.eq.s32.totalorder %s9, 1
    %p127 = por %p125, %p126
    %p128 = scmp.ne.s32.totalorder %s120, %s123
    %p129 = scmp.eq.s32.totalorder %s9, 0
    %p130 = por %p128, %p129
    %p131 = scmp.ne.s32.totalorder %s120, %s123
    %p132 = scmp.eq.s32.totalorder %s14, 1
    %p133 = por %p131, %p132
    %p134 = scmp.ne.s32.totalorder %s123, %s124
    %p135 = scmp.eq.s32.totalorder %s14, 0
    %p136 = por %p134, %p135
    %p137 = scmp.ne.s32.totalorder %s123, %s124
    %p138 = scmp.eq.s32.totalorder %s15, 1
    %p139 = por %p137, %p138
    %p141 = scmp.ne.s32.totalorder %s124, %s140
    %p142 = scmp.eq.s32.totalorder %s15, 0
    %p143 = por %p141, %p142
    %p144 = scmp.le.s32.totalorder 1, %s9
    %p145 = scmp.lt.s32.totalorder %s9, 3
    %p146 = pnand %p144, %p145
    %p147 = pneg %p146
    // Predicated region
    $region9: #{conv_block_forward.1} parent=5 // pred_check
      _
    $region10: #{conv_block_forward.1} parent=5 // pred_check_branch
      %149 = sbr.rel (%p146) target = $region12
    $region11: #{conv_block_forward.1} parent=5 // pred_region
      %s150 = ssub.s32 %s9, 1
      // Predicated region
      $region13: #{conv_block_forward.1} parent=11 // pred_check
        %p151 = pneg %p80
      $region14: #{conv_block_forward.1} parent=11 // pred_check_branch
        %153 = sbr.rel (%p151) target = $region16
      $region15: #{conv_block_forward.1} parent=11 // pred_region
        %p154 = scmp.lt.s32.totalorder %s20, 0
        %s155 = scalar_select %p154, %s20, 0
        %s156 = smul.addr %s155, 4
        %s157 = scalar_lea.vmem %s1, %s156
      $region16: #{conv_block_forward.1} parent=11 // pred_fallthru
        _
      // Predicated region
      $region17: #{conv_block_forward.1} parent=11 // pred_check
        %p158 = pneg %p106
      $region18: #{conv_block_forward.1} parent=11 // pred_check_branch
        %160 = sbr.rel (%p158) target = $region20
      $region19: #{conv_block_forward.1} parent=11 // pred_region
        %p161 = scmp.lt.s32.totalorder %s20, 0
        %s162 = scalar_select %p161, %s20, 0
        %s163 = smul.addr %s162, 2
        %s164 = scalar_lea.vmem %s2, %s163
      $region20: #{conv_block_forward.1} parent=11 // pred_fallthru
        _
    $region12: #{conv_block_forward.1} parent=5 // pred_fallthru
      _
    %p165 = scmp.lt.s32.totalorder %s9, 2
    // Predicated region
    $region21: #{conv_block_forward.1} parent=5 // pred_check
      %p166 = pneg %p165
    $region22: #{conv_block_forward.1} parent=5 // pred_check_branch
      %168 = sbr.rel (%p166) target = $region24
    $region23: #{conv_block_forward.1} parent=5 // pred_region
      // Predicated region
      $region25: #{conv_block_forward.1} parent=23 // pred_check
        %p169 = pneg %p48
      $region26: #{conv_block_forward.1} parent=23 // pred_check_branch
        %171 = sbr.rel (%p169) target = $region28
      $region27: #{conv_block_forward.1} parent=23 // pred_region
        %p172 = scmp.lt.s32.totalorder %s16, 1
        %s173 = scalar_select %p172, %s16, 1
        %s174 = smul.addr %s173, 43
        %s175 = smul.addr %s174, 4
        %s176 = scalar_lea.vmem %s0, %s175
      $region28: #{conv_block_forward.1} parent=23 // pred_fallthru
        _
    $region24: #{conv_block_forward.1} parent=5 // pred_fallthru
      _
    %p177 = scmp.le.s32.totalorder 1, %s9
    %p178 = scmp.lt.s32.totalorder %s9, 3
    %p179 = pnand %p177, %p178
    %p180 = pneg %p179
    // Predicated region
    $region29: #{conv_block_forward.1} parent=5 // pred_check
      _
    $region30: #{conv_block_forward.1} parent=5 // pred_check_branch
      %182 = sbr.rel (%p179) target = $region32
    $region31: #{conv_block_forward.1} parent=5 // pred_region
      %s183 = ssub.s32 %s9, 1
      %p184 = scmp.lt.s32.totalorder %s19, 1
      %s185 = scalar_select %p184, %s19, 1
      %s186 = smul.addr %s185, 43
      %s187 = smul.addr %s186, 4
      %s188 = scalar_lea.vmem %s0, %s187
      %p189 = pneg %p54
      %p190 = pneg %p51
      %p191 = scmp.lt.s32.totalorder %s20, 0
      %s192 = scalar_select %p191, %s20, 0
      %s193 = smul.addr %s192, 4
      %s194 = scalar_lea.vmem %s1, %s193
      %p195 = pneg %p80
      %p196 = pneg %p77
      %p197 = scmp.lt.s32.totalorder %s20, 0
      %s198 = scalar_select %p197, %s20, 0
      %s199 = smul.addr %s198, 2
      %s200 = scalar_lea.vmem %s2, %s199
      %p201 = pneg %p106
      %p202 = pneg %p103
      %p203 = pneg %p136
      %p204 = pneg %p133
      %s205 = smul.u32 36, %s21
      %p206 = scmp.lt.s32.totalorder %s19, 1
      %s207 = scalar_select %p206, %s19, 1
      %p208 = scmp.lt.s32.totalorder %s205, 35
      %s209 = scalar_select %p208, %s205, 35
      %p210 = scmp.lt.s32.totalorder %s20, 0
      %s211 = scalar_select %p210, %s20, 0
      %s212 = sadd.s32 %s211, %s209
      %s213 = smul.addr %s207, 36
      %s214 = sadd.s32 %s212, %s213
      %s215 = smul.addr %s214, 8
      %s216 = scalar_lea.vmem %s3, %s215
      %p217 = scmp.lt.s32.totalorder %s19, 1
      %s218 = scalar_select %p217, %s19, 1
      %s219 = smul.addr %s218, 43
      %s220 = smul.addr %s219, 4
      %s221 = scalar_lea.vmem %s0, %s220
      %p222 = scmp.lt.s32.totalorder %s20, 0
      %s223 = scalar_select %p222, %s20, 0
      %s224 = smul.addr %s223, 4
      %s225 = scalar_lea.vmem %s1, %s224
      %p226 = scmp.lt.s32.totalorder %s20, 0
      %s227 = scalar_select %p226, %s20, 0
      %s228 = smul.addr %s227, 2
      %s229 = scalar_lea.vmem %s2, %s228
      %s230 = smul.u32 36, %s21
      %p231 = scmp.lt.s32.totalorder %s19, 1
      %s232 = scalar_select %p231, %s19, 1
      %p233 = scmp.lt.s32.totalorder %s230, 35
      %s234 = scalar_select %p233, %s230, 35
      %p235 = scmp.lt.s32.totalorder %s20, 0
      %s236 = scalar_select %p235, %s20, 0
      %s237 = sadd.s32 %s236, %s234
      %s238 = smul.addr %s232, 36
      %s239 = sadd.s32 %s237, %s238
      %s240 = smul.addr %s239, 8
      %s241 = scalar_lea.vmem %s3, %s240
      %s242 = smul.u32 36, %s21
      %s244 = smul.u32 %s21, 288
      %p245 = scmp.eq.s32.totalorder %s20, 0
      %p246 = scmp.eq.s32.totalorder %s21, 0
      %p247 = pnand %p245, %p246
      %p248 = pneg %p247
      // Predicated region
      $region33: #{conv_block_forward.1} parent=31 // pred_check
        _
      $region34: #{conv_block_forward.1} parent=31 // pred_check_branch
        %250 = sbr.rel (%p247) target = $region36
      $region35: #{conv_block_forward.1} parent=31 // pred_region
        %v251 = vld [vmem:[%s221] sm:$0xf]
        %v252 = vld [vmem:[%s221 + $0x4] sm:$0xf]
        %v253 = vld [vmem:[%s221 + $0x8] sm:$0xf]
        %v254 = vld [vmem:[%s221 + $0xc] sm:$0xf]
        %v255 = vld [vmem:[%s221 + $0x10] sm:$0xf]
        %v256 = vld [vmem:[%s221 + $0x14] sm:$0xf]
        %v257 = vld [vmem:[%s221 + $0x18] sm:$0xf]
        %v258 = vld [vmem:[%s221 + $0x1c] sm:$0xf]
        %v259 = vld [vmem:[%s221 + $0x20] sm:$0xf]
        %v260 = vld [vmem:[%s221 + $0x24] sm:$0xf]
        %v261 = vld [vmem:[%s221 + $0x28] sm:$0xf]
        %v262 = vld [vmem:[%s221 + $0x2c] sm:$0xf]
        %v263 = vld [vmem:[%s221 + $0x30] sm:$0xf]
        %v264 = vld [vmem:[%s221 + $0x34] sm:$0xf]
        %v265 = vld [vmem:[%s221 + $0x38] sm:$0xf]
        %v266 = vld [vmem:[%s221 + $0x3c] sm:$0xf]
        %v267 = vld [vmem:[%s221 + $0x40] sm:$0xf]
        %v268 = vld [vmem:[%s221 + $0x44] sm:$0xf]
        %v269 = vld [vmem:[%s221 + $0x48] sm:$0xf]
        %v270 = vld [vmem:[%s221 + $0x4c] sm:$0xf]
        %v271 = vld [vmem:[%s221 + $0x50] sm:$0xf]
        %v272 = vld [vmem:[%s221 + $0x54] sm:$0xf]
        %v273 = vld [vmem:[%s221 + $0x58] sm:$0xf]
        %v274 = vld [vmem:[%s221 + $0x5c] sm:$0xf]
        %v275 = vld [vmem:[%s221 + $0x60] sm:$0xf]
        %v276 = vld [vmem:[%s221 + $0x64] sm:$0xf]
        %v277 = vld [vmem:[%s221 + $0x68] sm:$0xf]
        %v278 = vld [vmem:[%s221 + $0x6c] sm:$0xf]
        %v279 = vld [vmem:[%s221 + $0x70] sm:$0xf]
        %v280 = vld [vmem:[%s221 + $0x74] sm:$0xf]
        %v281 = vld [vmem:[%s221 + $0x78] sm:$0xf]
        %v282 = vld [vmem:[%s221 + $0x7c] sm:$0xf]
        %v283 = vld [vmem:[%s221 + $0x80] sm:$0xf]
        %v284 = vld [vmem:[%s221 + $0x84] sm:$0xf]
        %v285 = vld [vmem:[%s221 + $0x88] sm:$0xf]
        %v286 = vld [vmem:[%s221 + $0x8c] sm:$0xf]
        %v287 = vld [vmem:[%s221 + $0x90] sm:$0xf]
        %v288 = vld [vmem:[%s221 + $0x94] sm:$0xf]
        %v289 = vld [vmem:[%s221 + $0x98] sm:$0xf]
        %v290 = vld [vmem:[%s221 + $0x9c] sm:$0xf]
        %v291 = vld [vmem:[%s221 + $0xa0] sm:$0xf]
        %v292 = vld [vmem:[%s221 + $0xa4] sm:$0xf]
        %v293 = vld [vmem:[%s221 + $0xa8] sm:$0x7]
        %v294 = vunpack.c.l.bf16 %v251
        %v295 = vunpack.c.l.bf16 %v252
        %v296 = vunpack.c.l.bf16 %v253
        %v297 = vunpack.c.l.bf16 %v254
        %v298 = vunpack.c.l.bf16 %v255
        %v299 = vunpack.c.l.bf16 %v256
        %v300 = vunpack.c.l.bf16 %v257
        %v301 = vunpack.c.l.bf16 %v258
        %v302 = vunpack.c.l.bf16 %v259
        %v303 = vunpack.c.l.bf16 %v260
        %v304 = vunpack.c.l.bf16 %v261
        %v305 = vunpack.c.l.bf16 %v262
        %v306 = vunpack.c.l.bf16 %v263
        %v307 = vunpack.c.l.bf16 %v264
        %v308 = vunpack.c.l.bf16 %v265
        %v309 = vunpack.c.l.bf16 %v266
        %v310 = vunpack.c.l.bf16 %v267
        %v311 = vunpack.c.l.bf16 %v268
        %v312 = vunpack.c.l.bf16 %v269
        %v313 = vunpack.c.l.bf16 %v270
        %v314 = vunpack.c.l.bf16 %v271
        %v315 = vunpack.c.l.bf16 %v272
        %v316 = vunpack.c.l.bf16 %v273
        %v317 = vunpack.c.l.bf16 %v274
        %v318 = vunpack.c.l.bf16 %v275
        %v319 = vunpack.c.l.bf16 %v276
        %v320 = vunpack.c.l.bf16 %v277
        %v321 = vunpack.c.l.bf16 %v278
        %v322 = vunpack.c.l.bf16 %v279
        %v323 = vunpack.c.l.bf16 %v280
        %v324 = vunpack.c.l.bf16 %v281
        %v325 = vunpack.c.l.bf16 %v282
        %v326 = vunpack.c.l.bf16 %v283
        %v327 = vunpack.c.l.bf16 %v284
        %v328 = vunpack.c.l.bf16 %v285
        %v329 = vunpack.c.l.bf16 %v286
        %v330 = vunpack.c.l.bf16 %v287
        %v331 = vunpack.c.l.bf16 %v288
        %v332 = vunpack.c.l.bf16 %v289
        %v333 = vunpack.c.l.bf16 %v290
        %v334 = vunpack.c.l.bf16 %v291
        %v335 = vunpack.c.l.bf16 %v292
        %v336 = vunpack.c.l.bf16 %v293
        %vm337 = vcmask 64512
        %338 = vst.msk [vmem:[#allocation3] sm:$0xff] %vm337, %v294
        %339 = vst.msk [vmem:[#allocation3 + $0x8] sm:$0xff] %vm337, %v295
        %340 = vst.msk [vmem:[#allocation3 + $0x10] sm:$0xff] %vm337, %v296
        %341 = vst.msk [vmem:[#allocation3 + $0x18] sm:$0xff] %vm337, %v297
        %342 = vst.msk [vmem:[#allocation3 + $0x20] sm:$0xff] %vm337, %v298
        %343 = vst.msk [vmem:[#allocation3 + $0x28] sm:$0xff] %vm337, %v299
        %344 = vst.msk [vmem:[#allocation3 + $0x30] sm:$0xff] %vm337, %v300
        %345 = vst.msk [vmem:[#allocation3 + $0x38] sm:$0xff] %vm337, %v301
        %346 = vst.msk [vmem:[#allocation3 + $0x40] sm:$0xff] %vm337, %v302
        %347 = vst.msk [vmem:[#allocation3 + $0x48] sm:$0xff] %vm337, %v303
        %348 = vst.msk [vmem:[#allocation3 + $0x50] sm:$0xff] %vm337, %v304
        %349 = vst.msk [vmem:[#allocation3 + $0x58] sm:$0xff] %vm337, %v305
        %350 = vst.msk [vmem:[#allocation3 + $0x60] sm:$0xff] %vm337, %v306
        %351 = vst.msk [vmem:[#allocation3 + $0x68] sm:$0xff] %vm337, %v307
        %352 = vst.msk [vmem:[#allocation3 + $0x70] sm:$0xff] %vm337, %v308
        %353 = vst.msk [vmem:[#allocation3 + $0x78] sm:$0xff] %vm337, %v309
        %354 = vst.msk [vmem:[#allocation3 + $0x80] sm:$0xff] %vm337, %v310
        %355 = vst.msk [vmem:[#allocation3 + $0x88] sm:$0xff] %vm337, %v311
        %356 = vst.msk [vmem:[#allocation3 + $0x90] sm:$0xff] %vm337, %v312
        %357 = vst.msk [vmem:[#allocation3 + $0x98] sm:$0xff] %vm337, %v313
        %358 = vst.msk [vmem:[#allocation3 + $0xa0] sm:$0xff] %vm337, %v314
        %359 = vst.msk [vmem:[#allocation3 + $0xa8] sm:$0xff] %vm337, %v315
        %360 = vst.msk [vmem:[#allocation3 + $0xb0] sm:$0xff] %vm337, %v316
        %361 = vst.msk [vmem:[#allocation3 + $0xb8] sm:$0xff] %vm337, %v317
        %362 = vst.msk [vmem:[#allocation3 + $0xc0] sm:$0xff] %vm337, %v318
        %363 = vst.msk [vmem:[#allocation3 + $0xc8] sm:$0xff] %vm337, %v319
        %364 = vst.msk [vmem:[#allocation3 + $0xd0] sm:$0xff] %vm337, %v320
        %365 = vst.msk [vmem:[#allocation3 + $0xd8] sm:$0xff] %vm337, %v321
        %366 = vst.msk [vmem:[#allocation3 + $0xe0] sm:$0xff] %vm337, %v322
        %367 = vst.msk [vmem:[#allocation3 + $0xe8] sm:$0xff] %vm337, %v323
        %368 = vst.msk [vmem:[#allocation3 + $0xf0] sm:$0xff] %vm337, %v324
        %369 = vst.msk [vmem:[#allocation3 + $0xf8] sm:$0xff] %vm337, %v325
        %370 = vst.msk [vmem:[#allocation3 + $0x100] sm:$0xff] %vm337, %v326
        %371 = vst.msk [vmem:[#allocation3 + $0x108] sm:$0xff] %vm337, %v327
        %372 = vst.msk [vmem:[#allocation3 + $0x110] sm:$0xff] %vm337, %v328
        %373 = vst.msk [vmem:[#allocation3 + $0x118] sm:$0xff] %vm337, %v329
        %374 = vst.msk [vmem:[#allocation3 + $0x120] sm:$0xff] %vm337, %v330
        %375 = vst.msk [vmem:[#allocation3 + $0x128] sm:$0xff] %vm337, %v331
        %376 = vst.msk [vmem:[#allocation3 + $0x130] sm:$0xff] %vm337, %v332
        %377 = vst.msk [vmem:[#allocation3 + $0x138] sm:$0xff] %vm337, %v333
        %378 = vst.msk [vmem:[#allocation3 + $0x140] sm:$0xff] %vm337, %v334
        %379 = vst.msk [vmem:[#allocation3 + $0x148] sm:$0xff] %vm337, %v335
        %vm380 = vcmask 62464
        %381 = vst.msk [vmem:[#allocation3 + $0x150] sm:$0x3f] %vm380, %v336
      $region36: #{conv_block_forward.1} parent=31 // pred_fallthru
        _
      %s382 = scalar_lea.vmem [#allocation3], %s244
      %v383 = vld [vmem:[%s382] sm:$0xff]
      %v384 = vld [vmem:[%s382 + $0x8] sm:$0xff]
      %v385 = vld [vmem:[%s382 + $0x10] sm:$0xff]
      %v386 = vld [vmem:[%s382 + $0x18] sm:$0xff]
      %v387 = vld [vmem:[%s382 + $0x20] sm:$0xff]
      %v388 = vld [vmem:[%s382 + $0x28] sm:$0xff]
      %v389 = vld [vmem:[%s382 + $0x30] sm:$0xff]
      %v390 = vld [vmem:[%s382 + $0x38] sm:$0xff]
      %v391 = vld [vmem:[%s382 + $0x40] sm:$0xff]
      %v392 = vld [vmem:[%s382 + $0x48] sm:$0xff]
      %v393 = vld [vmem:[%s382 + $0x50] sm:$0xff]
      %v394 = vld [vmem:[%s382 + $0x58] sm:$0xff]
      %v395 = vld [vmem:[%s382 + $0x60] sm:$0xff]
      %v396 = vld [vmem:[%s382 + $0x68] sm:$0xff]
      %v397 = vld [vmem:[%s382 + $0x70] sm:$0xff]
      %v398 = vld [vmem:[%s382 + $0x78] sm:$0xff]
      %v399 = vld [vmem:[%s382 + $0x80] sm:$0xff]
      %v400 = vld [vmem:[%s382 + $0x88] sm:$0xff]
      %v401 = vld [vmem:[%s382 + $0x90] sm:$0xff]
      %v402 = vld [vmem:[%s382 + $0x98] sm:$0xff]
      %v403 = vld [vmem:[%s382 + $0xa0] sm:$0xff]
      %v404 = vld [vmem:[%s382 + $0xa8] sm:$0xff]
      %v405 = vld [vmem:[%s382 + $0xb0] sm:$0xff]
      %v406 = vld [vmem:[%s382 + $0xb8] sm:$0xff]
      %v407 = vld [vmem:[%s382 + $0xc0] sm:$0xff]
      %v408 = vld [vmem:[%s382 + $0xc8] sm:$0xff]
      %v409 = vld [vmem:[%s382 + $0xd0] sm:$0xff]
      %v410 = vld [vmem:[%s382 + $0xd8] sm:$0xff]
      %v411 = vld [vmem:[%s382 + $0xe0] sm:$0xff]
      %v412 = vld [vmem:[%s382 + $0xe8] sm:$0xff]
      %v413 = vld [vmem:[%s382 + $0xf0] sm:$0xff]
      %v414 = vld [vmem:[%s382 + $0xf8] sm:$0xff]
      %v415 = vld [vmem:[%s382 + $0x100] sm:$0xff]
      %v416 = vld [vmem:[%s382 + $0x108] sm:$0xff]
      %v417 = vld [vmem:[%s382 + $0x110] sm:$0xff]
      %v418 = vld [vmem:[%s382 + $0x118] sm:$0xff]
      %v419 = vpack.c.bf16 %v384, %v383
      %v420 = vpack.c.bf16 %v386, %v385
      %v421 = vpack.c.bf16 %v388, %v387
      %v422 = vpack.c.bf16 %v390, %v389
      %v423 = vpack.c.bf16 %v392, %v391
      %v424 = vpack.c.bf16 %v394, %v393
      %v425 = vpack.c.bf16 %v396, %v395
      %v426 = vpack.c.bf16 %v398, %v397
      %v427 = vpack.c.bf16 %v400, %v399
      %v428 = vpack.c.bf16 %v402, %v401
      %v429 = vpack.c.bf16 %v404, %v403
      %v430 = vpack.c.bf16 %v406, %v405
      %v431 = vpack.c.bf16 %v408, %v407
      %v432 = vpack.c.bf16 %v410, %v409
      %v433 = vpack.c.bf16 %v412, %v411
      %v434 = vpack.c.bf16 %v414, %v413
      %v435 = vpack.c.bf16 %v416, %v415
      %v436 = vpack.c.bf16 %v418, %v417
      %v437 = vld [vmem:[%s225] sm:$0xf]
      %vm438 = vcmask 64512
      %v440 = vsel %vm438, %v419, 0
      %v443 = vsel %vm438, %v420, 0
      %v446 = vsel %vm438, %v421, 0
      %v449 = vsel %vm438, %v422, 0
      %v452 = vsel %vm438, %v423, 0
      %v455 = vsel %vm438, %v424, 0
      %v458 = vsel %vm438, %v425, 0
      %v461 = vsel %vm438, %v426, 0
      %v464 = vsel %vm438, %v427, 0
      %v467 = vsel %vm438, %v428, 0
      %v470 = vsel %vm438, %v429, 0
      %v473 = vsel %vm438, %v430, 0
      %v476 = vsel %vm438, %v431, 0
      %v479 = vsel %vm438, %v432, 0
      %v482 = vsel %vm438, %v433, 0
      %v485 = vsel %vm438, %v434, 0
      %v488 = vsel %vm438, %v435, 0
      %v491 = vsel %vm438, %v436, 0
      %vm493 = vcmask 1043456
      %v495 = vsel %vm493, %v437, 0
      %497 = vmatprep.subr.bf16.mxu0 0
      %498 = vmatpush1.bf16.msra.mxu0 0
      %499 = vmatprep.subr.bf16.mxu0 0
      %500 = vmatpush1.bf16.msra.mxu0 0
      %501 = vmatprep.subr.bf16.mxu0 0
      %502 = vmatpush1.bf16.msra.mxu0 0
      %503 = vmatprep.subr.bf16.mxu0 0
      %504 = vmatpush1.bf16.msra.mxu0 0
      %505 = vmatprep.subr.bf16.mxu0 0
      %506 = vmatpush1.bf16.msra.mxu0 0
      %507 = vmatprep.subr.bf16.mxu0 0
      %508 = vmatpush1.bf16.msra.mxu0 0
      %509 = vmatprep.subr.bf16.mxu0 0
      %510 = vmatpush1.bf16.msra.mxu0 0
      %511 = vmatprep.subr.bf16.mxu0 0
      %512 = vmatpush1.bf16.msra.mxu0 %v495
      %513 = vmatprep.subr.bf16.mxu0 0
      %514 = vmatpush2.bf16.msra.mxu0 0
      %515 = vmatprep.subr.bf16.mxu0 0
      %516 = vmatpush2.bf16.msra.mxu0 0
      %517 = vmatprep.subr.bf16.mxu0 0
      %518 = vmatpush2.bf16.msra.mxu0 0
      %519 = vmatprep.subr.bf16.mxu0 0
      %520 = vmatpush2.bf16.msra.mxu0 0
      %521 = vmatprep.subr.bf16.mxu0 0
      %522 = vmatpush2.bf16.msra.mxu0 0
      %523 = vmatprep.subr.bf16.mxu0 0
      %524 = vmatpush2.bf16.msra.mxu0 0
      %525 = vmatprep.subr.bf16.mxu0 0
      %526 = vmatpush2.bf16.msra.mxu0 0
      %527 = vmatprep.subr.bf16.mxu0 0
      %528 = vmatpush2.bf16.msra.mxu0 0
      %529 = vmatprep.mubr.bf16.mxu0 0
      %530 = vmatmul.mubr.bf16.gmra.mxu0 %v440
      %v531 = vpop.f32.mrf.mxu0
      %v532 = vadd.f32 0.0, %v531
      %v533 = vpop.f32.mrf.mxu0
      %v534 = vpop.f32.mrf.mxu0
      %v535 = vadd.f32 0.0, %v534
      %v536 = vpop.f32.mrf.mxu0
      %537 = vmatprep.mubr.bf16.mxu0 0
      %538 = vmatmul.mubr.bf16.gmra.mxu0 %v443
      %v539 = vpop.f32.mrf.mxu0
      %v540 = vadd.f32 0.0, %v539
      %v541 = vpop.f32.mrf.mxu0
      %v542 = vpop.f32.mrf.mxu0
      %v543 = vadd.f32 0.0, %v542
      %v544 = vpop.f32.mrf.mxu0
      %545 = vmatprep.mubr.bf16.mxu0 0
      %546 = vmatmul.mubr.bf16.gmra.mxu0 %v446
      %v547 = vpop.f32.mrf.mxu0
      %v548 = vadd.f32 0.0, %v547
      %v549 = vpop.f32.mrf.mxu0
      %v550 = vpop.f32.mrf.mxu0
      %v551 = vadd.f32 0.0, %v550
      %v552 = vpop.f32.mrf.mxu0
      %553 = vmatprep.mubr.bf16.mxu0 0
      %554 = vmatmul.mubr.bf16.gmra.mxu0 %v449
      %v555 = vpop.f32.mrf.mxu0
      %v556 = vadd.f32 0.0, %v555
      %v557 = vpop.f32.mrf.mxu0
      %v558 = vpop.f32.mrf.mxu0
      %v559 = vadd.f32 0.0, %v558
      %v560 = vpop.f32.mrf.mxu0
      %561 = vmatprep.mubr.bf16.mxu0 0
      %562 = vmatmul.mubr.bf16.gmra.mxu0 %v452
      %v563 = vpop.f32.mrf.mxu0
      %v564 = vadd.f32 0.0, %v563
      %v565 = vpop.f32.mrf.mxu0
      %v566 = vpop.f32.mrf.mxu0
      %v567 = vadd.f32 0.0, %v566
      %v568 = vpop.f32.mrf.mxu0
      %569 = vmatprep.mubr.bf16.mxu0 0
      %570 = vmatmul.mubr.bf16.gmra.mxu0 %v455
      %v571 = vpop.f32.mrf.mxu0
      %v572 = vadd.f32 0.0, %v571
      %v573 = vpop.f32.mrf.mxu0
      %v574 = vpop.f32.mrf.mxu0
      %v575 = vadd.f32 0.0, %v574
      %v576 = vpop.f32.mrf.mxu0
      %577 = vmatprep.mubr.bf16.mxu0 0
      %578 = vmatmul.mubr.bf16.gmra.mxu0 %v458
      %v579 = vpop.f32.mrf.mxu0
      %v580 = vadd.f32 0.0, %v579
      %v581 = vpop.f32.mrf.mxu0
      %v582 = vpop.f32.mrf.mxu0
      %v583 = vadd.f32 0.0, %v582
      %v584 = vpop.f32.mrf.mxu0
      %585 = vmatprep.mubr.bf16.mxu0 0
      %586 = vmatmul.mubr.bf16.gmra.mxu0 %v461
      %v587 = vpop.f32.mrf.mxu0
      %v588 = vadd.f32 0.0, %v587
      %v589 = vpop.f32.mrf.mxu0
      %v590 = vpop.f32.mrf.mxu0
      %v591 = vadd.f32 0.0, %v590
      %v592 = vpop.f32.mrf.mxu0
      %593 = vmatprep.mubr.bf16.mxu0 0
      %594 = vmatmul.mubr.bf16.gmra.mxu0 %v464
      %v595 = vpop.f32.mrf.mxu0
      %v596 = vadd.f32 0.0, %v595
      %v597 = vpop.f32.mrf.mxu0
      %v598 = vpop.f32.mrf.mxu0
      %v599 = vadd.f32 0.0, %v598
      %v600 = vpop.f32.mrf.mxu0
      %601 = vmatprep.mubr.bf16.mxu0 0
      %602 = vmatmul.mubr.bf16.gmra.mxu0 %v467
      %v603 = vpop.f32.mrf.mxu0
      %v604 = vadd.f32 0.0, %v603
      %v605 = vpop.f32.mrf.mxu0
      %v606 = vpop.f32.mrf.mxu0
      %v607 = vadd.f32 0.0, %v606
      %v608 = vpop.f32.mrf.mxu0
      %609 = vmatprep.mubr.bf16.mxu0 0
      %610 = vmatmul.mubr.bf16.gmra.mxu0 %v470
      %v611 = vpop.f32.mrf.mxu0
      %v612 = vadd.f32 0.0, %v611
      %v613 = vpop.f32.mrf.mxu0
      %v614 = vpop.f32.mrf.mxu0
      %v615 = vadd.f32 0.0, %v614
      %v616 = vpop.f32.mrf.mxu0
      %617 = vmatprep.mubr.bf16.mxu0 0
      %618 = vmatmul.mubr.bf16.gmra.mxu0 %v473
      %v619 = vpop.f32.mrf.mxu0
      %v620 = vadd.f32 0.0, %v619
      %v621 = vpop.f32.mrf.mxu0
      %v622 = vpop.f32.mrf.mxu0
      %v623 = vadd.f32 0.0, %v622
      %v624 = vpop.f32.mrf.mxu0
      %625 = vmatprep.mubr.bf16.mxu0 0
      %626 = vmatmul.mubr.bf16.gmra.mxu0 %v476
      %v627 = vpop.f32.mrf.mxu0
      %v628 = vadd.f32 0.0, %v627
      %v629 = vpop.f32.mrf.mxu0
      %v630 = vpop.f32.mrf.mxu0
      %v631 = vadd.f32 0.0, %v630
      %v632 = vpop.f32.mrf.mxu0
      %633 = vmatprep.mubr.bf16.mxu0 0
      %634 = vmatmul.mubr.bf16.gmra.mxu0 %v479
      %v635 = vpop.f32.mrf.mxu0
      %v636 = vadd.f32 0.0, %v635
      %v637 = vpop.f32.mrf.mxu0
      %v638 = vpop.f32.mrf.mxu0
      %v639 = vadd.f32 0.0, %v638
      %v640 = vpop.f32.mrf.mxu0
      %641 = vmatprep.mubr.bf16.mxu0 0
      %642 = vmatmul.mubr.bf16.gmra.mxu0 %v482
      %v643 = vpop.f32.mrf.mxu0
      %v644 = vadd.f32 0.0, %v643
      %v645 = vpop.f32.mrf.mxu0
      %v646 = vpop.f32.mrf.mxu0
      %v647 = vadd.f32 0.0, %v646
      %v648 = vpop.f32.mrf.mxu0
      %649 = vmatprep.mubr.bf16.mxu0 0
      %650 = vmatmul.mubr.bf16.gmra.mxu0 %v485
      %v651 = vpop.f32.mrf.mxu0
      %v652 = vadd.f32 0.0, %v651
      %v653 = vpop.f32.mrf.mxu0
      %v654 = vpop.f32.mrf.mxu0
      %v655 = vadd.f32 0.0, %v654
      %v656 = vpop.f32.mrf.mxu0
      %657 = vmatprep.mubr.bf16.mxu0 0
      %658 = vmatmul.mubr.bf16.gmra.mxu0 %v488
      %v659 = vpop.f32.mrf.mxu0
      %v660 = vadd.f32 0.0, %v659
      %v661 = vpop.f32.mrf.mxu0
      %v662 = vpop.f32.mrf.mxu0
      %v663 = vadd.f32 0.0, %v662
      %v664 = vpop.f32.mrf.mxu0
      %665 = vmatprep.mubr.bf16.mxu0 0
      %666 = vmatmul.mubr.bf16.gmra.mxu0 %v491
      %v667 = vpop.f32.mrf.mxu0
      %v668 = vadd.f32 0.0, %v667
      %v669 = vpop.f32.mrf.mxu0
      %v670 = vpop.f32.mrf.mxu0
      %v671 = vadd.f32 0.0, %v670
      %v672 = vpop.f32.mrf.mxu0
      %673 = vdwg.mxu0
      %674 = vst [vmem:[#allocation2] sm:$0xff] %v532
      %675 = vst [vmem:[#allocation2 + $0x8] sm:$0xff] %v535
      %676 = vst [vmem:[#allocation2 + $0x10] sm:$0xff] %v540
      %677 = vst [vmem:[#allocation2 + $0x18] sm:$0xff] %v543
      %678 = vst [vmem:[#allocation2 + $0x20] sm:$0xff] %v548
      %679 = vst [vmem:[#allocation2 + $0x28] sm:$0xff] %v551
      %680 = vst [vmem:[#allocation2 + $0x30] sm:$0xff] %v556
      %681 = vst [vmem:[#allocation2 + $0x38] sm:$0xff] %v559
      %682 = vst [vmem:[#allocation2 + $0x40] sm:$0xff] %v564
      %683 = vst [vmem:[#allocation2 + $0x48] sm:$0xff] %v567
      %684 = vst [vmem:[#allocation2 + $0x50] sm:$0xff] %v572
      %685 = vst [vmem:[#allocation2 + $0x58] sm:$0xff] %v575
      %686 = vst [vmem:[#allocation2 + $0x60] sm:$0xff] %v580
      %687 = vst [vmem:[#allocation2 + $0x68] sm:$0xff] %v583
      %688 = vst [vmem:[#allocation2 + $0x70] sm:$0xff] %v588
      %689 = vst [vmem:[#allocation2 + $0x78] sm:$0xff] %v591
      %690 = vst [vmem:[#allocation2 + $0x80] sm:$0xff] %v596
      %691 = vst [vmem:[#allocation2 + $0x88] sm:$0xff] %v599
      %692 = vst [vmem:[#allocation2 + $0x90] sm:$0xff] %v604
      %693 = vst [vmem:[#allocation2 + $0x98] sm:$0xff] %v607
      %694 = vst [vmem:[#allocation2 + $0xa0] sm:$0xff] %v612
      %695 = vst [vmem:[#allocation2 + $0xa8] sm:$0xff] %v615
      %696 = vst [vmem:[#allocation2 + $0xb0] sm:$0xff] %v620
      %697 = vst [vmem:[#allocation2 + $0xb8] sm:$0xff] %v623
      %698 = vst [vmem:[#allocation2 + $0xc0] sm:$0xff] %v628
      %699 = vst [vmem:[#allocation2 + $0xc8] sm:$0xff] %v631
      %700 = vst [vmem:[#allocation2 + $0xd0] sm:$0xff] %v636
      %701 = vst [vmem:[#allocation2 + $0xd8] sm:$0xff] %v639
      %702 = vst [vmem:[#allocation2 + $0xe0] sm:$0xff] %v644
      %703 = vst [vmem:[#allocation2 + $0xe8] sm:$0xff] %v647
      %704 = vst [vmem:[#allocation2 + $0xf0] sm:$0xff] %v652
      %705 = vst [vmem:[#allocation2 + $0xf8] sm:$0xff] %v655
      %706 = vst [vmem:[#allocation2 + $0x100] sm:$0xff] %v660
      %707 = vst [vmem:[#allocation2 + $0x108] sm:$0xff] %v663
      %708 = vst [vmem:[#allocation2 + $0x110] sm:$0xff] %v668
      %709 = vst [vmem:[#allocation2 + $0x118] sm:$0xff] %v671
      %v710 = vld [vmem:[#allocation2] sm:$0xff]
      %v711 = vld [vmem:[#allocation2 + $0x8] sm:$0xff]
      %v712 = vld [vmem:[#allocation2 + $0x10] sm:$0xff]
      %v713 = vld [vmem:[#allocation2 + $0x18] sm:$0xff]
      %v714 = vld [vmem:[#allocation2 + $0x20] sm:$0xff]
      %v715 = vld [vmem:[#allocation2 + $0x28] sm:$0xff]
      %v716 = vld [vmem:[#allocation2 + $0x30] sm:$0xff]
      %v717 = vld [vmem:[#allocation2 + $0x38] sm:$0xff]
      %v718 = vld [vmem:[#allocation2 + $0x40] sm:$0xff]
      %v719 = vld [vmem:[#allocation2 + $0x48] sm:$0xff]
      %v720 = vld [vmem:[#allocation2 + $0x50] sm:$0xff]
      %v721 = vld [vmem:[#allocation2 + $0x58] sm:$0xff]
      %v722 = vld [vmem:[#allocation2 + $0x60] sm:$0xff]
      %v723 = vld [vmem:[#allocation2 + $0x68] sm:$0xff]
      %v724 = vld [vmem:[#allocation2 + $0x70] sm:$0xff]
      %v725 = vld [vmem:[#allocation2 + $0x78] sm:$0xff]
      %v726 = vld [vmem:[#allocation2 + $0x80] sm:$0xff]
      %v727 = vld [vmem:[#allocation2 + $0x88] sm:$0xff]
      %v728 = vld [vmem:[#allocation2 + $0x90] sm:$0xff]
      %v729 = vld [vmem:[#allocation2 + $0x98] sm:$0xff]
      %v730 = vld [vmem:[#allocation2 + $0xa0] sm:$0xff]
      %v731 = vld [vmem:[#allocation2 + $0xa8] sm:$0xff]
      %v732 = vld [vmem:[#allocation2 + $0xb0] sm:$0xff]
      %v733 = vld [vmem:[#allocation2 + $0xb8] sm:$0xff]
      %v734 = vld [vmem:[#allocation2 + $0xc0] sm:$0xff]
      %v735 = vld [vmem:[#allocation2 + $0xc8] sm:$0xff]
      %v736 = vld [vmem:[#allocation2 + $0xd0] sm:$0xff]
      %v737 = vld [vmem:[#allocation2 + $0xd8] sm:$0xff]
      %v738 = vld [vmem:[#allocation2 + $0xe0] sm:$0xff]
      %v739 = vld [vmem:[#allocation2 + $0xe8] sm:$0xff]
      %v740 = vld [vmem:[#allocation2 + $0xf0] sm:$0xff]
      %v741 = vld [vmem:[#allocation2 + $0xf8] sm:$0xff]
      %v742 = vld [vmem:[#allocation2 + $0x100] sm:$0xff]
      %v743 = vld [vmem:[#allocation2 + $0x108] sm:$0xff]
      %v744 = vld [vmem:[#allocation2 + $0x110] sm:$0xff]
      %v745 = vld [vmem:[#allocation2 + $0x118] sm:$0xff]
      %s746 = sadd.s32 %s244, 1
      %s747 = scalar_lea.vmem [#allocation3], %s746
      %v748 = vld [vmem:[%s747] sm:$0xff]
      %v749 = vld [vmem:[%s747 + $0x8] sm:$0xff]
      %v750 = vld [vmem:[%s747 + $0x10] sm:$0xff]
      %v751 = vld [vmem:[%s747 + $0x18] sm:$0xff]
      %v752 = vld [vmem:[%s747 + $0x20] sm:$0xff]
      %v753 = vld [vmem:[%s747 + $0x28] sm:$0xff]
      %v754 = vld [vmem:[%s747 + $0x30] sm:$0xff]
      %v755 = vld [vmem:[%s747 + $0x38] sm:$0xff]
      %v756 = vld [vmem:[%s747 + $0x40] sm:$0xff]
      %v757 = vld [vmem:[%s747 + $0x48] sm:$0xff]
      %v758 = vld [vmem:[%s747 + $0x50] sm:$0xff]
      %v759 = vld [vmem:[%s747 + $0x58] sm:$0xff]
      %v760 = vld [vmem:[%s747 + $0x60] sm:$0xff]
      %v761 = vld [vmem:[%s747 + $0x68] sm:$0xff]
      %v762 = vld [vmem:[%s747 + $0x70] sm:$0xff]
      %v763 = vld [vmem:[%s747 + $0x78] sm:$0xff]
      %v764 = vld [vmem:[%s747 + $0x80] sm:$0xff]
      %v765 = vld [vmem:[%s747 + $0x88] sm:$0xff]
      %v766 = vld [vmem:[%s747 + $0x90] sm:$0xff]
      %v767 = vld [vmem:[%s747 + $0x98] sm:$0xff]
      %v768 = vld [vmem:[%s747 + $0xa0] sm:$0xff]
      %v769 = vld [vmem:[%s747 + $0xa8] sm:$0xff]
      %v770 = vld [vmem:[%s747 + $0xb0] sm:$0xff]
      %v771 = vld [vmem:[%s747 + $0xb8] sm:$0xff]
      %v772 = vld [vmem:[%s747 + $0xc0] sm:$0xff]
      %v773 = vld [vmem:[%s747 + $0xc8] sm:$0xff]
      %v774 = vld [vmem:[%s747 + $0xd0] sm:$0xff]
      %v775 = vld [vmem:[%s747 + $0xd8] sm:$0xff]
      %v776 = vld [vmem:[%s747 + $0xe0] sm:$0xff]
      %v777 = vld [vmem:[%s747 + $0xe8] sm:$0xff]
      %v778 = vld [vmem:[%s747 + $0xf0] sm:$0xff]
      %v779 = vld [vmem:[%s747 + $0xf8] sm:$0xff]
      %v780 = vld [vmem:[%s747 + $0x100] sm:$0xff]
      %v781 = vld [vmem:[%s747 + $0x108] sm:$0xff]
      %v782 = vld [vmem:[%s747 + $0x110] sm:$0xff]
      %v783 = vld [vmem:[%s747 + $0x118] sm:$0xff]
      %v784 = vpack.c.bf16 %v749, %v748
      %v785 = vpack.c.bf16 %v751, %v750
      %v786 = vpack.c.bf16 %v753, %v752
      %v787 = vpack.c.bf16 %v755, %v754
      %v788 = vpack.c.bf16 %v757, %v756
      %v789 = vpack.c.bf16 %v759, %v758
      %v790 = vpack.c.bf16 %v761, %v760
      %v791 = vpack.c.bf16 %v763, %v762
      %v792 = vpack.c.bf16 %v765, %v764
      %v793 = vpack.c.bf16 %v767, %v766
      %v794 = vpack.c.bf16 %v769, %v768
      %v795 = vpack.c.bf16 %v771, %v770
      %v796 = vpack.c.bf16 %v773, %v772
      %v797 = vpack.c.bf16 %v775, %v774
      %v798 = vpack.c.bf16 %v777, %v776
      %v799 = vpack.c.bf16 %v779, %v778
      %v800 = vpack.c.bf16 %v781, %v780
      %v801 = vpack.c.bf16 %v783, %v782
      %s802 = scalar_lea.vmem %s225, 4
      %v803 = vld [vmem:[%s802] sm:$0xf]
      %v805 = vsel %vm438, %v784, 0
      %v808 = vsel %vm438, %v785, 0
      %v811 = vsel %vm438, %v786, 0
      %v814 = vsel %vm438, %v787, 0
      %v817 = vsel %vm438, %v788, 0
      %v820 = vsel %vm438, %v789, 0
      %v823 = vsel %vm438, %v790, 0
      %v826 = vsel %vm438, %v791, 0
      %v829 = vsel %vm438, %v792, 0
      %v832 = vsel %vm438, %v793, 0
      %v835 = vsel %vm438, %v794, 0
      %v838 = vsel %vm438, %v795, 0
      %v841 = vsel %vm438, %v796, 0
      %v844 = vsel %vm438, %v797, 0
      %v847 = vsel %vm438, %v798, 0
      %v850 = vsel %vm438, %v799, 0
      %v853 = vsel %vm438, %v800, 0
      %v856 = vsel %vm438, %v801, 0
      %v859 = vsel %vm493, %v803, 0
      %861 = vmatprep.subr.bf16.mxu0 0
      %862 = vmatpush1.bf16.msra.mxu0 0
      %863 = vmatprep.subr.bf16.mxu0 0
      %864 = vmatpush1.bf16.msra.mxu0 0
      %865 = vmatprep.subr.bf16.mxu0 0
      %866 = vmatpush1.bf16.msra.mxu0 0
      %867 = vmatprep.subr.bf16.mxu0 0
      %868 = vmatpush1.bf16.msra.mxu0 0
      %869 = vmatprep.subr.bf16.mxu0 0
      %870 = vmatpush1.bf16.msra.mxu0 0
      %871 = vmatprep.subr.bf16.mxu0 0
      %872 = vmatpush1.bf16.msra.mxu0 0
      %873 = vmatprep.subr.bf16.mxu0 0
      %874 = vmatpush1.bf16.msra.mxu0 0
      %875 = vmatprep.subr.bf16.mxu0 0
      %876 = vmatpush1.bf16.msra.mxu0 %v859
      %877 = vmatprep.subr.bf16.mxu0 0
      %878 = vmatpush2.bf16.msra.mxu0 0
      %879 = vmatprep.subr.bf16.mxu0 0
      %880 = vmatpush2.bf16.msra.mxu0 0
      %881 = vmatprep.subr.bf16.mxu0 0
      %882 = vmatpush2.bf16.msra.mxu0 0
      %883 = vmatprep.subr.bf16.mxu0 0
      %884 = vmatpush2.bf16.msra.mxu0 0
      %885 = vmatprep.subr.bf16.mxu0 0
      %886 = vmatpush2.bf16.msra.mxu0 0
      %887 = vmatprep.subr.bf16.mxu0 0
      %888 = vmatpush2.bf16.msra.mxu0 0
      %889 = vmatprep.subr.bf16.mxu0 0
      %890 = vmatpush2.bf16.msra.mxu0 0
      %891 = vmatprep.subr.bf16.mxu0 0
      %892 = vmatpush2.bf16.msra.mxu0 0
      %893 = vmatprep.mubr.bf16.mxu0 0
      %894 = vmatmul.mubr.bf16.gmra.mxu0 %v805
      %v895 = vpop.f32.mrf.mxu0
      %v896 = vadd.f32 0.0, %v895
      %v897 = vpop.f32.mrf.mxu0
      %v898 = vpop.f32.mrf.mxu0
      %v899 = vadd.f32 0.0, %v898
      %v900 = vpop.f32.mrf.mxu0
      %901 = vmatprep.mubr.bf16.mxu0 0
      %902 = vmatmul.mubr.bf16.gmra.mxu0 %v808
      %v903 = vpop.f32.mrf.mxu0
      %v904 = vadd.f32 0.0, %v903
      %v905 = vpop.f32.mrf.mxu0
      %v906 = vpop.f32.mrf.mxu0
      %v907 = vadd.f32 0.0, %v906
      %v908 = vpop.f32.mrf.mxu0
      %909 = vmatprep.mubr.bf16.mxu0 0
      %910 = vmatmul.mubr.bf16.gmra.mxu0 %v811
      %v911 = vpop.f32.mrf.mxu0
      %v912 = vadd.f32 0.0, %v911
      %v913 = vpop.f32.mrf.mxu0
      %v914 = vpop.f32.mrf.mxu0
      %v915 = vadd.f32 0.0, %v914
      %v916 = vpop.f32.mrf.mxu0
      %917 = vmatprep.mubr.bf16.mxu0 0
      %918 = vmatmul.mubr.bf16.gmra.mxu0 %v814
      %v919 = vpop.f32.mrf.mxu0
      %v920 = vadd.f32 0.0, %v919
      %v921 = vpop.f32.mrf.mxu0
      %v922 = vpop.f32.mrf.mxu0
      %v923 = vadd.f32 0.0, %v922
      %v924 = vpop.f32.mrf.mxu0
      %925 = vmatprep.mubr.bf16.mxu0 0
      %926 = vmatmul.mubr.bf16.gmra.mxu0 %v817
      %v927 = vpop.f32.mrf.mxu0
      %v928 = vadd.f32 0.0, %v927
      %v929 = vpop.f32.mrf.mxu0
      %v930 = vpop.f32.mrf.mxu0
      %v931 = vadd.f32 0.0, %v930
      %v932 = vpop.f32.mrf.mxu0
      %933 = vmatprep.mubr.bf16.mxu0 0
      %934 = vmatmul.mubr.bf16.gmra.mxu0 %v820
      %v935 = vpop.f32.mrf.mxu0
      %v936 = vadd.f32 0.0, %v935
      %v937 = vpop.f32.mrf.mxu0
      %v938 = vpop.f32.mrf.mxu0
      %v939 = vadd.f32 0.0, %v938
      %v940 = vpop.f32.mrf.mxu0
      %941 = vmatprep.mubr.bf16.mxu0 0
      %942 = vmatmul.mubr.bf16.gmra.mxu0 %v823
      %v943 = vpop.f32.mrf.mxu0
      %v944 = vadd.f32 0.0, %v943
      %v945 = vpop.f32.mrf.mxu0
      %v946 = vpop.f32.mrf.mxu0
      %v947 = vadd.f32 0.0, %v946
      %v948 = vpop.f32.mrf.mxu0
      %949 = vmatprep.mubr.bf16.mxu0 0
      %950 = vmatmul.mubr.bf16.gmra.mxu0 %v826
      %v951 = vpop.f32.mrf.mxu0
      %v952 = vadd.f32 0.0, %v951
      %v953 = vpop.f32.mrf.mxu0
      %v954 = vpop.f32.mrf.mxu0
      %v955 = vadd.f32 0.0, %v954
      %v956 = vpop.f32.mrf.mxu0
      %957 = vmatprep.mubr.bf16.mxu0 0
      %958 = vmatmul.mubr.bf16.gmra.mxu0 %v829
      %v959 = vpop.f32.mrf.mxu0
      %v960 = vadd.f32 0.0, %v959
      %v961 = vpop.f32.mrf.mxu0
      %v962 = vpop.f32.mrf.mxu0
      %v963 = vadd.f32 0.0, %v962
      %v964 = vpop.f32.mrf.mxu0
      %965 = vmatprep.mubr.bf16.mxu0 0
      %966 = vmatmul.mubr.bf16.gmra.mxu0 %v832
      %v967 = vpop.f32.mrf.mxu0
      %v968 = vadd.f32 0.0, %v967
      %v969 = vpop.f32.mrf.mxu0
      %v970 = vpop.f32.mrf.mxu0
      %v971 = vadd.f32 0.0, %v970
      %v972 = vpop.f32.mrf.mxu0
      %973 = vmatprep.mubr.bf16.mxu0 0
      %974 = vmatmul.mubr.bf16.gmra.mxu0 %v835
      %v975 = vpop.f32.mrf.mxu0
      %v976 = vadd.f32 0.0, %v975
      %v977 = vpop.f32.mrf.mxu0
      %v978 = vpop.f32.mrf.mxu0
      %v979 = vadd.f32 0.0, %v978
      %v980 = vpop.f32.mrf.mxu0
      %981 = vmatprep.mubr.bf16.mxu0 0
      %982 = vmatmul.mubr.bf16.gmra.mxu0 %v838
      %v983 = vpop.f32.mrf.mxu0
      %v984 = vadd.f32 0.0, %v983
      %v985 = vpop.f32.mrf.mxu0
      %v986 = vpop.f32.mrf.mxu0
      %v987 = vadd.f32 0.0, %v986
      %v988 = vpop.f32.mrf.mxu0
      %989 = vmatprep.mubr.bf16.mxu0 0
      %990 = vmatmul.mubr.bf16.gmra.mxu0 %v841
      %v991 = vpop.f32.mrf.mxu0
      %v992 = vadd.f32 0.0, %v991
      %v993 = vpop.f32.mrf.mxu0
      %v994 = vpop.f32.mrf.mxu0
      %v995 = vadd.f32 0.0, %v994
      %v996 = vpop.f32.mrf.mxu0
      %997 = vmatprep.mubr.bf16.mxu0 0
      %998 = vmatmul.mubr.bf16.gmra.mxu0 %v844
      %v999 = vpop.f32.mrf.mxu0
      %v1000 = vadd.f32 0.0, %v999
      %v1001 = vpop.f32.mrf.mxu0
      %v1002 = vpop.f32.mrf.mxu0
      %v1003 = vadd.f32 0.0, %v1002
      %v1004 = vpop.f32.mrf.mxu0
      %1005 = vmatprep.mubr.bf16.mxu0 0
      %1006 = vmatmul.mubr.bf16.gmra.mxu0 %v847
      %v1007 = vpop.f32.mrf.mxu0
      %v1008 = vadd.f32 0.0, %v1007
      %v1009 = vpop.f32.mrf.mxu0
      %v1010 = vpop.f32.mrf.mxu0
      %v1011 = vadd.f32 0.0, %v1010
      %v1012 = vpop.f32.mrf.mxu0
      %1013 = vmatprep.mubr.bf16.mxu0 0
      %1014 = vmatmul.mubr.bf16.gmra.mxu0 %v850
      %v1015 = vpop.f32.mrf.mxu0
      %v1016 = vadd.f32 0.0, %v1015
      %v1017 = vpop.f32.mrf.mxu0
      %v1018 = vpop.f32.mrf.mxu0
      %v1019 = vadd.f32 0.0, %v1018
      %v1020 = vpop.f32.mrf.mxu0
      %1021 = vmatprep.mubr.bf16.mxu0 0
      %1022 = vmatmul.mubr.bf16.gmra.mxu0 %v853
      %v1023 = vpop.f32.mrf.mxu0
      %v1024 = vadd.f32 0.0, %v1023
      %v1025 = vpop.f32.mrf.mxu0
      %v1026 = vpop.f32.mrf.mxu0
      %v1027 = vadd.f32 0.0, %v1026
      %v1028 = vpop.f32.mrf.mxu0
      %1029 = vmatprep.mubr.bf16.mxu0 0
      %1030 = vmatmul.mubr.bf16.gmra.mxu0 %v856
      %v1031 = vpop.f32.mrf.mxu0
      %v1032 = vadd.f32 0.0, %v1031
      %v1033 = vpop.f32.mrf.mxu0
      %v1034 = vpop.f32.mrf.mxu0
      %v1035 = vadd.f32 0.0, %v1034
      %v1036 = vpop.f32.mrf.mxu0
      %1037 = vdwg.mxu0
      %v1038 = vadd.f32 %v710, %v896
      %v1039 = vadd.f32 %v711, %v899
      %v1040 = vadd.f32 %v712, %v904
      %v1041 = vadd.f32 %v713, %v907
      %v1042 = vadd.f32 %v714, %v912
      %v1043 = vadd.f32 %v715, %v915
      %v1044 = vadd.f32 %v716, %v920
      %v1045 = vadd.f32 %v717, %v923
      %v1046 = vadd.f32 %v718, %v928
      %v1047 = vadd.f32 %v719, %v931
      %v1048 = vadd.f32 %v720, %v936
      %v1049 = vadd.f32 %v721, %v939
      %v1050 = vadd.f32 %v722, %v944
      %v1051 = vadd.f32 %v723, %v947
      %v1052 = vadd.f32 %v724, %v952
      %v1053 = vadd.f32 %v725, %v955
      %v1054 = vadd.f32 %v726, %v960
      %v1055 = vadd.f32 %v727, %v963
      %v1056 = vadd.f32 %v728, %v968
      %v1057 = vadd.f32 %v729, %v971
      %v1058 = vadd.f32 %v730, %v976
      %v1059 = vadd.f32 %v731, %v979
      %v1060 = vadd.f32 %v732, %v984
      %v1061 = vadd.f32 %v733, %v987
      %v1062 = vadd.f32 %v734, %v992
      %v1063 = vadd.f32 %v735, %v995
      %v1064 = vadd.f32 %v736, %v1000
      %v1065 = vadd.f32 %v737, %v1003
      %v1066 = vadd.f32 %v738, %v1008
      %v1067 = vadd.f32 %v739, %v1011
      %v1068 = vadd.f32 %v740, %v1016
      %v1069 = vadd.f32 %v741, %v1019
      %v1070 = vadd.f32 %v742, %v1024
      %v1071 = vadd.f32 %v743, %v1027
      %v1072 = vadd.f32 %v744, %v1032
      %v1073 = vadd.f32 %v745, %v1035
      %1074 = vst [vmem:[#allocation2] sm:$0xff] %v1038
      %1075 = vst [vmem:[#allocation2 + $0x8] sm:$0xff] %v1039
      %1076 = vst [vmem:[#allocation2 + $0x10] sm:$0xff] %v1040
      %1077 = vst [vmem:[#allocation2 + $0x18] sm:$0xff] %v1041
      %1078 = vst [vmem:[#allocation2 + $0x20] sm:$0xff] %v1042
      %1079 = vst [vmem:[#allocation2 + $0x28] sm:$0xff] %v1043
      %1080 = vst [vmem:[#allocation2 + $0x30] sm:$0xff] %v1044
      %1081 = vst [vmem:[#allocation2 + $0x38] sm:$0xff] %v1045
      %1082 = vst [vmem:[#allocation2 + $0x40] sm:$0xff] %v1046
      %1083 = vst [vmem:[#allocation2 + $0x48] sm:$0xff] %v1047
      %1084 = vst [vmem:[#allocation2 + $0x50] sm:$0xff] %v1048
      %1085 = vst [vmem:[#allocation2 + $0x58] sm:$0xff] %v1049
      %1086 = vst [vmem:[#allocation2 + $0x60] sm:$0xff] %v1050
      %1087 = vst [vmem:[#allocation2 + $0x68] sm:$0xff] %v1051
      %1088 = vst [vmem:[#allocation2 + $0x70] sm:$0xff] %v1052
      %1089 = vst [vmem:[#allocation2 + $0x78] sm:$0xff] %v1053
      %1090 = vst [vmem:[#allocation2 + $0x80] sm:$0xff] %v1054
      %1091 = vst [vmem:[#allocation2 + $0x88] sm:$0xff] %v1055
      %1092 = vst [vmem:[#allocation2 + $0x90] sm:$0xff] %v1056
      %1093 = vst [vmem:[#allocation2 + $0x98] sm:$0xff] %v1057
      %1094 = vst [vmem:[#allocation2 + $0xa0] sm:$0xff] %v1058
      %1095 = vst [vmem:[#allocation2 + $0xa8] sm:$0xff] %v1059
      %1096 = vst [vmem:[#allocation2 + $0xb0] sm:$0xff] %v1060
      %1097 = vst [vmem:[#allocation2 + $0xb8] sm:$0xff] %v1061
      %1098 = vst [vmem:[#allocation2 + $0xc0] sm:$0xff] %v1062
      %1099 = vst [vmem:[#allocation2 + $0xc8] sm:$0xff] %v1063
      %1100 = vst [vmem:[#allocation2 + $0xd0] sm:$0xff] %v1064
      %1101 = vst [vmem:[#allocation2 + $0xd8] sm:$0xff] %v1065
      %1102 = vst [vmem:[#allocation2 + $0xe0] sm:$0xff] %v1066
      %1103 = vst [vmem:[#allocation2 + $0xe8] sm:$0xff] %v1067
      %1104 = vst [vmem:[#allocation2 + $0xf0] sm:$0xff] %v1068
      %1105 = vst [vmem:[#allocation2 + $0xf8] sm:$0xff] %v1069
      %1106 = vst [vmem:[#allocation2 + $0x100] sm:$0xff] %v1070
      %1107 = vst [vmem:[#allocation2 + $0x108] sm:$0xff] %v1071
      %1108 = vst [vmem:[#allocation2 + $0x110] sm:$0xff] %v1072
      %1109 = vst [vmem:[#allocation2 + $0x118] sm:$0xff] %v1073
      %v1110 = vld [vmem:[#allocation2] sm:$0xff]
      %v1111 = vld [vmem:[#allocation2 + $0x8] sm:$0xff]
      %v1112 = vld [vmem:[#allocation2 + $0x10] sm:$0xff]
      %v1113 = vld [vmem:[#allocation2 + $0x18] sm:$0xff]
      %v1114 = vld [vmem:[#allocation2 + $0x20] sm:$0xff]
      %v1115 = vld [vmem:[#allocation2 + $0x28] sm:$0xff]
      %v1116 = vld [vmem:[#allocation2 + $0x30] sm:$0xff]
      %v1117 = vld [vmem:[#allocation2 + $0x38] sm:$0xff]
      %v1118 = vld [vmem:[#allocation2 + $0x40] sm:$0xff]
      %v1119 = vld [vmem:[#allocation2 + $0x48] sm:$0xff]
      %v1120 = vld [vmem:[#allocation2 + $0x50] sm:$0xff]
      %v1121 = vld [vmem:[#allocation2 + $0x58] sm:$0xff]
      %v1122 = vld [vmem:[#allocation2 + $0x60] sm:$0xff]
      %v1123 = vld [vmem:[#allocation2 + $0x68] sm:$0xff]
      %v1124 = vld [vmem:[#allocation2 + $0x70] sm:$0xff]
      %v1125 = vld [vmem:[#allocation2 + $0x78] sm:$0xff]
      %v1126 = vld [vmem:[#allocation2 + $0x80] sm:$0xff]
      %v1127 = vld [vmem:[#allocation2 + $0x88] sm:$0xff]
      %v1128 = vld [vmem:[#allocation2 + $0x90] sm:$0xff]
      %v1129 = vld [vmem:[#allocation2 + $0x98] sm:$0xff]
      %v1130 = vld [vmem:[#allocation2 + $0xa0] sm:$0xff]
      %v1131 = vld [vmem:[#allocation2 + $0xa8] sm:$0xff]
      %v1132 = vld [vmem:[#allocation2 + $0xb0] sm:$0xff]
      %v1133 = vld [vmem:[#allocation2 + $0xb8] sm:$0xff]
      %v1134 = vld [vmem:[#allocation2 + $0xc0] sm:$0xff]
      %v1135 = vld [vmem:[#allocation2 + $0xc8] sm:$0xff]
      %v1136 = vld [vmem:[#allocation2 + $0xd0] sm:$0xff]
      %v1137 = vld [vmem:[#allocation2 + $0xd8] sm:$0xff]
      %v1138 = vld [vmem:[#allocation2 + $0xe0] sm:$0xff]
      %v1139 = vld [vmem:[#allocation2 + $0xe8] sm:$0xff]
      %v1140 = vld [vmem:[#allocation2 + $0xf0] sm:$0xff]
      %v1141 = vld [vmem:[#allocation2 + $0xf8] sm:$0xff]
      %v1142 = vld [vmem:[#allocation2 + $0x100] sm:$0xff]
      %v1143 = vld [vmem:[#allocation2 + $0x108] sm:$0xff]
      %v1144 = vld [vmem:[#allocation2 + $0x110] sm:$0xff]
      %v1145 = vld [vmem:[#allocation2 + $0x118] sm:$0xff]
      %s1146 = sadd.s32 %s244, 2
      %s1147 = scalar_lea.vmem [#allocation3], %s1146
      %v1148 = vld [vmem:[%s1147] sm:$0xff]
      %v1149 = vld [vmem:[%s1147 + $0x8] sm:$0xff]
      %v1150 = vld [vmem:[%s1147 + $0x10] sm:$0xff]
      %v1151 = vld [vmem:[%s1147 + $0x18] sm:$0xff]
      %v1152 = vld [vmem:[%s1147 + $0x20] sm:$0xff]
      %v1153 = vld [vmem:[%s1147 + $0x28] sm:$0xff]
      %v1154 = vld [vmem:[%s1147 + $0x30] sm:$0xff]
      %v1155 = vld [vmem:[%s1147 + $0x38] sm:$0xff]
      %v1156 = vld [vmem:[%s1147 + $0x40] sm:$0xff]
      %v1157 = vld [vmem:[%s1147 + $0x48] sm:$0xff]
      %v1158 = vld [vmem:[%s1147 + $0x50] sm:$0xff]
      %v1159 = vld [vmem:[%s1147 + $0x58] sm:$0xff]
      %v1160 = vld [vmem:[%s1147 + $0x60] sm:$0xff]
      %v1161 = vld [vmem:[%s1147 + $0x68] sm:$0xff]
      %v1162 = vld [vmem:[%s1147 + $0x70] sm:$0xff]
      %v1163 = vld [vmem:[%s1147 + $0x78] sm:$0xff]
      %v1164 = vld [vmem:[%s1147 + $0x80] sm:$0xff]
      %v1165 = vld [vmem:[%s1147 + $0x88] sm:$0xff]
      %v1166 = vld [vmem:[%s1147 + $0x90] sm:$0xff]
      %v1167 = vld [vmem:[%s1147 + $0x98] sm:$0xff]
      %v1168 = vld [vmem:[%s1147 + $0xa0] sm:$0xff]
      %v1169 = vld [vmem:[%s1147 + $0xa8] sm:$0xff]
      %v1170 = vld [vmem:[%s1147 + $0xb0] sm:$0xff]
      %v1171 = vld [vmem:[%s1147 + $0xb8] sm:$0xff]
      %v1172 = vld [vmem:[%s1147 + $0xc0] sm:$0xff]
      %v1173 = vld [vmem:[%s1147 + $0xc8] sm:$0xff]
      %v1174 = vld [vmem:[%s1147 + $0xd0] sm:$0xff]
      %v1175 = vld [vmem:[%s1147 + $0xd8] sm:$0xff]
      %v1176 = vld [vmem:[%s1147 + $0xe0] sm:$0xff]
      %v1177 = vld [vmem:[%s1147 + $0xe8] sm:$0xff]
      %v1178 = vld [vmem:[%s1147 + $0xf0] sm:$0xff]
      %v1179 = vld [vmem:[%s1147 + $0xf8] sm:$0xff]
      %v1180 = vld [vmem:[%s1147 + $0x100] sm:$0xff]
      %v1181 = vld [vmem:[%s1147 + $0x108] sm:$0xff]
      %v1182 = vld [vmem:[%s1147 + $0x110] sm:$0xff]
      %v1183 = vld [vmem:[%s1147 + $0x118] sm:$0xff]
      %v1184 = vpack.c.bf16 %v1149, %v1148
      %v1185 = vpack.c.bf16 %v1151, %v1150
      %v1186 = vpack.c.bf16 %v1153, %v1152
      %v1187 = vpack.c.bf16 %v1155, %v1154
      %v1188 = vpack.c.bf16 %v1157, %v1156
      %v1189 = vpack.c.bf16 %v1159, %v1158
      %v1190 = vpack.c.bf16 %v1161, %v1160
      %v1191 = vpack.c.bf16 %v1163, %v1162
      %v1192 = vpack.c.bf16 %v1165, %v1164
      %v1193 = vpack.c.bf16 %v1167, %v1166
      %v1194 = vpack.c.bf16 %v1169, %v1168
      %v1195 = vpack.c.bf16 %v1171, %v1170
      %v1196 = vpack.c.bf16 %v1173, %v1172
      %v1197 = vpack.c.bf16 %v1175, %v1174
      %v1198 = vpack.c.bf16 %v1177, %v1176
      %v1199 = vpack.c.bf16 %v1179, %v1178
      %v1200 = vpack.c.bf16 %v1181, %v1180
      %v1201 = vpack.c.bf16 %v1183, %v1182
      %s1202 = scalar_lea.vmem %s225, 8
      %v1203 = vld [vmem:[%s1202] sm:$0xf]
      %v1205 = vsel %vm438, %v1184, 0
      %v1208 = vsel %vm438, %v1185, 0
      %v1211 = vsel %vm438, %v1186, 0
      %v1214 = vsel %vm438, %v1187, 0
      %v1217 = vsel %vm438, %v1188, 0
      %v1220 = vsel %vm438, %v1189, 0
      %v1223 = vsel %vm438, %v1190, 0
      %v1226 = vsel %vm438, %v1191, 0
      %v1229 = vsel %vm438, %v1192, 0
      %v1232 = vsel %vm438, %v1193, 0
      %v1235 = vsel %vm438, %v1194, 0
      %v1238 = vsel %vm438, %v1195, 0
      %v1241 = vsel %vm438, %v1196, 0
      %v1244 = vsel %vm438, %v1197, 0
      %v1247 = vsel %vm438, %v1198, 0
      %v1250 = vsel %vm438, %v1199, 0
      %v1253 = vsel %vm438, %v1200, 0
      %v1256 = vsel %vm438, %v1201, 0
      %v1259 = vsel %vm493, %v1203, 0
      %1261 = vmatprep.subr.bf16.mxu0 0
      %1262 = vmatpush1.bf16.msra.mxu0 0
      %1263 = vmatprep.subr.bf16.mxu0 0
      %1264 = vmatpush1.bf16.msra.mxu0 0
      %1265 = vmatprep.subr.bf16.mxu0 0
      %1266 = vmatpush1.bf16.msra.mxu0 0
      %1267 = vmatprep.subr.bf16.mxu0 0
      %1268 = vmatpush1.bf16.msra.mxu0 0
      %1269 = vmatprep.subr.bf16.mxu0 0
      %1270 = vmatpush1.bf16.msra.mxu0 0
      %1271 = vmatprep.subr.bf16.mxu0 0
      %1272 = vmatpush1.bf16.msra.mxu0 0
      %1273 = vmatprep.subr.bf16.mxu0 0
      %1274 = vmatpush1.bf16.msra.mxu0 0
      %1275 = vmatprep.subr.bf16.mxu0 0
      %1276 = vmatpush1.bf16.msra.mxu0 %v1259
      %1277 = vmatprep.subr.bf16.mxu0 0
      %1278 = vmatpush2.bf16.msra.mxu0 0
      %1279 = vmatprep.subr.bf16.mxu0 0
      %1280 = vmatpush2.bf16.msra.mxu0 0
      %1281 = vmatprep.subr.bf16.mxu0 0
      %1282 = vmatpush2.bf16.msra.mxu0 0
      %1283 = vmatprep.subr.bf16.mxu0 0
      %1284 = vmatpush2.bf16.msra.mxu0 0
      %1285 = vmatprep.subr.bf16.mxu0 0
      %1286 = vmatpush2.bf16.msra.mxu0 0
      %1287 = vmatprep.subr.bf16.mxu0 0
      %1288 = vmatpush2.bf16.msra.mxu0 0
      %1289 = vmatprep.subr.bf16.mxu0 0
      %1290 = vmatpush2.bf16.msra.mxu0 0
      %1291 = vmatprep.subr.bf16.mxu0 0
      %1292 = vmatpush2.bf16.msra.mxu0 0
      %1293 = vmatprep.mubr.bf16.mxu0 0
      %1294 = vmatmul.mubr.bf16.gmra.mxu0 %v1205
      %v1295 = vpop.f32.mrf.mxu0
      %v1296 = vadd.f32 0.0, %v1295
      %v1297 = vpop.f32.mrf.mxu0
      %v1298 = vpop.f32.mrf.mxu0
      %v1299 = vadd.f32 0.0, %v1298
      %v1300 = vpop.f32.mrf.mxu0
      %1301 = vmatprep.mubr.bf16.mxu0 0
      %1302 = vmatmul.mubr.bf16.gmra.mxu0 %v1208
      %v1303 = vpop.f32.mrf.mxu0
      %v1304 = vadd.f32 0.0, %v1303
      %v1305 = vpop.f32.mrf.mxu0
      %v1306 = vpop.f32.mrf.mxu0
      %v1307 = vadd.f32 0.0, %v1306
      %v1308 = vpop.f32.mrf.mxu0
      %1309 = vmatprep.mubr.bf16.mxu0 0
      %1310 = vmatmul.mubr.bf16.gmra.mxu0 %v1211
      %v1311 = vpop.f32.mrf.mxu0
      %v1312 = vadd.f32 0.0, %v1311
      %v1313 = vpop.f32.mrf.mxu0
      %v1314 = vpop.f32.mrf.mxu0
      %v1315 = vadd.f32 0.0, %v1314
      %v1316 = vpop.f32.mrf.mxu0
      %1317 = vmatprep.mubr.bf16.mxu0 0
      %1318 = vmatmul.mubr.bf16.gmra.mxu0 %v1214
      %v1319 = vpop.f32.mrf.mxu0
      %v1320 = vadd.f32 0.0, %v1319
      %v1321 = vpop.f32.mrf.mxu0
      %v1322 = vpop.f32.mrf.mxu0
      %v1323 = vadd.f32 0.0, %v1322
      %v1324 = vpop.f32.mrf.mxu0
      %1325 = vmatprep.mubr.bf16.mxu0 0
      %1326 = vmatmul.mubr.bf16.gmra.mxu0 %v1217
      %v1327 = vpop.f32.mrf.mxu0
      %v1328 = vadd.f32 0.0, %v1327
      %v1329 = vpop.f32.mrf.mxu0
      %v1330 = vpop.f32.mrf.mxu0
      %v1331 = vadd.f32 0.0, %v1330
      %v1332 = vpop.f32.mrf.mxu0
      %1333 = vmatprep.mubr.bf16.mxu0 0
      %1334 = vmatmul.mubr.bf16.gmra.mxu0 %v1220
      %v1335 = vpop.f32.mrf.mxu0
      %v1336 = vadd.f32 0.0, %v1335
      %v1337 = vpop.f32.mrf.mxu0
      %v1338 = vpop.f32.mrf.mxu0
      %v1339 = vadd.f32 0.0, %v1338
      %v1340 = vpop.f32.mrf.mxu0
      %1341 = vmatprep.mubr.bf16.mxu0 0
      %1342 = vmatmul.mubr.bf16.gmra.mxu0 %v1223
      %v1343 = vpop.f32.mrf.mxu0
      %v1344 = vadd.f32 0.0, %v1343
      %v1345 = vpop.f32.mrf.mxu0
      %v1346 = vpop.f32.mrf.mxu0
      %v1347 = vadd.f32 0.0, %v1346
      %v1348 = vpop.f32.mrf.mxu0
      %1349 = vmatprep.mubr.bf16.mxu0 0
      %1350 = vmatmul.mubr.bf16.gmra.mxu0 %v1226
      %v1351 = vpop.f32.mrf.mxu0
      %v1352 = vadd.f32 0.0, %v1351
      %v1353 = vpop.f32.mrf.mxu0
      %v1354 = vpop.f32.mrf.mxu0
      %v1355 = vadd.f32 0.0, %v1354
      %v1356 = vpop.f32.mrf.mxu0
      %1357 = vmatprep.mubr.bf16.mxu0 0
      %1358 = vmatmul.mubr.bf16.gmra.mxu0 %v1229
      %v1359 = vpop.f32.mrf.mxu0
      %v1360 = vadd.f32 0.0, %v1359
      %v1361 = vpop.f32.mrf.mxu0
      %v1362 = vpop.f32.mrf.mxu0
      %v1363 = vadd.f32 0.0, %v1362
      %v1364 = vpop.f32.mrf.mxu0
      %1365 = vmatprep.mubr.bf16.mxu0 0
      %1366 = vmatmul.mubr.bf16.gmra.mxu0 %v1232
      %v1367 = vpop.f32.mrf.mxu0
      %v1368 = vadd.f32 0.0, %v1367
      %v1369 = vpop.f32.mrf.mxu0
      %v1370 = vpop.f32.mrf.mxu0
      %v1371 = vadd.f32 0.0, %v1370
      %v1372 = vpop.f32.mrf.mxu0
      %1373 = vmatprep.mubr.bf16.mxu0 0
      %1374 = vmatmul.mubr.bf16.gmra.mxu0 %v1235
      %v1375 = vpop.f32.mrf.mxu0
      %v1376 = vadd.f32 0.0, %v1375
      %v1377 = vpop.f32.mrf.mxu0
      %v1378 = vpop.f32.mrf.mxu0
      %v1379 = vadd.f32 0.0, %v1378
      %v1380 = vpop.f32.mrf.mxu0
      %1381 = vmatprep.mubr.bf16.mxu0 0
      %1382 = vmatmul.mubr.bf16.gmra.mxu0 %v1238
      %v1383 = vpop.f32.mrf.mxu0
      %v1384 = vadd.f32 0.0, %v1383
      %v1385 = vpop.f32.mrf.mxu0
      %v1386 = vpop.f32.mrf.mxu0
      %v1387 = vadd.f32 0.0, %v1386
      %v1388 = vpop.f32.mrf.mxu0
      %1389 = vmatprep.mubr.bf16.mxu0 0
      %1390 = vmatmul.mubr.bf16.gmra.mxu0 %v1241
      %v1391 = vpop.f32.mrf.mxu0
      %v1392 = vadd.f32 0.0, %v1391
      %v1393 = vpop.f32.mrf.mxu0
      %v1394 = vpop.f32.mrf.mxu0
      %v1395 = vadd.f32 0.0, %v1394
      %v1396 = vpop.f32.mrf.mxu0
      %1397 = vmatprep.mubr.bf16.mxu0 0
      %1398 = vmatmul.mubr.bf16.gmra.mxu0 %v1244
      %v1399 = vpop.f32.mrf.mxu0
      %v1400 = vadd.f32 0.0, %v1399
      %v1401 = vpop.f32.mrf.mxu0
      %v1402 = vpop.f32.mrf.mxu0
      %v1403 = vadd.f32 0.0, %v1402
      %v1404 = vpop.f32.mrf.mxu0
      %1405 = vmatprep.mubr.bf16.mxu0 0
      %1406 = vmatmul.mubr.bf16.gmra.mxu0 %v1247
      %v1407 = vpop.f32.mrf.mxu0
      %v1408 = vadd.f32 0.0, %v1407
      %v1409 = vpop.f32.mrf.mxu0
      %v1410 = vpop.f32.mrf.mxu0
      %v1411 = vadd.f32 0.0, %v1410
      %v1412 = vpop.f32.mrf.mxu0
      %1413 = vmatprep.mubr.bf16.mxu0 0
      %1414 = vmatmul.mubr.bf16.gmra.mxu0 %v1250
      %v1415 = vpop.f32.mrf.mxu0
      %v1416 = vadd.f32 0.0, %v1415
      %v1417 = vpop.f32.mrf.mxu0
      %v1418 = vpop.f32.mrf.mxu0
      %v1419 = vadd.f32 0.0, %v1418
      %v1420 = vpop.f32.mrf.mxu0
      %1421 = vmatprep.mubr.bf16.mxu0 0
      %1422 = vmatmul.mubr.bf16.gmra.mxu0 %v1253
      %v1423 = vpop.f32.mrf.mxu0
      %v1424 = vadd.f32 0.0, %v1423
      %v1425 = vpop.f32.mrf.mxu0
      %v1426 = vpop.f32.mrf.mxu0
      %v1427 = vadd.f32 0.0, %v1426
      %v1428 = vpop.f32.mrf.mxu0
      %1429 = vmatprep.mubr.bf16.mxu0 0
      %1430 = vmatmul.mubr.bf16.gmra.mxu0 %v1256
      %v1431 = vpop.f32.mrf.mxu0
      %v1432 = vadd.f32 0.0, %v1431
      %v1433 = vpop.f32.mrf.mxu0
      %v1434 = vpop.f32.mrf.mxu0
      %v1435 = vadd.f32 0.0, %v1434
      %v1436 = vpop.f32.mrf.mxu0
      %1437 = vdwg.mxu0
      %v1438 = vadd.f32 %v1110, %v1296
      %v1439 = vadd.f32 %v1111, %v1299
      %v1440 = vadd.f32 %v1112, %v1304
      %v1441 = vadd.f32 %v1113, %v1307
      %v1442 = vadd.f32 %v1114, %v1312
      %v1443 = vadd.f32 %v1115, %v1315
      %v1444 = vadd.f32 %v1116, %v1320
      %v1445 = vadd.f32 %v1117, %v1323
      %v1446 = vadd.f32 %v1118, %v1328
      %v1447 = vadd.f32 %v1119, %v1331
      %v1448 = vadd.f32 %v1120, %v1336
      %v1449 = vadd.f32 %v1121, %v1339
      %v1450 = vadd.f32 %v1122, %v1344
      %v1451 = vadd.f32 %v1123, %v1347
      %v1452 = vadd.f32 %v1124, %v1352
      %v1453 = vadd.f32 %v1125, %v1355
      %v1454 = vadd.f32 %v1126, %v1360
      %v1455 = vadd.f32 %v1127, %v1363
      %v1456 = vadd.f32 %v1128, %v1368
      %v1457 = vadd.f32 %v1129, %v1371
      %v1458 = vadd.f32 %v1130, %v1376
      %v1459 = vadd.f32 %v1131, %v1379
      %v1460 = vadd.f32 %v1132, %v1384
      %v1461 = vadd.f32 %v1133, %v1387
      %v1462 = vadd.f32 %v1134, %v1392
      %v1463 = vadd.f32 %v1135, %v1395
      %v1464 = vadd.f32 %v1136, %v1400
      %v1465 = vadd.f32 %v1137, %v1403
      %v1466 = vadd.f32 %v1138, %v1408
      %v1467 = vadd.f32 %v1139, %v1411
      %v1468 = vadd.f32 %v1140, %v1416
      %v1469 = vadd.f32 %v1141, %v1419
      %v1470 = vadd.f32 %v1142, %v1424
      %v1471 = vadd.f32 %v1143, %v1427
      %v1472 = vadd.f32 %v1144, %v1432
      %v1473 = vadd.f32 %v1145, %v1435
      %1474 = vst [vmem:[#allocation2] sm:$0xff] %v1438
      %1475 = vst [vmem:[#allocation2 + $0x8] sm:$0xff] %v1439
      %1476 = vst [vmem:[#allocation2 + $0x10] sm:$0xff] %v1440
      %1477 = vst [vmem:[#allocation2 + $0x18] sm:$0xff] %v1441
      %1478 = vst [vmem:[#allocation2 + $0x20] sm:$0xff] %v1442
      %1479 = vst [vmem:[#allocation2 + $0x28] sm:$0xff] %v1443
      %1480 = vst [vmem:[#allocation2 + $0x30] sm:$0xff] %v1444
      %1481 = vst [vmem:[#allocation2 + $0x38] sm:$0xff] %v1445
      %1482 = vst [vmem:[#allocation2 + $0x40] sm:$0xff] %v1446
      %1483 = vst [vmem:[#allocation2 + $0x48] sm:$0xff] %v1447
      %1484 = vst [vmem:[#allocation2 + $0x50] sm:$0xff] %v1448
      %1485 = vst [vmem:[#allocation2 + $0x58] sm:$0xff] %v1449
      %1486 = vst [vmem:[#allocation2 + $0x60] sm:$0xff] %v1450
      %1487 = vst [vmem:[#allocation2 + $0x68] sm:$0xff] %v1451
      %1488 = vst [vmem:[#allocation2 + $0x70] sm:$0xff] %v1452
      %1489 = vst [vmem:[#allocation2 + $0x78] sm:$0xff] %v1453
      %1490 = vst [vmem:[#allocation2 + $0x80] sm:$0xff] %v1454
      %1491 = vst [vmem:[#allocation2 + $0x88] sm:$0xff] %v1455
      %1492 = vst [vmem:[#allocation2 + $0x90] sm:$0xff] %v1456
      %1493 = vst [vmem:[#allocation2 + $0x98] sm:$0xff] %v1457
      %1494 = vst [vmem:[#allocation2 + $0xa0] sm:$0xff] %v1458
      %1495 = vst [vmem:[#allocation2 + $0xa8] sm:$0xff] %v1459
      %1496 = vst [vmem:[#allocation2 + $0xb0] sm:$0xff] %v1460
      %1497 = vst [vmem:[#allocation2 + $0xb8] sm:$0xff] %v1461
      %1498 = vst [vmem:[#allocation2 + $0xc0] sm:$0xff] %v1462
      %1499 = vst [vmem:[#allocation2 + $0xc8] sm:$0xff] %v1463
      %1500 = vst [vmem:[#allocation2 + $0xd0] sm:$0xff] %v1464
      %1501 = vst [vmem:[#allocation2 + $0xd8] sm:$0xff] %v1465
      %1502 = vst [vmem:[#allocation2 + $0xe0] sm:$0xff] %v1466
      %1503 = vst [vmem:[#allocation2 + $0xe8] sm:$0xff] %v1467
      %1504 = vst [vmem:[#allocation2 + $0xf0] sm:$0xff] %v1468
      %1505 = vst [vmem:[#allocation2 + $0xf8] sm:$0xff] %v1469
      %1506 = vst [vmem:[#allocation2 + $0x100] sm:$0xff] %v1470
      %1507 = vst [vmem:[#allocation2 + $0x108] sm:$0xff] %v1471
      %1508 = vst [vmem:[#allocation2 + $0x110] sm:$0xff] %v1472
      %1509 = vst [vmem:[#allocation2 + $0x118] sm:$0xff] %v1473
      %v1510 = vld [vmem:[#allocation2] sm:$0xff]
      %v1511 = vld [vmem:[#allocation2 + $0x8] sm:$0xff]
      %v1512 = vld [vmem:[#allocation2 + $0x10] sm:$0xff]
      %v1513 = vld [vmem:[#allocation2 + $0x18] sm:$0xff]
      %v1514 = vld [vmem:[#allocation2 + $0x20] sm:$0xff]
      %v1515 = vld [vmem:[#allocation2 + $0x28] sm:$0xff]
      %v1516 = vld [vmem:[#allocation2 + $0x30] sm:$0xff]
      %v1517 = vld [vmem:[#allocation2 + $0x38] sm:$0xff]
      %v1518 = vld [vmem:[#allocation2 + $0x40] sm:$0xff]
      %v1519 = vld [vmem:[#allocation2 + $0x48] sm:$0xff]
      %v1520 = vld [vmem:[#allocation2 + $0x50] sm:$0xff]
      %v1521 = vld [vmem:[#allocation2 + $0x58] sm:$0xff]
      %v1522 = vld [vmem:[#allocation2 + $0x60] sm:$0xff]
      %v1523 = vld [vmem:[#allocation2 + $0x68] sm:$0xff]
      %v1524 = vld [vmem:[#allocation2 + $0x70] sm:$0xff]
      %v1525 = vld [vmem:[#allocation2 + $0x78] sm:$0xff]
      %v1526 = vld [vmem:[#allocation2 + $0x80] sm:$0xff]
      %v1527 = vld [vmem:[#allocation2 + $0x88] sm:$0xff]
      %v1528 = vld [vmem:[#allocation2 + $0x90] sm:$0xff]
      %v1529 = vld [vmem:[#allocation2 + $0x98] sm:$0xff]
      %v1530 = vld [vmem:[#allocation2 + $0xa0] sm:$0xff]
      %v1531 = vld [vmem:[#allocation2 + $0xa8] sm:$0xff]
      %v1532 = vld [vmem:[#allocation2 + $0xb0] sm:$0xff]
      %v1533 = vld [vmem:[#allocation2 + $0xb8] sm:$0xff]
      %v1534 = vld [vmem:[#allocation2 + $0xc0] sm:$0xff]
      %v1535 = vld [vmem:[#allocation2 + $0xc8] sm:$0xff]
      %v1536 = vld [vmem:[#allocation2 + $0xd0] sm:$0xff]
      %v1537 = vld [vmem:[#allocation2 + $0xd8] sm:$0xff]
      %v1538 = vld [vmem:[#allocation2 + $0xe0] sm:$0xff]
      %v1539 = vld [vmem:[#allocation2 + $0xe8] sm:$0xff]
      %v1540 = vld [vmem:[#allocation2 + $0xf0] sm:$0xff]
      %v1541 = vld [vmem:[#allocation2 + $0xf8] sm:$0xff]
      %v1542 = vld [vmem:[#allocation2 + $0x100] sm:$0xff]
      %v1543 = vld [vmem:[#allocation2 + $0x108] sm:$0xff]
      %v1544 = vld [vmem:[#allocation2 + $0x110] sm:$0xff]
      %v1545 = vld [vmem:[#allocation2 + $0x118] sm:$0xff]
      %s1546 = sadd.s32 %s244, 18
      %s1547 = scalar_lea.vmem [#allocation3], %s1546
      %v1548 = vld [vmem:[%s1547] sm:$0xff]
      %v1549 = vld [vmem:[%s1547 + $0x8] sm:$0xff]
      %v1550 = vld [vmem:[%s1547 + $0x10] sm:$0xff]
      %v1551 = vld [vmem:[%s1547 + $0x18] sm:$0xff]
      %v1552 = vld [vmem:[%s1547 + $0x20] sm:$0xff]
      %v1553 = vld [vmem:[%s1547 + $0x28] sm:$0xff]
      %v1554 = vld [vmem:[%s1547 + $0x30] sm:$0xff]
      %v1555 = vld [vmem:[%s1547 + $0x38] sm:$0xff]
      %v1556 = vld [vmem:[%s1547 + $0x40] sm:$0xff]
      %v1557 = vld [vmem:[%s1547 + $0x48] sm:$0xff]
      %v1558 = vld [vmem:[%s1547 + $0x50] sm:$0xff]
      %v1559 = vld [vmem:[%s1547 + $0x58] sm:$0xff]
      %v1560 = vld [vmem:[%s1547 + $0x60] sm:$0xff]
      %v1561 = vld [vmem:[%s1547 + $0x68] sm:$0xff]
      %v1562 = vld [vmem:[%s1547 + $0x70] sm:$0xff]
      %v1563 = vld [vmem:[%s1547 + $0x78] sm:$0xff]
      %v1564 = vld [vmem:[%s1547 + $0x80] sm:$0xff]
      %v1565 = vld [vmem:[%s1547 + $0x88] sm:$0xff]
      %v1566 = vld [vmem:[%s1547 + $0x90] sm:$0xff]
      %v1567 = vld [vmem:[%s1547 + $0x98] sm:$0xff]
      %v1568 = vld [vmem:[%s1547 + $0xa0] sm:$0xff]
      %v1569 = vld [vmem:[%s1547 + $0xa8] sm:$0xff]
      %v1570 = vld [vmem:[%s1547 + $0xb0] sm:$0xff]
      %v1571 = vld [vmem:[%s1547 + $0xb8] sm:$0xff]
      %v1572 = vld [vmem:[%s1547 + $0xc0] sm:$0xff]
      %v1573 = vld [vmem:[%s1547 + $0xc8] sm:$0xff]
      %v1574 = vld [vmem:[%s1547 + $0xd0] sm:$0xff]
      %v1575 = vld [vmem:[%s1547 + $0xd8] sm:$0xff]
      %v1576 = vld [vmem:[%s1547 + $0xe0] sm:$0xff]
      %v1577 = vld [vmem:[%s1547 + $0xe8] sm:$0xff]
      %v1578 = vld [vmem:[%s1547 + $0xf0] sm:$0xff]
      %v1579 = vld [vmem:[%s1547 + $0xf8] sm:$0xff]
      %v1580 = vld [vmem:[%s1547 + $0x100] sm:$0xff]
      %v1581 = vld [vmem:[%s1547 + $0x108] sm:$0xff]
      %v1582 = vld [vmem:[%s1547 + $0x110] sm:$0xff]
      %v1583 = vld [vmem:[%s1547 + $0x118] sm:$0xff]
      %v1584 = vpack.c.bf16 %v1549, %v1548
      %v1585 = vpack.c.bf16 %v1551, %v1550
      %v1586 = vpack.c.bf16 %v1553, %v1552
      %v1587 = vpack.c.bf16 %v1555, %v1554
      %v1588 = vpack.c.bf16 %v1557, %v1556
      %v1589 = vpack.c.bf16 %v1559, %v1558
      %v1590 = vpack.c.bf16 %v1561, %v1560
      %v1591 = vpack.c.bf16 %v1563, %v1562
      %v1592 = vpack.c.bf16 %v1565, %v1564
      %v1593 = vpack.c.bf16 %v1567, %v1566
      %v1594 = vpack.c.bf16 %v1569, %v1568
      %v1595 = vpack.c.bf16 %v1571, %v1570
      %v1596 = vpack.c.bf16 %v1573, %v1572
      %v1597 = vpack.c.bf16 %v1575, %v1574
      %v1598 = vpack.c.bf16 %v1577, %v1576
      %v1599 = vpack.c.bf16 %v1579, %v1578
      %v1600 = vpack.c.bf16 %v1581, %v1580
      %v1601 = vpack.c.bf16 %v1583, %v1582
      %s1602 = scalar_lea.vmem %s225, 12
      %v1603 = vld [vmem:[%s1602] sm:$0xf]
      %v1605 = vsel %vm438, %v1584, 0
      %v1608 = vsel %vm438, %v1585, 0
      %v1611 = vsel %vm438, %v1586, 0
      %v1614 = vsel %vm438, %v1587, 0
      %v1617 = vsel %vm438, %v1588, 0
      %v1620 = vsel %vm438, %v1589, 0
      %v1623 = vsel %vm438, %v1590, 0
      %v1626 = vsel %vm438, %v1591, 0
      %v1629 = vsel %vm438, %v1592, 0
      %v1632 = vsel %vm438, %v1593, 0
      %v1635 = vsel %vm438, %v1594, 0
      %v1638 = vsel %vm438, %v1595, 0
      %v1641 = vsel %vm438, %v1596, 0
      %v1644 = vsel %vm438, %v1597, 0
      %v1647 = vsel %vm438, %v1598, 0
      %v1650 = vsel %vm438, %v1599, 0
      %v1653 = vsel %vm438, %v1600, 0
      %v1656 = vsel %vm438, %v1601, 0
      %v1659 = vsel %vm493, %v1603, 0
      %1661 = vmatprep.subr.bf16.mxu0 0
      %1662 = vmatpush1.bf16.msra.mxu0 0
      %1663 = vmatprep.subr.bf16.mxu0 0
      %1664 = vmatpush1.bf16.msra.mxu0 0
      %1665 = vmatprep.subr.bf16.mxu0 0
      %1666 = vmatpush1.bf16.msra.mxu0 0
      %1667 = vmatprep.subr.bf16.mxu0 0
      %1668 = vmatpush1.bf16.msra.mxu0 0
      %1669 = vmatprep.subr.bf16.mxu0 0
      %1670 = vmatpush1.bf16.msra.mxu0 0
      %1671 = vmatprep.subr.bf16.mxu0 0
      %1672 = vmatpush1.bf16.msra.mxu0 0
      %1673 = vmatprep.subr.bf16.mxu0 0
      %1674 = vmatpush1.bf16.msra.mxu0 0
      %1675 = vmatprep.subr.bf16.mxu0 0
      %1676 = vmatpush1.bf16.msra.mxu0 %v1659
      %1677 = vmatprep.subr.bf16.mxu0 0
      %1678 = vmatpush2.bf16.msra.mxu0 0
      %1679 = vmatprep.subr.bf16.mxu0 0
      %1680 = vmatpush2.bf16.msra.mxu0 0
      %1681 = vmatprep.subr.bf16.mxu0 0
      %1682 = vmatpush2.bf16.msra.mxu0 0
      %1683 = vmatprep.subr.bf16.mxu0 0
      %1684 = vmatpush2.bf16.msra.mxu0 0
      %1685 = vmatprep.subr.bf16.mxu0 0
      %1686 = vmatpush2.bf16.msra.mxu0 0
      %1687 = vmatprep.subr.bf16.mxu0 0
      %1688 = vmatpush2.bf16.msra.mxu0 0
      %1689 = vmatprep.subr.bf16.mxu0 0
      %1690 = vmatpush2.bf16.msra.mxu0 0
      %1691 = vmatprep.subr.bf16.mxu0 0
      %1692 = vmatpush2.bf16.msra.mxu0 0
      %1693 = vmatprep.mubr.bf16.mxu0 0
      %1694 = vmatmul.mubr.bf16.gmra.mxu0 %v1605
      %v1695 = vpop.f32.mrf.mxu0
      %v1696 = vadd.f32 0.0, %v1695
      %v1697 = vpop.f32.mrf.mxu0
      %v1698 = vpop.f32.mrf.mxu0
      %v1699 = vadd.f32 0.0, %v1698
      %v1700 = vpop.f32.mrf.mxu0
      %1701 = vmatprep.mubr.bf16.mxu0 0
      %1702 = vmatmul.mubr.bf16.gmra.mxu0 %v1608
      %v1703 = vpop.f32.mrf.mxu0
      %v1704 = vadd.f32 0.0, %v1703
      %v1705 = vpop.f32.mrf.mxu0
      %v1706 = vpop.f32.mrf.mxu0
      %v1707 = vadd.f32 0.0, %v1706
      %v1708 = vpop.f32.mrf.mxu0
      %1709 = vmatprep.mubr.bf16.mxu0 0
      %1710 = vmatmul.mubr.bf16.gmra.mxu0 %v1611
      %v1711 = vpop.f32.mrf.mxu0
      %v1712 = vadd.f32 0.0, %v1711
      %v1713 = vpop.f32.mrf.mxu0
      %v1714 = vpop.f32.mrf.mxu0
      %v1715 = vadd.f32 0.0, %v1714
      %v1716 = vpop.f32.mrf.mxu0
      %1717 = vmatprep.mubr.bf16.mxu0 0
      %1718 = vmatmul.mubr.bf16.gmra.mxu0 %v1614
      %v1719 = vpop.f32.mrf.mxu0
      %v1720 = vadd.f32 0.0, %v1719
      %v1721 = vpop.f32.mrf.mxu0
      %v1722 = vpop.f32.mrf.mxu0
      %v1723 = vadd.f32 0.0, %v1722
      %v1724 = vpop.f32.mrf.mxu0
      %1725 = vmatprep.mubr.bf16.mxu0 0
      %1726 = vmatmul.mubr.bf16.gmra.mxu0 %v1617
      %v1727 = vpop.f32.mrf.mxu0
      %v1728 = vadd.f32 0.0, %v1727
      %v1729 = vpop.f32.mrf.mxu0
      %v1730 = vpop.f32.mrf.mxu0
      %v1731 = vadd.f32 0.0, %v1730
      %v1732 = vpop.f32.mrf.mxu0
      %1733 = vmatprep.mubr.bf16.mxu0 0
      %1734 = vmatmul.mubr.bf16.gmra.mxu0 %v1620
      %v1735 = vpop.f32.mrf.mxu0
      %v1736 = vadd.f32 0.0, %v1735
      %v1737 = vpop.f32.mrf.mxu0
      %v1738 = vpop.f32.mrf.mxu0
      %v1739 = vadd.f32 0.0, %v1738
      %v1740 = vpop.f32.mrf.mxu0
      %1741 = vmatprep.mubr.bf16.mxu0 0
      %1742 = vmatmul.mubr.bf16.gmra.mxu0 %v1623
      %v1743 = vpop.f32.mrf.mxu0
      %v1744 = vadd.f32 0.0, %v1743
      %v1745 = vpop.f32.mrf.mxu0
      %v1746 = vpop.f32.mrf.mxu0
      %v1747 = vadd.f32 0.0, %v1746
      %v1748 = vpop.f32.mrf.mxu0
      %1749 = vmatprep.mubr.bf16.mxu0 0
      %1750 = vmatmul.mubr.bf16.gmra.mxu0 %v1626
      %v1751 = vpop.f32.mrf.mxu0
      %v1752 = vadd.f32 0.0, %v1751
      %v1753 = vpop.f32.mrf.mxu0
      %v1754 = vpop.f32.mrf.mxu0
      %v1755 = vadd.f32 0.0, %v1754
      %v1756 = vpop.f32.mrf.mxu0
      %1757 = vmatprep.mubr.bf16.mxu0 0
      %1758 = vmatmul.mubr.bf16.gmra.mxu0 %v1629
      %v1759 = vpop.f32.mrf.mxu0
      %v1760 = vadd.f32 0.0, %v1759
      %v1761 = vpop.f32.mrf.mxu0
      %v1762 = vpop.f32.mrf.mxu0
      %v1763 = vadd.f32 0.0, %v1762
      %v1764 = vpop.f32.mrf.mxu0
      %1765 = vmatprep.mubr.bf16.mxu0 0
      %1766 = vmatmul.mubr.bf16.gmra.mxu0 %v1632
      %v1767 = vpop.f32.mrf.mxu0
      %v1768 = vadd.f32 0.0, %v1767
      %v1769 = vpop.f32.mrf.mxu0
      %v1770 = vpop.f32.mrf.mxu0
      %v1771 = vadd.f32 0.0, %v1770
      %v1772 = vpop.f32.mrf.mxu0
      %1773 = vmatprep.mubr.bf16.mxu0 0
      %1774 = vmatmul.mubr.bf16.gmra.mxu0 %v1635
      %v1775 = vpop.f32.mrf.mxu0
      %v1776 = vadd.f32 0.0, %v1775
      %v1777 = vpop.f32.mrf.mxu0
      %v1778 = vpop.f32.mrf.mxu0
      %v1779 = vadd.f32 0.0, %v1778
      %v1780 = vpop.f32.mrf.mxu0
      %1781 = vmatprep.mubr.bf16.mxu0 0
      %1782 = vmatmul.mubr.bf16.gmra.mxu0 %v1638
      %v1783 = vpop.f32.mrf.mxu0
      %v1784 = vadd.f32 0.0, %v1783
      %v1785 = vpop.f32.mrf.mxu0
      %v1786 = vpop.f32.mrf.mxu0
      %v1787 = vadd.f32 0.0, %v1786
      %v1788 = vpop.f32.mrf.mxu0
      %1789 = vmatprep.mubr.bf16.mxu0 0
      %1790 = vmatmul.mubr.bf16.gmra.mxu0 %v1641
      %v1791 = vpop.f32.mrf.mxu0
      %v1792 = vadd.f32 0.0, %v1791
      %v1793 = vpop.f32.mrf.mxu0
      %v1794 = vpop.f32.mrf.mxu0
      %v1795 = vadd.f32 0.0, %v1794
      %v1796 = vpop.f32.mrf.mxu0
      %1797 = vmatprep.mubr.bf16.mxu0 0
      %1798 = vmatmul.mubr.bf16.gmra.mxu0 %v1644
      %v1799 = vpop.f32.mrf.mxu0
      %v1800 = vadd.f32 0.0, %v1799
      %v1801 = vpop.f32.mrf.mxu0
      %v1802 = vpop.f32.mrf.mxu0
      %v1803 = vadd.f32 0.0, %v1802
      %v1804 = vpop.f32.mrf.mxu0
      %1805 = vmatprep.mubr.bf16.mxu0 0
      %1806 = vmatmul.mubr.bf16.gmra.mxu0 %v1647
      %v1807 = vpop.f32.mrf.mxu0
      %v1808 = vadd.f32 0.0, %v1807
      %v1809 = vpop.f32.mrf.mxu0
      %v1810 = vpop.f32.mrf.mxu0
      %v1811 = vadd.f32 0.0, %v1810
      %v1812 = vpop.f32.mrf.mxu0
      %1813 = vmatprep.mubr.bf16.mxu0 0
      %1814 = vmatmul.mubr.bf16.gmra.mxu0 %v1650
      %v1815 = vpop.f32.mrf.mxu0
      %v1816 = vadd.f32 0.0, %v1815
      %v1817 = vpop.f32.mrf.mxu0
      %v1818 = vpop.f32.mrf.mxu0
      %v1819 = vadd.f32 0.0, %v1818
      %v1820 = vpop.f32.mrf.mxu0
      %1821 = vmatprep.mubr.bf16.mxu0 0
      %1822 = vmatmul.mubr.bf16.gmra.mxu0 %v1653
      %v1823 = vpop.f32.mrf.mxu0
      %v1824 = vadd.f32 0.0, %v1823
      %v1825 = vpop.f32.mrf.mxu0
      %v1826 = vpop.f32.mrf.mxu0
      %v1827 = vadd.f32 0.0, %v1826
      %v1828 = vpop.f32.mrf.mxu0
      %1829 = vmatprep.mubr.bf16.mxu0 0
      %1830 = vmatmul.mubr.bf16.gmra.mxu0 %v1656
      %v1831 = vpop.f32.mrf.mxu0
      %v1832 = vadd.f32 0.0, %v1831
      %v1833 = vpop.f32.mrf.mxu0
      %v1834 = vpop.f32.mrf.mxu0
      %v1835 = vadd.f32 0.0, %v1834
      %v1836 = vpop.f32.mrf.mxu0
      %1837 = vdwg.mxu0
      %v1838 = vadd.f32 %v1510, %v1696
      %v1839 = vadd.f32 %v1511, %v1699
      %v1840 = vadd.f32 %v1512, %v1704
      %v1841 = vadd.f32 %v1513, %v1707
      %v1842 = vadd.f32 %v1514, %v1712
      %v1843 = vadd.f32 %v1515, %v1715
      %v1844 = vadd.f32 %v1516, %v1720
      %v1845 = vadd.f32 %v1517, %v1723
      %v1846 = vadd.f32 %v1518, %v1728
      %v1847 = vadd.f32 %v1519, %v1731
      %v1848 = vadd.f32 %v1520, %v1736
      %v1849 = vadd.f32 %v1521, %v1739
      %v1850 = vadd.f32 %v1522, %v1744
      %v1851 = vadd.f32 %v1523, %v1747
      %v1852 = vadd.f32 %v1524, %v1752
      %v1853 = vadd.f32 %v1525, %v1755
      %v1854 = vadd.f32 %v1526, %v1760
      %v1855 = vadd.f32 %v1527, %v1763
      %v1856 = vadd.f32 %v1528, %v1768
      %v1857 = vadd.f32 %v1529, %v1771
      %v1858 = vadd.f32 %v1530, %v1776
      %v1859 = vadd.f32 %v1531, %v1779
      %v1860 = vadd.f32 %v1532, %v1784
      %v1861 = vadd.f32 %v1533, %v1787
      %v1862 = vadd.f32 %v1534, %v1792
      %v1863 = vadd.f32 %v1535, %v1795
      %v1864 = vadd.f32 %v1536, %v1800
      %v1865 = vadd.f32 %v1537, %v1803
      %v1866 = vadd.f32 %v1538, %v1808
      %v1867 = vadd.f32 %v1539, %v1811
      %v1868 = vadd.f32 %v1540, %v1816
      %v1869 = vadd.f32 %v1541, %v1819
      %v1870 = vadd.f32 %v1542, %v1824
      %v1871 = vadd.f32 %v1543, %v1827
      %v1872 = vadd.f32 %v1544, %v1832
      %v1873 = vadd.f32 %v1545, %v1835
      %1874 = vst [vmem:[#allocation2] sm:$0xff] %v1838
      %1875 = vst [vmem:[#allocation2 + $0x8] sm:$0xff] %v1839
      %1876 = vst [vmem:[#allocation2 + $0x10] sm:$0xff] %v1840
      %1877 = vst [vmem:[#allocation2 + $0x18] sm:$0xff] %v1841
      %1878 = vst [vmem:[#allocation2 + $0x20] sm:$0xff] %v1842
      %1879 = vst [vmem:[#allocation2 + $0x28] sm:$0xff] %v1843
      %1880 = vst [vmem:[#allocation2 + $0x30] sm:$0xff] %v1844
      %1881 = vst [vmem:[#allocation2 + $0x38] sm:$0xff] %v1845
      %1882 = vst [vmem:[#allocation2 + $0x40] sm:$0xff] %v1846
      %1883 = vst [vmem:[#allocation2 + $0x48] sm:$0xff] %v1847
      %1884 = vst [vmem:[#allocation2 + $0x50] sm:$0xff] %v1848
      %1885 = vst [vmem:[#allocation2 + $0x58] sm:$0xff] %v1849
      %1886 = vst [vmem:[#allocation2 + $0x60] sm:$0xff] %v1850
      %1887 = vst [vmem:[#allocation2 + $0x68] sm:$0xff] %v1851
      %1888 = vst [vmem:[#allocation2 + $0x70] sm:$0xff] %v1852
      %1889 = vst [vmem:[#allocation2 + $0x78] sm:$0xff] %v1853
      %1890 = vst [vmem:[#allocation2 + $0x80] sm:$0xff] %v1854
      %1891 = vst [vmem:[#allocation2 + $0x88] sm:$0xff] %v1855
      %1892 = vst [vmem:[#allocation2 + $0x90] sm:$0xff] %v1856
      %1893 = vst [vmem:[#allocation2 + $0x98] sm:$0xff] %v1857
      %1894 = vst [vmem:[#allocation2 + $0xa0] sm:$0xff] %v1858
      %1895 = vst [vmem:[#allocation2 + $0xa8] sm:$0xff] %v1859
      %1896 = vst [vmem:[#allocation2 + $0xb0] sm:$0xff] %v1860
      %1897 = vst [vmem:[#allocation2 + $0xb8] sm:$0xff] %v1861
      %1898 = vst [vmem:[#allocation2 + $0xc0] sm:$0xff] %v1862
      %1899 = vst [vmem:[#allocation2 + $0xc8] sm:$0xff] %v1863
      %1900 = vst [vmem:[#allocation2 + $0xd0] sm:$0xff] %v1864
      %1901 = vst [vmem:[#allocation2 + $0xd8] sm:$0xff] %v1865
      %1902 = vst [vmem:[#allocation2 + $0xe0] sm:$0xff] %v1866
      %1903 = vst [vmem:[#allocation2 + $0xe8] sm:$0xff] %v1867
      %1904 = vst [vmem:[#allocation2 + $0xf0] sm:$0xff] %v1868
      %1905 = vst [vmem:[#allocation2 + $0xf8] sm:$0xff] %v1869
      %1906 = vst [vmem:[#allocation2 + $0x100] sm:$0xff] %v1870
      %1907 = vst [vmem:[#allocation2 + $0x108] sm:$0xff] %v1871
      %1908 = vst [vmem:[#allocation2 + $0x110] sm:$0xff] %v1872
      %1909 = vst [vmem:[#allocation2 + $0x118] sm:$0xff] %v1873
      %v1910 = vld [vmem:[#allocation2] sm:$0xff]
      %v1911 = vld [vmem:[#allocation2 + $0x8] sm:$0xff]
      %v1912 = vld [vmem:[#allocation2 + $0x10] sm:$0xff]
      %v1913 = vld [vmem:[#allocation2 + $0x18] sm:$0xff]
      %v1914 = vld [vmem:[#allocation2 + $0x20] sm:$0xff]
      %v1915 = vld [vmem:[#allocation2 + $0x28] sm:$0xff]
      %v1916 = vld [vmem:[#allocation2 + $0x30] sm:$0xff]
      %v1917 = vld [vmem:[#allocation2 + $0x38] sm:$0xff]
      %v1918 = vld [vmem:[#allocation2 + $0x40] sm:$0xff]
      %v1919 = vld [vmem:[#allocation2 + $0x48] sm:$0xff]
      %v1920 = vld [vmem:[#allocation2 + $0x50] sm:$0xff]
      %v1921 = vld [vmem:[#allocation2 + $0x58] sm:$0xff]
      %v1922 = vld [vmem:[#allocation2 + $0x60] sm:$0xff]
      %v1923 = vld [vmem:[#allocation2 + $0x68] sm:$0xff]
      %v1924 = vld [vmem:[#allocation2 + $0x70] sm:$0xff]
      %v1925 = vld [vmem:[#allocation2 + $0x78] sm:$0xff]
      %v1926 = vld [vmem:[#allocation2 + $0x80] sm:$0xff]
      %v1927 = vld [vmem:[#allocation2 + $0x88] sm:$0xff]
      %v1928 = vld [vmem:[#allocation2 + $0x90] sm:$0xff]
      %v1929 = vld [vmem:[#allocation2 + $0x98] sm:$0xff]
      %v1930 = vld [vmem:[#allocation2 + $0xa0] sm:$0xff]
      %v1931 = vld [vmem:[#allocation2 + $0xa8] sm:$0xff]
      %v1932 = vld [vmem:[#allocation2 + $0xb0] sm:$0xff]
      %v1933 = vld [vmem:[#allocation2 + $0xb8] sm:$0xff]
      %v1934 = vld [vmem:[#allocation2 + $0xc0] sm:$0xff]
      %v1935 = vld [vmem:[#allocation2 + $0xc8] sm:$0xff]
      %v1936 = vld [vmem:[#allocation2 + $0xd0] sm:$0xff]
      %v1937 = vld [vmem:[#allocation2 + $0xd8] sm:$0xff]
      %v1938 = vld [vmem:[#allocation2 + $0xe0] sm:$0xff]
      %v1939 = vld [vmem:[#allocation2 + $0xe8] sm:$0xff]
      %v1940 = vld [vmem:[#allocation2 + $0xf0] sm:$0xff]
      %v1941 = vld [vmem:[#allocation2 + $0xf8] sm:$0xff]
      %v1942 = vld [vmem:[#allocation2 + $0x100] sm:$0xff]
      %v1943 = vld [vmem:[#allocation2 + $0x108] sm:$0xff]
      %v1944 = vld [vmem:[#allocation2 + $0x110] sm:$0xff]
      %v1945 = vld [vmem:[#allocation2 + $0x118] sm:$0xff]
      %s1946 = sadd.s32 %s244, 19
      %s1947 = scalar_lea.vmem [#allocation3], %s1946
      %v1948 = vld [vmem:[%s1947] sm:$0xff]
      %v1949 = vld [vmem:[%s1947 + $0x8] sm:$0xff]
      %v1950 = vld [vmem:[%s1947 + $0x10] sm:$0xff]
      %v1951 = vld [vmem:[%s1947 + $0x18] sm:$0xff]
      %v1952 = vld [vmem:[%s1947 + $0x20] sm:$0xff]
      %v1953 = vld [vmem:[%s1947 + $0x28] sm:$0xff]
      %v1954 = vld [vmem:[%s1947 + $0x30] sm:$0xff]
      %v1955 = vld [vmem:[%s1947 + $0x38] sm:$0xff]
      %v1956 = vld [vmem:[%s1947 + $0x40] sm:$0xff]
      %v1957 = vld [vmem:[%s1947 + $0x48] sm:$0xff]
      %v1958 = vld [vmem:[%s1947 + $0x50] sm:$0xff]
      %v1959 = vld [vmem:[%s1947 + $0x58] sm:$0xff]
      %v1960 = vld [vmem:[%s1947 + $0x60] sm:$0xff]
      %v1961 = vld [vmem:[%s1947 + $0x68] sm:$0xff]
      %v1962 = vld [vmem:[%s1947 + $0x70] sm:$0xff]
      %v1963 = vld [vmem:[%s1947 + $0x78] sm:$0xff]
      %v1964 = vld [vmem:[%s1947 + $0x80] sm:$0xff]
      %v1965 = vld [vmem:[%s1947 + $0x88] sm:$0xff]
      %v1966 = vld [vmem:[%s1947 + $0x90] sm:$0xff]
      %v1967 = vld [vmem:[%s1947 + $0x98] sm:$0xff]
      %v1968 = vld [vmem:[%s1947 + $0xa0] sm:$0xff]
      %v1969 = vld [vmem:[%s1947 + $0xa8] sm:$0xff]
      %v1970 = vld [vmem:[%s1947 + $0xb0] sm:$0xff]
      %v1971 = vld [vmem:[%s1947 + $0xb8] sm:$0xff]
      %v1972 = vld [vmem:[%s1947 + $0xc0] sm:$0xff]
      %v1973 = vld [vmem:[%s1947 + $0xc8] sm:$0xff]
      %v1974 = vld [vmem:[%s1947 + $0xd0] sm:$0xff]
      %v1975 = vld [vmem:[%s1947 + $0xd8] sm:$0xff]
      %v1976 = vld [vmem:[%s1947 + $0xe0] sm:$0xff]
      %v1977 = vld [vmem:[%s1947 + $0xe8] sm:$0xff]
      %v1978 = vld [vmem:[%s1947 + $0xf0] sm:$0xff]
      %v1979 = vld [vmem:[%s1947 + $0xf8] sm:$0xff]
      %v1980 = vld [vmem:[%s1947 + $0x100] sm:$0xff]
      %v1981 = vld [vmem:[%s1947 + $0x108] sm:$0xff]
      %v1982 = vld [vmem:[%s1947 + $0x110] sm:$0xff]
      %v1983 = vld [vmem:[%s1947 + $0x118] sm:$0xff]
      %v1984 = vpack.c.bf16 %v1949, %v1948
      %v1985 = vpack.c.bf16 %v1951, %v1950
      %v1986 = vpack.c.bf16 %v1953, %v1952
      %v1987 = vpack.c.bf16 %v1955, %v1954
      %v1988 = vpack.c.bf16 %v1957, %v1956
      %v1989 = vpack.c.bf16 %v1959, %v1958
      %v1990 = vpack.c.bf16 %v1961, %v1960
      %v1991 = vpack.c.bf16 %v1963, %v1962
      %v1992 = vpack.c.bf16 %v1965, %v1964
      %v1993 = vpack.c.bf16 %v1967, %v1966
      %v1994 = vpack.c.bf16 %v1969, %v1968
      %v1995 = vpack.c.bf16 %v1971, %v1970
      %v1996 = vpack.c.bf16 %v1973, %v1972
      %v1997 = vpack.c.bf16 %v1975, %v1974
      %v1998 = vpack.c.bf16 %v1977, %v1976
      %v1999 = vpack.c.bf16 %v1979, %v1978
      %v2000 = vpack.c.bf16 %v1981, %v1980
      %v2001 = vpack.c.bf16 %v1983, %v1982
      %s2002 = scalar_lea.vmem %s225, 16
      %v2003 = vld [vmem:[%s2002] sm:$0xf]
      %v2005 = vsel %vm438, %v1984, 0
      %v2008 = vsel %vm438, %v1985, 0
      %v2011 = vsel %vm438, %v1986, 0
      %v2014 = vsel %vm438, %v1987, 0
      %v2017 = vsel %vm438, %v1988, 0
      %v2020 = vsel %vm438, %v1989, 0
      %v2023 = vsel %vm438, %v1990, 0
      %v2026 = vsel %vm438, %v1991, 0
      %v2029 = vsel %vm438, %v1992, 0
      %v2032 = vsel %vm438, %v1993, 0
      %v2035 = vsel %vm438, %v1994, 0
      %v2038 = vsel %vm438, %v1995, 0
      %v2041 = vsel %vm438, %v1996, 0
      %v2044 = vsel %vm438, %v1997, 0
      %v2047 = vsel %vm438, %v1998, 0
      %v2050 = vsel %vm438, %v1999, 0
      %v2053 = vsel %vm438, %v2000, 0
      %v2056 = vsel %vm438, %v2001, 0
      %v2059 = vsel %vm493, %v2003, 0
      %2061 = vmatprep.subr.bf16.mxu0 0
      %2062 = vmatpush1.bf16.msra.mxu0 0
      %2063 = vmatprep.subr.bf16.mxu0 0
      %2064 = vmatpush1.bf16.msra.mxu0 0
      %2065 = vmatprep.subr.bf16.mxu0 0
      %2066 = vmatpush1.bf16.msra.mxu0 0
      %2067 = vmatprep.subr.bf16.mxu0 0
      %2068 = vmatpush1.bf16.msra.mxu0 0
      %2069 = vmatprep.subr.bf16.mxu0 0
      %2070 = vmatpush1.bf16.msra.mxu0 0
      %2071 = vmatprep.subr.bf16.mxu0 0
      %2072 = vmatpush1.bf16.msra.mxu0 0
      %2073 = vmatprep.subr.bf16.mxu0 0
      %2074 = vmatpush1.bf16.msra.mxu0 0
      %2075 = vmatprep.subr.bf16.mxu0 0
      %2076 = vmatpush1.bf16.msra.mxu0 %v2059
      %2077 = vmatprep.subr.bf16.mxu0 0
      %2078 = vmatpush2.bf16.msra.mxu0 0
      %2079 = vmatprep.subr.bf16.mxu0 0
      %2080 = vmatpush2.bf16.msra.mxu0 0
      %2081 = vmatprep.subr.bf16.mxu0 0
      %2082 = vmatpush2.bf16.msra.mxu0 0
      %2083 = vmatprep.subr.bf16.mxu0 0
      %2084 = vmatpush2.bf16.msra.mxu0 0
      %2085 = vmatprep.subr.bf16.mxu0 0
      %2086 = vmatpush2.bf16.msra.mxu0 0
      %2087 = vmatprep.subr.bf16.mxu0 0
      %2088 = vmatpush2.bf16.msra.mxu0 0
      %2089 = vmatprep.subr.bf16.mxu0 0
      %2090 = vmatpush2.bf16.msra.mxu0 0
      %2091 = vmatprep.subr.bf16.mxu0 0
      %2092 = vmatpush2.bf16.msra.mxu0 0
      %2093 = vmatprep.mubr.bf16.mxu0 0
      %2094 = vmatmul.mubr.bf16.gmra.mxu0 %v2005
      %v2095 = vpop.f32.mrf.mxu0
      %v2096 = vadd.f32 0.0, %v2095
      %v2097 = vpop.f32.mrf.mxu0
      %v2098 = vpop.f32.mrf.mxu0
      %v2099 = vadd.f32 0.0, %v2098
      %v2100 = vpop.f32.mrf.mxu0
      %2101 = vmatprep.mubr.bf16.mxu0 0
      %2102 = vmatmul.mubr.bf16.gmra.mxu0 %v2008
      %v2103 = vpop.f32.mrf.mxu0
      %v2104 = vadd.f32 0.0, %v2103
      %v2105 = vpop.f32.mrf.mxu0
      %v2106 = vpop.f32.mrf.mxu0
      %v2107 = vadd.f32 0.0, %v2106
      %v2108 = vpop.f32.mrf.mxu0
      %2109 = vmatprep.mubr.bf16.mxu0 0
      %2110 = vmatmul.mubr.bf16.gmra.mxu0 %v2011
      %v2111 = vpop.f32.mrf.mxu0
      %v2112 = vadd.f32 0.0, %v2111
      %v2113 = vpop.f32.mrf.mxu0
      %v2114 = vpop.f32.mrf.mxu0
      %v2115 = vadd.f32 0.0, %v2114
      %v2116 = vpop.f32.mrf.mxu0
      %2117 = vmatprep.mubr.bf16.mxu0 0
      %2118 = vmatmul.mubr.bf16.gmra.mxu0 %v2014
      %v2119 = vpop.f32.mrf.mxu0
      %v2120 = vadd.f32 0.0, %v2119
      %v2121 = vpop.f32.mrf.mxu0
      %v2122 = vpop.f32.mrf.mxu0
      %v2123 = vadd.f32 0.0, %v2122
      %v2124 = vpop.f32.mrf.mxu0
      %2125 = vmatprep.mubr.bf16.mxu0 0
      %2126 = vmatmul.mubr.bf16.gmra.mxu0 %v2017
      %v2127 = vpop.f32.mrf.mxu0
      %v2128 = vadd.f32 0.0, %v2127
      %v2129 = vpop.f32.mrf.mxu0
      %v2130 = vpop.f32.mrf.mxu0
      %v2131 = vadd.f32 0.0, %v2130
      %v2132 = vpop.f32.mrf.mxu0
      %2133 = vmatprep.mubr.bf16.mxu0 0
      %2134 = vmatmul.mubr.bf16.gmra.mxu0 %v2020
      %v2135 = vpop.f32.mrf.mxu0
      %v2136 = vadd.f32 0.0, %v2135
      %v2137 = vpop.f32.mrf.mxu0
      %v2138 = vpop.f32.mrf.mxu0
      %v2139 = vadd.f32 0.0, %v2138
      %v2140 = vpop.f32.mrf.mxu0
      %2141 = vmatprep.mubr.bf16.mxu0 0
      %2142 = vmatmul.mubr.bf16.gmra.mxu0 %v2023
      %v2143 = vpop.f32.mrf.mxu0
      %v2144 = vadd.f32 0.0, %v2143
      %v2145 = vpop.f32.mrf.mxu0
      %v2146 = vpop.f32.mrf.mxu0
      %v2147 = vadd.f32 0.0, %v2146
      %v2148 = vpop.f32.mrf.mxu0
      %2149 = vmatprep.mubr.bf16.mxu0 0
      %2150 = vmatmul.mubr.bf16.gmra.mxu0 %v2026
      %v2151 = vpop.f32.mrf.mxu0
      %v2152 = vadd.f32 0.0, %v2151
      %v2153 = vpop.f32.mrf.mxu0
      %v2154 = vpop.f32.mrf.mxu0
      %v2155 = vadd.f32 0.0, %v2154
      %v2156 = vpop.f32.mrf.mxu0
      %2157 = vmatprep.mubr.bf16.mxu0 0
      %2158 = vmatmul.mubr.bf16.gmra.mxu0 %v2029
      %v2159 = vpop.f32.mrf.mxu0
      %v2160 = vadd.f32 0.0, %v2159
      %v2161 = vpop.f32.mrf.mxu0
      %v2162 = vpop.f32.mrf.mxu0
      %v2163 = vadd.f32 0.0, %v2162
      %v2164 = vpop.f32.mrf.mxu0
      %2165 = vmatprep.mubr.bf16.mxu0 0
      %2166 = vmatmul.mubr.bf16.gmra.mxu0 %v2032
      %v2167 = vpop.f32.mrf.mxu0
      %v2168 = vadd.f32 0.0, %v2167
      %v2169 = vpop.f32.mrf.mxu0
      %v2170 = vpop.f32.mrf.mxu0
      %v2171 = vadd.f32 0.0, %v2170
      %v2172 = vpop.f32.mrf.mxu0
      %2173 = vmatprep.mubr.bf16.mxu0 0
      %2174 = vmatmul.mubr.bf16.gmra.mxu0 %v2035
      %v2175 = vpop.f32.mrf.mxu0
      %v2176 = vadd.f32 0.0, %v2175
      %v2177 = vpop.f32.mrf.mxu0
      %v2178 = vpop.f32.mrf.mxu0
      %v2179 = vadd.f32 0.0, %v2178
      %v2180 = vpop.f32.mrf.mxu0
      %2181 = vmatprep.mubr.bf16.mxu0 0
      %2182 = vmatmul.mubr.bf16.gmra.mxu0 %v2038
      %v2183 = vpop.f32.mrf.mxu0
      %v2184 = vadd.f32 0.0, %v2183
      %v2185 = vpop.f32.mrf.mxu0
      %v2186 = vpop.f32.mrf.mxu0
      %v2187 = vadd.f32 0.0, %v2186
      %v2188 = vpop.f32.mrf.mxu0
      %2189 = vmatprep.mubr.bf16.mxu0 0
      %2190 = vmatmul.mubr.bf16.gmra.mxu0 %v2041
      %v2191 = vpop.f32.mrf.mxu0
      %v2192 = vadd.f32 0.0, %v2191
      %v2193 = vpop.f32.mrf.mxu0
      %v2194 = vpop.f32.mrf.mxu0
      %v2195 = vadd.f32 0.0, %v2194
      %v2196 = vpop.f32.mrf.mxu0
      %2197 = vmatprep.mubr.bf16.mxu0 0
      %2198 = vmatmul.mubr.bf16.gmra.mxu0 %v2044
      %v2199 = vpop.f32.mrf.mxu0
      %v2200 = vadd.f32 0.0, %v2199
      %v2201 = vpop.f32.mrf.mxu0
      %v2202 = vpop.f32.mrf.mxu0
      %v2203 = vadd.f32 0.0, %v2202
      %v2204 = vpop.f32.mrf.mxu0
      %2205 = vmatprep.mubr.bf16.mxu0 0
      %2206 = vmatmul.mubr.bf16.gmra.mxu0 %v2047
      %v2207 = vpop.f32.mrf.mxu0
      %v2208 = vadd.f32 0.0, %v2207
      %v2209 = vpop.f32.mrf.mxu0
      %v2210 = vpop.f32.mrf.mxu0
      %v2211 = vadd.f32 0.0, %v2210
      %v2212 = vpop.f32.mrf.mxu0
      %2213 = vmatprep.mubr.bf16.mxu0 0
      %2214 = vmatmul.mubr.bf16.gmra.mxu0 %v2050
      %v2215 = vpop.f32.mrf.mxu0
      %v2216 = vadd.f32 0.0, %v2215
      %v2217 = vpop.f32.mrf.mxu0
      %v2218 = vpop.f32.mrf.mxu0
      %v2219 = vadd.f32 0.0, %v2218
      %v2220 = vpop.f32.mrf.mxu0
      %2221 = vmatprep.mubr.bf16.mxu0 0
      %2222 = vmatmul.mubr.bf16.gmra.mxu0 %v2053
      %v2223 = vpop.f32.mrf.mxu0
      %v2224 = vadd.f32 0.0, %v2223
      %v2225 = vpop.f32.mrf.mxu0
      %v2226 = vpop.f32.mrf.mxu0
      %v2227 = vadd.f32 0.0, %v2226
      %v2228 = vpop.f32.mrf.mxu0
      %2229 = vmatprep.mubr.bf16.mxu0 0
      %2230 = vmatmul.mubr.bf16.gmra.mxu0 %v2056
      %v2231 = vpop.f32.mrf.mxu0
      %v2232 = vadd.f32 0.0, %v2231
      %v2233 = vpop.f32.mrf.mxu0
      %v2234 = vpop.f32.mrf.mxu0
      %v2235 = vadd.f32 0.0, %v2234
      %v2236 = vpop.f32.mrf.mxu0
      %2237 = vdwg.mxu0
      %v2238 = vadd.f32 %v1910, %v2096
      %v2239 = vadd.f32 %v1911, %v2099
      %v2240 = vadd.f32 %v1912, %v2104
      %v2241 = vadd.f32 %v1913, %v2107
      %v2242 = vadd.f32 %v1914, %v2112
      %v2243 = vadd.f32 %v1915, %v2115
      %v2244 = vadd.f32 %v1916, %v2120
      %v2245 = vadd.f32 %v1917, %v2123
      %v2246 = vadd.f32 %v1918, %v2128
      %v2247 = vadd.f32 %v1919, %v2131
      %v2248 = vadd.f32 %v1920, %v2136
      %v2249 = vadd.f32 %v1921, %v2139
      %v2250 = vadd.f32 %v1922, %v2144
      %v2251 = vadd.f32 %v1923, %v2147
      %v2252 = vadd.f32 %v1924, %v2152
      %v2253 = vadd.f32 %v1925, %v2155
      %v2254 = vadd.f32 %v1926, %v2160
      %v2255 = vadd.f32 %v1927, %v2163
      %v2256 = vadd.f32 %v1928, %v2168
      %v2257 = vadd.f32 %v1929, %v2171
      %v2258 = vadd.f32 %v1930, %v2176
      %v2259 = vadd.f32 %v1931, %v2179
      %v2260 = vadd.f32 %v1932, %v2184
      %v2261 = vadd.f32 %v1933, %v2187
      %v2262 = vadd.f32 %v1934, %v2192
      %v2263 = vadd.f32 %v1935, %v2195
      %v2264 = vadd.f32 %v1936, %v2200
      %v2265 = vadd.f32 %v1937, %v2203
      %v2266 = vadd.f32 %v1938, %v2208
      %v2267 = vadd.f32 %v1939, %v2211
      %v2268 = vadd.f32 %v1940, %v2216
      %v2269 = vadd.f32 %v1941, %v2219
      %v2270 = vadd.f32 %v1942, %v2224
      %v2271 = vadd.f32 %v1943, %v2227
      %v2272 = vadd.f32 %v1944, %v2232
      %v2273 = vadd.f32 %v1945, %v2235
      %2274 = vst [vmem:[#allocation2] sm:$0xff] %v2238
      %2275 = vst [vmem:[#allocation2 + $0x8] sm:$0xff] %v2239
      %2276 = vst [vmem:[#allocation2 + $0x10] sm:$0xff] %v2240
      %2277 = vst [vmem:[#allocation2 + $0x18] sm:$0xff] %v2241
      %2278 = vst [vmem:[#allocation2 + $0x20] sm:$0xff] %v2242
      %2279 = vst [vmem:[#allocation2 + $0x28] sm:$0xff] %v2243
      %2280 = vst [vmem:[#allocation2 + $0x30] sm:$0xff] %v2244
      %2281 = vst [vmem:[#allocation2 + $0x38] sm:$0xff] %v2245
      %2282 = vst [vmem:[#allocation2 + $0x40] sm:$0xff] %v2246
      %2283 = vst [vmem:[#allocation2 + $0x48] sm:$0xff] %v2247
      %2284 = vst [vmem:[#allocation2 + $0x50] sm:$0xff] %v2248
      %2285 = vst [vmem:[#allocation2 + $0x58] sm:$0xff] %v2249
      %2286 = vst [vmem:[#allocation2 + $0x60] sm:$0xff] %v2250
      %2287 = vst [vmem:[#allocation2 + $0x68] sm:$0xff] %v2251
      %2288 = vst [vmem:[#allocation2 + $0x70] sm:$0xff] %v2252
      %2289 = vst [vmem:[#allocation2 + $0x78] sm:$0xff] %v2253
      %2290 = vst [vmem:[#allocation2 + $0x80] sm:$0xff] %v2254
      %2291 = vst [vmem:[#allocation2 + $0x88] sm:$0xff] %v2255
      %2292 = vst [vmem:[#allocation2 + $0x90] sm:$0xff] %v2256
      %2293 = vst [vmem:[#allocation2 + $0x98] sm:$0xff] %v2257
      %2294 = vst [vmem:[#allocation2 + $0xa0] sm:$0xff] %v2258
      %2295 = vst [vmem:[#allocation2 + $0xa8] sm:$0xff] %v2259
      %2296 = vst [vmem:[#allocation2 + $0xb0] sm:$0xff] %v2260
      %2297 = vst [vmem:[#allocation2 + $0xb8] sm:$0xff] %v2261
      %2298 = vst [vmem:[#allocation2 + $0xc0] sm:$0xff] %v2262
      %2299 = vst [vmem:[#allocation2 + $0xc8] sm:$0xff] %v2263
      %2300 = vst [vmem:[#allocation2 + $0xd0] sm:$0xff] %v2264
      %2301 = vst [vmem:[#allocation2 + $0xd8] sm:$0xff] %v2265
      %2302 = vst [vmem:[#allocation2 + $0xe0] sm:$0xff] %v2266
      %2303 = vst [vmem:[#allocation2 + $0xe8] sm:$0xff] %v2267
      %2304 = vst [vmem:[#allocation2 + $0xf0] sm:$0xff] %v2268
      %2305 = vst [vmem:[#allocation2 + $0xf8] sm:$0xff] %v2269
      %2306 = vst [vmem:[#allocation2 + $0x100] sm:$0xff] %v2270
      %2307 = vst [vmem:[#allocation2 + $0x108] sm:$0xff] %v2271
      %2308 = vst [vmem:[#allocation2 + $0x110] sm:$0xff] %v2272
      %2309 = vst [vmem:[#allocation2 + $0x118] sm:$0xff] %v2273
      %v2310 = vld [vmem:[#allocation2] sm:$0xff]
      %v2311 = vld [vmem:[#allocation2 + $0x8] sm:$0xff]
      %v2312 = vld [vmem:[#allocation2 + $0x10] sm:$0xff]
      %v2313 = vld [vmem:[#allocation2 + $0x18] sm:$0xff]
      %v2314 = vld [vmem:[#allocation2 + $0x20] sm:$0xff]
      %v2315 = vld [vmem:[#allocation2 + $0x28] sm:$0xff]
      %v2316 = vld [vmem:[#allocation2 + $0x30] sm:$0xff]
      %v2317 = vld [vmem:[#allocation2 + $0x38] sm:$0xff]
      %v2318 = vld [vmem:[#allocation2 + $0x40] sm:$0xff]
      %v2319 = vld [vmem:[#allocation2 + $0x48] sm:$0xff]
      %v2320 = vld [vmem:[#allocation2 + $0x50] sm:$0xff]
      %v2321 = vld [vmem:[#allocation2 + $0x58] sm:$0xff]
      %v2322 = vld [vmem:[#allocation2 + $0x60] sm:$0xff]
      %v2323 = vld [vmem:[#allocation2 + $0x68] sm:$0xff]
      %v2324 = vld [vmem:[#allocation2 + $0x70] sm:$0xff]
      %v2325 = vld [vmem:[#allocation2 + $0x78] sm:$0xff]
      %v2326 = vld [vmem:[#allocation2 + $0x80] sm:$0xff]
      %v2327 = vld [vmem:[#allocation2 + $0x88] sm:$0xff]
      %v2328 = vld [vmem:[#allocation2 + $0x90] sm:$0xff]
      %v2329 = vld [vmem:[#allocation2 + $0x98] sm:$0xff]
      %v2330 = vld [vmem:[#allocation2 + $0xa0] sm:$0xff]
      %v2331 = vld [vmem:[#allocation2 + $0xa8] sm:$0xff]
      %v2332 = vld [vmem:[#allocation2 + $0xb0] sm:$0xff]
      %v2333 = vld [vmem:[#allocation2 + $0xb8] sm:$0xff]
      %v2334 = vld [vmem:[#allocation2 + $0xc0] sm:$0xff]
      %v2335 = vld [vmem:[#allocation2 + $0xc8] sm:$0xff]
      %v2336 = vld [vmem:[#allocation2 + $0xd0] sm:$0xff]
      %v2337 = vld [vmem:[#allocation2 + $0xd8] sm:$0xff]
      %v2338 = vld [vmem:[#allocation2 + $0xe0] sm:$0xff]
      %v2339 = vld [vmem:[#allocation2 + $0xe8] sm:$0xff]
      %v2340 = vld [vmem:[#allocation2 + $0xf0] sm:$0xff]
      %v2341 = vld [vmem:[#allocation2 + $0xf8] sm:$0xff]
      %v2342 = vld [vmem:[#allocation2 + $0x100] sm:$0xff]
      %v2343 = vld [vmem:[#allocation2 + $0x108] sm:$0xff]
      %v2344 = vld [vmem:[#allocation2 + $0x110] sm:$0xff]
      %v2345 = vld [vmem:[#allocation2 + $0x118] sm:$0xff]
      %s2346 = sadd.s32 %s244, 20
      %s2347 = scalar_lea.vmem [#allocation3], %s2346
      %v2348 = vld [vmem:[%s2347] sm:$0xff]
      %v2349 = vld [vmem:[%s2347 + $0x8] sm:$0xff]
      %v2350 = vld [vmem:[%s2347 + $0x10] sm:$0xff]
      %v2351 = vld [vmem:[%s2347 + $0x18] sm:$0xff]
      %v2352 = vld [vmem:[%s2347 + $0x20] sm:$0xff]
      %v2353 = vld [vmem:[%s2347 + $0x28] sm:$0xff]
      %v2354 = vld [vmem:[%s2347 + $0x30] sm:$0xff]
      %v2355 = vld [vmem:[%s2347 + $0x38] sm:$0xff]
      %v2356 = vld [vmem:[%s2347 + $0x40] sm:$0xff]
      %v2357 = vld [vmem:[%s2347 + $0x48] sm:$0xff]
      %v2358 = vld [vmem:[%s2347 + $0x50] sm:$0xff]
      %v2359 = vld [vmem:[%s2347 + $0x58] sm:$0xff]
      %v2360 = vld [vmem:[%s2347 + $0x60] sm:$0xff]
      %v2361 = vld [vmem:[%s2347 + $0x68] sm:$0xff]
      %v2362 = vld [vmem:[%s2347 + $0x70] sm:$0xff]
      %v2363 = vld [vmem:[%s2347 + $0x78] sm:$0xff]
      %v2364 = vld [vmem:[%s2347 + $0x80] sm:$0xff]
      %v2365 = vld [vmem:[%s2347 + $0x88] sm:$0xff]
      %v2366 = vld [vmem:[%s2347 + $0x90] sm:$0xff]
      %v2367 = vld [vmem:[%s2347 + $0x98] sm:$0xff]
      %v2368 = vld [vmem:[%s2347 + $0xa0] sm:$0xff]
      %v2369 = vld [vmem:[%s2347 + $0xa8] sm:$0xff]
      %v2370 = vld [vmem:[%s2347 + $0xb0] sm:$0xff]
      %v2371 = vld [vmem:[%s2347 + $0xb8] sm:$0xff]
      %v2372 = vld [vmem:[%s2347 + $0xc0] sm:$0xff]
      %v2373 = vld [vmem:[%s2347 + $0xc8] sm:$0xff]
      %v2374 = vld [vmem:[%s2347 + $0xd0] sm:$0xff]
      %v2375 = vld [vmem:[%s2347 + $0xd8] sm:$0xff]
      %v2376 = vld [vmem:[%s2347 + $0xe0] sm:$0xff]
      %v2377 = vld [vmem:[%s2347 + $0xe8] sm:$0xff]
      %v2378 = vld [vmem:[%s2347 + $0xf0] sm:$0xff]
      %v2379 = vld [vmem:[%s2347 + $0xf8] sm:$0xff]
      %v2380 = vld [vmem:[%s2347 + $0x100] sm:$0xff]
      %v2381 = vld [vmem:[%s2347 + $0x108] sm:$0xff]
      %v2382 = vld [vmem:[%s2347 + $0x110] sm:$0xff]
      %v2383 = vld [vmem:[%s2347 + $0x118] sm:$0xff]
      %v2384 = vpack.c.bf16 %v2349, %v2348
      %v2385 = vpack.c.bf16 %v2351, %v2350
      %v2386 = vpack.c.bf16 %v2353, %v2352
      %v2387 = vpack.c.bf16 %v2355, %v2354
      %v2388 = vpack.c.bf16 %v2357, %v2356
      %v2389 = vpack.c.bf16 %v2359, %v2358
      %v2390 = vpack.c.bf16 %v2361, %v2360
      %v2391 = vpack.c.bf16 %v2363, %v2362
      %v2392 = vpack.c.bf16 %v2365, %v2364
      %v2393 = vpack.c.bf16 %v2367, %v2366
      %v2394 = vpack.c.bf16 %v2369, %v2368
      %v2395 = vpack.c.bf16 %v2371, %v2370
      %v2396 = vpack.c.bf16 %v2373, %v2372
      %v2397 = vpack.c.bf16 %v2375, %v2374
      %v2398 = vpack.c.bf16 %v2377, %v2376
      %v2399 = vpack.c.bf16 %v2379, %v2378
      %v2400 = vpack.c.bf16 %v2381, %v2380
      %v2401 = vpack.c.bf16 %v2383, %v2382
      %s2402 = scalar_lea.vmem %s225, 20
      %v2403 = vld [vmem:[%s2402] sm:$0xf]
      %v2405 = vsel %vm438, %v2384, 0
      %v2408 = vsel %vm438, %v2385, 0
      %v2411 = vsel %vm438, %v2386, 0
      %v2414 = vsel %vm438, %v2387, 0
      %v2417 = vsel %vm438, %v2388, 0
      %v2420 = vsel %vm438, %v2389, 0
      %v2423 = vsel %vm438, %v2390, 0
      %v2426 = vsel %vm438, %v2391, 0
      %v2429 = vsel %vm438, %v2392, 0
      %v2432 = vsel %vm438, %v2393, 0
      %v2435 = vsel %vm438, %v2394, 0
      %v2438 = vsel %vm438, %v2395, 0
      %v2441 = vsel %vm438, %v2396, 0
      %v2444 = vsel %vm438, %v2397, 0
      %v2447 = vsel %vm438, %v2398, 0
      %v2450 = vsel %vm438, %v2399, 0
      %v2453 = vsel %vm438, %v2400, 0
      %v2456 = vsel %vm438, %v2401, 0
      %v2459 = vsel %vm493, %v2403, 0
      %2461 = vmatprep.subr.bf16.mxu0 0
      %2462 = vmatpush1.bf16.msra.mxu0 0
      %2463 = vmatprep.subr.bf16.mxu0 0
      %2464 = vmatpush1.bf16.msra.mxu0 0
      %2465 = vmatprep.subr.bf16.mxu0 0
      %2466 = vmatpush1.bf16.msra.mxu0 0
      %2467 = vmatprep.subr.bf16.mxu0 0
      %2468 = vmatpush1.bf16.msra.mxu0 0
      %2469 = vmatprep.subr.bf16.mxu0 0
      %2470 = vmatpush1.bf16.msra.mxu0 0
      %2471 = vmatprep.subr.bf16.mxu0 0
      %2472 = vmatpush1.bf16.msra.mxu0 0
      %2473 = vmatprep.subr.bf16.mxu0 0
      %2474 = vmatpush1.bf16.msra.mxu0 0
      %2475 = vmatprep.subr.bf16.mxu0 0
      %2476 = vmatpush1.bf16.msra.mxu0 %v2459
      %2477 = vmatprep.subr.bf16.mxu0 0
      %2478 = vmatpush2.bf16.msra.mxu0 0
      %2479 = vmatprep.subr.bf16.mxu0 0
      %2480 = vmatpush2.bf16.msra.mxu0 0
      %2481 = vmatprep.subr.bf16.mxu0 0
      %2482 = vmatpush2.bf16.msra.mxu0 0
      %2483 = vmatprep.subr.bf16.mxu0 0
      %2484 = vmatpush2.bf16.msra.mxu0 0
      %2485 = vmatprep.subr.bf16.mxu0 0
      %2486 = vmatpush2.bf16.msra.mxu0 0
      %2487 = vmatprep.subr.bf16.mxu0 0
      %2488 = vmatpush2.bf16.msra.mxu0 0
      %2489 = vmatprep.subr.bf16.mxu0 0
      %2490 = vmatpush2.bf16.msra.mxu0 0
      %2491 = vmatprep.subr.bf16.mxu0 0
      %2492 = vmatpush2.bf16.msra.mxu0 0
      %2493 = vmatprep.mubr.bf16.mxu0 0
      %2494 = vmatmul.mubr.bf16.gmra.mxu0 %v2405
      %v2495 = vpop.f32.mrf.mxu0
      %v2496 = vadd.f32 0.0, %v2495
      %v2497 = vpop.f32.mrf.mxu0
      %v2498 = vpop.f32.mrf.mxu0
      %v2499 = vadd.f32 0.0, %v2498
      %v2500 = vpop.f32.mrf.mxu0
      %2501 = vmatprep.mubr.bf16.mxu0 0
      %2502 = vmatmul.mubr.bf16.gmra.mxu0 %v2408
      %v2503 = vpop.f32.mrf.mxu0
      %v2504 = vadd.f32 0.0, %v2503
      %v2505 = vpop.f32.mrf.mxu0
      %v2506 = vpop.f32.mrf.mxu0
      %v2507 = vadd.f32 0.0, %v2506
      %v2508 = vpop.f32.mrf.mxu0
      %2509 = vmatprep.mubr.bf16.mxu0 0
      %2510 = vmatmul.mubr.bf16.gmra.mxu0 %v2411
      %v2511 = vpop.f32.mrf.mxu0
      %v2512 = vadd.f32 0.0, %v2511
      %v2513 = vpop.f32.mrf.mxu0
      %v2514 = vpop.f32.mrf.mxu0
      %v2515 = vadd.f32 0.0, %v2514
      %v2516 = vpop.f32.mrf.mxu0
      %2517 = vmatprep.mubr.bf16.mxu0 0
      %2518 = vmatmul.mubr.bf16.gmra.mxu0 %v2414
      %v2519 = vpop.f32.mrf.mxu0
      %v2520 = vadd.f32 0.0, %v2519
      %v2521 = vpop.f32.mrf.mxu0
      %v2522 = vpop.f32.mrf.mxu0
      %v2523 = vadd.f32 0.0, %v2522
      %v2524 = vpop.f32.mrf.mxu0
      %2525 = vmatprep.mubr.bf16.mxu0 0
      %2526 = vmatmul.mubr.bf16.gmra.mxu0 %v2417
      %v2527 = vpop.f32.mrf.mxu0
      %v2528 = vadd.f32 0.0, %v2527
      %v2529 = vpop.f32.mrf.mxu0
      %v2530 = vpop.f32.mrf.mxu0
      %v2531 = vadd.f32 0.0, %v2530
      %v2532 = vpop.f32.mrf.mxu0
      %2533 = vmatprep.mubr.bf16.mxu0 0
      %2534 = vmatmul.mubr.bf16.gmra.mxu0 %v2420
      %v2535 = vpop.f32.mrf.mxu0
      %v2536 = vadd.f32 0.0, %v2535
      %v2537 = vpop.f32.mrf.mxu0
      %v2538 = vpop.f32.mrf.mxu0
      %v2539 = vadd.f32 0.0, %v2538
      %v2540 = vpop.f32.mrf.mxu0
      %2541 = vmatprep.mubr.bf16.mxu0 0
      %2542 = vmatmul.mubr.bf16.gmra.mxu0 %v2423
      %v2543 = vpop.f32.mrf.mxu0
      %v2544 = vadd.f32 0.0, %v2543
      %v2545 = vpop.f32.mrf.mxu0
      %v2546 = vpop.f32.mrf.mxu0
      %v2547 = vadd.f32 0.0, %v2546
      %v2548 = vpop.f32.mrf.mxu0
      %2549 = vmatprep.mubr.bf16.mxu0 0
      %2550 = vmatmul.mubr.bf16.gmra.mxu0 %v2426
      %v2551 = vpop.f32.mrf.mxu0
      %v2552 = vadd.f32 0.0, %v2551
      %v2553 = vpop.f32.mrf.mxu0
      %v2554 = vpop.f32.mrf.mxu0
      %v2555 = vadd.f32 0.0, %v2554
      %v2556 = vpop.f32.mrf.mxu0
      %2557 = vmatprep.mubr.bf16.mxu0 0
      %2558 = vmatmul.mubr.bf16.gmra.mxu0 %v2429
      %v2559 = vpop.f32.mrf.mxu0
      %v2560 = vadd.f32 0.0, %v2559
      %v2561 = vpop.f32.mrf.mxu0
      %v2562 = vpop.f32.mrf.mxu0
      %v2563 = vadd.f32 0.0, %v2562
      %v2564 = vpop.f32.mrf.mxu0
      %2565 = vmatprep.mubr.bf16.mxu0 0
      %2566 = vmatmul.mubr.bf16.gmra.mxu0 %v2432
      %v2567 = vpop.f32.mrf.mxu0
      %v2568 = vadd.f32 0.0, %v2567
      %v2569 = vpop.f32.mrf.mxu0
      %v2570 = vpop.f32.mrf.mxu0
      %v2571 = vadd.f32 0.0, %v2570
      %v2572 = vpop.f32.mrf.mxu0
      %2573 = vmatprep.mubr.bf16.mxu0 0
      %2574 = vmatmul.mubr.bf16.gmra.mxu0 %v2435
      %v2575 = vpop.f32.mrf.mxu0
      %v2576 = vadd.f32 0.0, %v2575
      %v2577 = vpop.f32.mrf.mxu0
      %v2578 = vpop.f32.mrf.mxu0
      %v2579 = vadd.f32 0.0, %v2578
      %v2580 = vpop.f32.mrf.mxu0
      %2581 = vmatprep.mubr.bf16.mxu0 0
      %2582 = vmatmul.mubr.bf16.gmra.mxu0 %v2438
      %v2583 = vpop.f32.mrf.mxu0
      %v2584 = vadd.f32 0.0, %v2583
      %v2585 = vpop.f32.mrf.mxu0
      %v2586 = vpop.f32.mrf.mxu0
      %v2587 = vadd.f32 0.0, %v2586
      %v2588 = vpop.f32.mrf.mxu0
      %2589 = vmatprep.mubr.bf16.mxu0 0
      %2590 = vmatmul.mubr.bf16.gmra.mxu0 %v2441
      %v2591 = vpop.f32.mrf.mxu0
      %v2592 = vadd.f32 0.0, %v2591
      %v2593 = vpop.f32.mrf.mxu0
      %v2594 = vpop.f32.mrf.mxu0
      %v2595 = vadd.f32 0.0, %v2594
      %v2596 = vpop.f32.mrf.mxu0
      %2597 = vmatprep.mubr.bf16.mxu0 0
      %2598 = vmatmul.mubr.bf16.gmra.mxu0 %v2444
      %v2599 = vpop.f32.mrf.mxu0
      %v2600 = vadd.f32 0.0, %v2599
      %v2601 = vpop.f32.mrf.mxu0
      %v2602 = vpop.f32.mrf.mxu0
      %v2603 = vadd.f32 0.0, %v2602
      %v2604 = vpop.f32.mrf.mxu0
      %2605 = vmatprep.mubr.bf16.mxu0 0
      %2606 = vmatmul.mubr.bf16.gmra.mxu0 %v2447
      %v2607 = vpop.f32.mrf.mxu0
      %v2608 = vadd.f32 0.0, %v2607
      %v2609 = vpop.f32.mrf.mxu0
      %v2610 = vpop.f32.mrf.mxu0
      %v2611 = vadd.f32 0.0, %v2610
      %v2612 = vpop.f32.mrf.mxu0
      %2613 = vmatprep.mubr.bf16.mxu0 0
      %2614 = vmatmul.mubr.bf16.gmra.mxu0 %v2450
      %v2615 = vpop.f32.mrf.mxu0
      %v2616 = vadd.f32 0.0, %v2615
      %v2617 = vpop.f32.mrf.mxu0
      %v2618 = vpop.f32.mrf.mxu0
      %v2619 = vadd.f32 0.0, %v2618
      %v2620 = vpop.f32.mrf.mxu0
      %2621 = vmatprep.mubr.bf16.mxu0 0
      %2622 = vmatmul.mubr.bf16.gmra.mxu0 %v2453
      %v2623 = vpop.f32.mrf.mxu0
      %v2624 = vadd.f32 0.0, %v2623
      %v2625 = vpop.f32.mrf.mxu0
      %v2626 = vpop.f32.mrf.mxu0
      %v2627 = vadd.f32 0.0, %v2626
      %v2628 = vpop.f32.mrf.mxu0
      %2629 = vmatprep.mubr.bf16.mxu0 0
      %2630 = vmatmul.mubr.bf16.gmra.mxu0 %v2456
      %v2631 = vpop.f32.mrf.mxu0
      %v2632 = vadd.f32 0.0, %v2631
      %v2633 = vpop.f32.mrf.mxu0
      %v2634 = vpop.f32.mrf.mxu0
      %v2635 = vadd.f32 0.0, %v2634
      %v2636 = vpop.f32.mrf.mxu0
      %2637 = vdwg.mxu0
      %v2638 = vadd.f32 %v2310, %v2496
      %v2639 = vadd.f32 %v2311, %v2499
      %v2640 = vadd.f32 %v2312, %v2504
      %v2641 = vadd.f32 %v2313, %v2507
      %v2642 = vadd.f32 %v2314, %v2512
      %v2643 = vadd.f32 %v2315, %v2515
      %v2644 = vadd.f32 %v2316, %v2520
      %v2645 = vadd.f32 %v2317, %v2523
      %v2646 = vadd.f32 %v2318, %v2528
      %v2647 = vadd.f32 %v2319, %v2531
      %v2648 = vadd.f32 %v2320, %v2536
      %v2649 = vadd.f32 %v2321, %v2539
      %v2650 = vadd.f32 %v2322, %v2544
      %v2651 = vadd.f32 %v2323, %v2547
      %v2652 = vadd.f32 %v2324, %v2552
      %v2653 = vadd.f32 %v2325, %v2555
      %v2654 = vadd.f32 %v2326, %v2560
      %v2655 = vadd.f32 %v2327, %v2563
      %v2656 = vadd.f32 %v2328, %v2568
      %v2657 = vadd.f32 %v2329, %v2571
      %v2658 = vadd.f32 %v2330, %v2576
      %v2659 = vadd.f32 %v2331, %v2579
      %v2660 = vadd.f32 %v2332, %v2584
      %v2661 = vadd.f32 %v2333, %v2587
      %v2662 = vadd.f32 %v2334, %v2592
      %v2663 = vadd.f32 %v2335, %v2595
      %v2664 = vadd.f32 %v2336, %v2600
      %v2665 = vadd.f32 %v2337, %v2603
      %v2666 = vadd.f32 %v2338, %v2608
      %v2667 = vadd.f32 %v2339, %v2611
      %v2668 = vadd.f32 %v2340, %v2616
      %v2669 = vadd.f32 %v2341, %v2619
      %v2670 = vadd.f32 %v2342, %v2624
      %v2671 = vadd.f32 %v2343, %v2627
      %v2672 = vadd.f32 %v2344, %v2632
      %v2673 = vadd.f32 %v2345, %v2635
      %2674 = vst [vmem:[#allocation2] sm:$0xff] %v2638
      %2675 = vst [vmem:[#allocation2 + $0x8] sm:$0xff] %v2639
      %2676 = vst [vmem:[#allocation2 + $0x10] sm:$0xff] %v2640
      %2677 = vst [vmem:[#allocation2 + $0x18] sm:$0xff] %v2641
      %2678 = vst [vmem:[#allocation2 + $0x20] sm:$0xff] %v2642
      %2679 = vst [vmem:[#allocation2 + $0x28] sm:$0xff] %v2643
      %2680 = vst [vmem:[#allocation2 + $0x30] sm:$0xff] %v2644
      %2681 = vst [vmem:[#allocation2 + $0x38] sm:$0xff] %v2645
      %2682 = vst [vmem:[#allocation2 + $0x40] sm:$0xff] %v2646
      %2683 = vst [vmem:[#allocation2 + $0x48] sm:$0xff] %v2647
      %2684 = vst [vmem:[#allocation2 + $0x50] sm:$0xff] %v2648
      %2685 = vst [vmem:[#allocation2 + $0x58] sm:$0xff] %v2649
      %2686 = vst [vmem:[#allocation2 + $0x60] sm:$0xff] %v2650
      %2687 = vst [vmem:[#allocation2 + $0x68] sm:$0xff] %v2651
      %2688 = vst [vmem:[#allocation2 + $0x70] sm:$0xff] %v2652
      %2689 = vst [vmem:[#allocation2 + $0x78] sm:$0xff] %v2653
      %2690 = vst [vmem:[#allocation2 + $0x80] sm:$0xff] %v2654
      %2691 = vst [vmem:[#allocation2 + $0x88] sm:$0xff] %v2655
      %2692 = vst [vmem:[#allocation2 + $0x90] sm:$0xff] %v2656
      %2693 = vst [vmem:[#allocation2 + $0x98] sm:$0xff] %v2657
      %2694 = vst [vmem:[#allocation2 + $0xa0] sm:$0xff] %v2658
      %2695 = vst [vmem:[#allocation2 + $0xa8] sm:$0xff] %v2659
      %2696 = vst [vmem:[#allocation2 + $0xb0] sm:$0xff] %v2660
      %2697 = vst [vmem:[#allocation2 + $0xb8] sm:$0xff] %v2661
      %2698 = vst [vmem:[#allocation2 + $0xc0] sm:$0xff] %v2662
      %2699 = vst [vmem:[#allocation2 + $0xc8] sm:$0xff] %v2663
      %2700 = vst [vmem:[#allocation2 + $0xd0] sm:$0xff] %v2664
      %2701 = vst [vmem:[#allocation2 + $0xd8] sm:$0xff] %v2665
      %2702 = vst [vmem:[#allocation2 + $0xe0] sm:$0xff] %v2666
      %2703 = vst [vmem:[#allocation2 + $0xe8] sm:$0xff] %v2667
      %2704 = vst [vmem:[#allocation2 + $0xf0] sm:$0xff] %v2668
      %2705 = vst [vmem:[#allocation2 + $0xf8] sm:$0xff] %v2669
      %2706 = vst [vmem:[#allocation2 + $0x100] sm:$0xff] %v2670
      %2707 = vst [vmem:[#allocation2 + $0x108] sm:$0xff] %v2671
      %2708 = vst [vmem:[#allocation2 + $0x110] sm:$0xff] %v2672
      %2709 = vst [vmem:[#allocation2 + $0x118] sm:$0xff] %v2673
      %v2710 = vld [vmem:[#allocation2] sm:$0xff]
      %v2711 = vld [vmem:[#allocation2 + $0x8] sm:$0xff]
      %v2712 = vld [vmem:[#allocation2 + $0x10] sm:$0xff]
      %v2713 = vld [vmem:[#allocation2 + $0x18] sm:$0xff]
      %v2714 = vld [vmem:[#allocation2 + $0x20] sm:$0xff]
      %v2715 = vld [vmem:[#allocation2 + $0x28] sm:$0xff]
      %v2716 = vld [vmem:[#allocation2 + $0x30] sm:$0xff]
      %v2717 = vld [vmem:[#allocation2 + $0x38] sm:$0xff]
      %v2718 = vld [vmem:[#allocation2 + $0x40] sm:$0xff]
      %v2719 = vld [vmem:[#allocation2 + $0x48] sm:$0xff]
      %v2720 = vld [vmem:[#allocation2 + $0x50] sm:$0xff]
      %v2721 = vld [vmem:[#allocation2 + $0x58] sm:$0xff]
      %v2722 = vld [vmem:[#allocation2 + $0x60] sm:$0xff]
      %v2723 = vld [vmem:[#allocation2 + $0x68] sm:$0xff]
      %v2724 = vld [vmem:[#allocation2 + $0x70] sm:$0xff]
      %v2725 = vld [vmem:[#allocation2 + $0x78] sm:$0xff]
      %v2726 = vld [vmem:[#allocation2 + $0x80] sm:$0xff]
      %v2727 = vld [vmem:[#allocation2 + $0x88] sm:$0xff]
      %v2728 = vld [vmem:[#allocation2 + $0x90] sm:$0xff]
      %v2729 = vld [vmem:[#allocation2 + $0x98] sm:$0xff]
      %v2730 = vld [vmem:[#allocation2 + $0xa0] sm:$0xff]
      %v2731 = vld [vmem:[#allocation2 + $0xa8] sm:$0xff]
      %v2732 = vld [vmem:[#allocation2 + $0xb0] sm:$0xff]
      %v2733 = vld [vmem:[#allocation2 + $0xb8] sm:$0xff]
      %v2734 = vld [vmem:[#allocation2 + $0xc0] sm:$0xff]
      %v2735 = vld [vmem:[#allocation2 + $0xc8] sm:$0xff]
      %v2736 = vld [vmem:[#allocation2 + $0xd0] sm:$0xff]
      %v2737 = vld [vmem:[#allocation2 + $0xd8] sm:$0xff]
      %v2738 = vld [vmem:[#allocation2 + $0xe0] sm:$0xff]
      %v2739 = vld [vmem:[#allocation2 + $0xe8] sm:$0xff]
      %v2740 = vld [vmem:[#allocation2 + $0xf0] sm:$0xff]
      %v2741 = vld [vmem:[#allocation2 + $0xf8] sm:$0xff]
      %v2742 = vld [vmem:[#allocation2 + $0x100] sm:$0xff]
      %v2743 = vld [vmem:[#allocation2 + $0x108] sm:$0xff]
      %v2744 = vld [vmem:[#allocation2 + $0x110] sm:$0xff]
      %v2745 = vld [vmem:[#allocation2 + $0x118] sm:$0xff]
      %s2746 = sadd.s32 %s244, 36
      %s2747 = scalar_lea.vmem [#allocation3], %s2746
      %v2748 = vld [vmem:[%s2747] sm:$0xff]
      %v2749 = vld [vmem:[%s2747 + $0x8] sm:$0xff]
      %v2750 = vld [vmem:[%s2747 + $0x10] sm:$0xff]
      %v2751 = vld [vmem:[%s2747 + $0x18] sm:$0xff]
      %v2752 = vld [vmem:[%s2747 + $0x20] sm:$0xff]
      %v2753 = vld [vmem:[%s2747 + $0x28] sm:$0xff]
      %v2754 = vld [vmem:[%s2747 + $0x30] sm:$0xff]
      %v2755 = vld [vmem:[%s2747 + $0x38] sm:$0xff]
      %v2756 = vld [vmem:[%s2747 + $0x40] sm:$0xff]
      %v2757 = vld [vmem:[%s2747 + $0x48] sm:$0xff]
      %v2758 = vld [vmem:[%s2747 + $0x50] sm:$0xff]
      %v2759 = vld [vmem:[%s2747 + $0x58] sm:$0xff]
      %v2760 = vld [vmem:[%s2747 + $0x60] sm:$0xff]
      %v2761 = vld [vmem:[%s2747 + $0x68] sm:$0xff]
      %v2762 = vld [vmem:[%s2747 + $0x70] sm:$0xff]
      %v2763 = vld [vmem:[%s2747 + $0x78] sm:$0xff]
      %v2764 = vld [vmem:[%s2747 + $0x80] sm:$0xff]
      %v2765 = vld [vmem:[%s2747 + $0x88] sm:$0xff]
      %v2766 = vld [vmem:[%s2747 + $0x90] sm:$0xff]
      %v2767 = vld [vmem:[%s2747 + $0x98] sm:$0xff]
      %v2768 = vld [vmem:[%s2747 + $0xa0] sm:$0xff]
      %v2769 = vld [vmem:[%s2747 + $0xa8] sm:$0xff]
      %v2770 = vld [vmem:[%s2747 + $0xb0] sm:$0xff]
      %v2771 = vld [vmem:[%s2747 + $0xb8] sm:$0xff]
      %v2772 = vld [vmem:[%s2747 + $0xc0] sm:$0xff]
      %v2773 = vld [vmem:[%s2747 + $0xc8] sm:$0xff]
      %v2774 = vld [vmem:[%s2747 + $0xd0] sm:$0xff]
      %v2775 = vld [vmem:[%s2747 + $0xd8] sm:$0xff]
      %v2776 = vld [vmem:[%s2747 + $0xe0] sm:$0xff]
      %v2777 = vld [vmem:[%s2747 + $0xe8] sm:$0xff]
      %v2778 = vld [vmem:[%s2747 + $0xf0] sm:$0xff]
      %v2779 = vld [vmem:[%s2747 + $0xf8] sm:$0xff]
      %v2780 = vld [vmem:[%s2747 + $0x100] sm:$0xff]
      %v2781 = vld [vmem:[%s2747 + $0x108] sm:$0xff]
      %v2782 = vld [vmem:[%s2747 + $0x110] sm:$0xff]
      %v2783 = vld [vmem:[%s2747 + $0x118] sm:$0xff]
      %v2784 = vpack.c.bf16 %v2749, %v2748
      %v2785 = vpack.c.bf16 %v2751, %v2750
      %v2786 = vpack.c.bf16 %v2753, %v2752
      %v2787 = vpack.c.bf16 %v2755, %v2754
      %v2788 = vpack.c.bf16 %v2757, %v2756
      %v2789 = vpack.c.bf16 %v2759, %v2758
      %v2790 = vpack.c.bf16 %v2761, %v2760
      %v2791 = vpack.c.bf16 %v2763, %v2762
      %v2792 = vpack.c.bf16 %v2765, %v2764
      %v2793 = vpack.c.bf16 %v2767, %v2766
      %v2794 = vpack.c.bf16 %v2769, %v2768
      %v2795 = vpack.c.bf16 %v2771, %v2770
      %v2796 = vpack.c.bf16 %v2773, %v2772
      %v2797 = vpack.c.bf16 %v2775, %v2774
      %v2798 = vpack.c.bf16 %v2777, %v2776
      %v2799 = vpack.c.bf16 %v2779, %v2778
      %v2800 = vpack.c.bf16 %v2781, %v2780
      %v2801 = vpack.c.bf16 %v2783, %v2782
      %s2802 = scalar_lea.vmem %s225, 24
      %v2803 = vld [vmem:[%s2802] sm:$0xf]
      %v2805 = vsel %vm438, %v2784, 0
      %v2808 = vsel %vm438, %v2785, 0
      %v2811 = vsel %vm438, %v2786, 0
      %v2814 = vsel %vm438, %v2787, 0
      %v2817 = vsel %vm438, %v2788, 0
      %v2820 = vsel %vm438, %v2789, 0
      %v2823 = vsel %vm438, %v2790, 0
      %v2826 = vsel %vm438, %v2791, 0
      %v2829 = vsel %vm438, %v2792, 0
      %v2832 = vsel %vm438, %v2793, 0
      %v2835 = vsel %vm438, %v2794, 0
      %v2838 = vsel %vm438, %v2795, 0
      %v2841 = vsel %vm438, %v2796, 0
      %v2844 = vsel %vm438, %v2797, 0
      %v2847 = vsel %vm438, %v2798, 0
      %v2850 = vsel %vm438, %v2799, 0
      %v2853 = vsel %vm438, %v2800, 0
      %v2856 = vsel %vm438, %v2801, 0
      %v2859 = vsel %vm493, %v2803, 0
      %2861 = vmatprep.subr.bf16.mxu0 0
      %2862 = vmatpush1.bf16.msra.mxu0 0
      %2863 = vmatprep.subr.bf16.mxu0 0
      %2864 = vmatpush1.bf16.msra.mxu0 0
      %2865 = vmatprep.subr.bf16.mxu0 0
      %2866 = vmatpush1.bf16.msra.mxu0 0
      %2867 = vmatprep.subr.bf16.mxu0 0
      %2868 = vmatpush1.bf16.msra.mxu0 0
      %2869 = vmatprep.subr.bf16.mxu0 0
      %2870 = vmatpush1.bf16.msra.mxu0 0
      %2871 = vmatprep.subr.bf16.mxu0 0
      %2872 = vmatpush1.bf16.msra.mxu0 0
      %2873 = vmatprep.subr.bf16.mxu0 0
      %2874 = vmatpush1.bf16.msra.mxu0 0
      %2875 = vmatprep.subr.bf16.mxu0 0
      %2876 = vmatpush1.bf16.msra.mxu0 %v2859
      %2877 = vmatprep.subr.bf16.mxu0 0
      %2878 = vmatpush2.bf16.msra.mxu0 0
      %2879 = vmatprep.subr.bf16.mxu0 0
      %2880 = vmatpush2.bf16.msra.mxu0 0
      %2881 = vmatprep.subr.bf16.mxu0 0
      %2882 = vmatpush2.bf16.msra.mxu0 0
      %2883 = vmatprep.subr.bf16.mxu0 0
      %2884 = vmatpush2.bf16.msra.mxu0 0
      %2885 = vmatprep.subr.bf16.mxu0 0
      %2886 = vmatpush2.bf16.msra.mxu0 0
      %2887 = vmatprep.subr.bf16.mxu0 0
      %2888 = vmatpush2.bf16.msra.mxu0 0
      %2889 = vmatprep.subr.bf16.mxu0 0
      %2890 = vmatpush2.bf16.msra.mxu0 0
      %2891 = vmatprep.subr.bf16.mxu0 0
      %2892 = vmatpush2.bf16.msra.mxu0 0
      %2893 = vmatprep.mubr.bf16.mxu0 0
      %2894 = vmatmul.mubr.bf16.gmra.mxu0 %v2805
      %v2895 = vpop.f32.mrf.mxu0
      %v2896 = vadd.f32 0.0, %v2895
      %v2897 = vpop.f32.mrf.mxu0
      %v2898 = vpop.f32.mrf.mxu0
      %v2899 = vadd.f32 0.0, %v2898
      %v2900 = vpop.f32.mrf.mxu0
      %2901 = vmatprep.mubr.bf16.mxu0 0
      %2902 = vmatmul.mubr.bf16.gmra.mxu0 %v2808
      %v2903 = vpop.f32.mrf.mxu0
      %v2904 = vadd.f32 0.0, %v2903
      %v2905 = vpop.f32.mrf.mxu0
      %v2906 = vpop.f32.mrf.mxu0
      %v2907 = vadd.f32 0.0, %v2906
      %v2908 = vpop.f32.mrf.mxu0
      %2909 = vmatprep.mubr.bf16.mxu0 0
      %2910 = vmatmul.mubr.bf16.gmra.mxu0 %v2811
      %v2911 = vpop.f32.mrf.mxu0
      %v2912 = vadd.f32 0.0, %v2911
      %v2913 = vpop.f32.mrf.mxu0
      %v2914 = vpop.f32.mrf.mxu0
      %v2915 = vadd.f32 0.0, %v2914
      %v2916 = vpop.f32.mrf.mxu0
      %2917 = vmatprep.mubr.bf16.mxu0 0
      %2918 = vmatmul.mubr.bf16.gmra.mxu0 %v2814
      %v2919 = vpop.f32.mrf.mxu0
      %v2920 = vadd.f32 0.0, %v2919
      %v2921 = vpop.f32.mrf.mxu0
      %v2922 = vpop.f32.mrf.mxu0
      %v2923 = vadd.f32 0.0, %v2922
      %v2924 = vpop.f32.mrf.mxu0
      %2925 = vmatprep.mubr.bf16.mxu0 0
      %2926 = vmatmul.mubr.bf16.gmra.mxu0 %v2817
      %v2927 = vpop.f32.mrf.mxu0
      %v2928 = vadd.f32 0.0, %v2927
      %v2929 = vpop.f32.mrf.mxu0
      %v2930 = vpop.f32.mrf.mxu0
      %v2931 = vadd.f32 0.0, %v2930
      %v2932 = vpop.f32.mrf.mxu0
      %2933 = vmatprep.mubr.bf16.mxu0 0
      %2934 = vmatmul.mubr.bf16.gmra.mxu0 %v2820
      %v2935 = vpop.f32.mrf.mxu0
      %v2936 = vadd.f32 0.0, %v2935
      %v2937 = vpop.f32.mrf.mxu0
      %v2938 = vpop.f32.mrf.mxu0
      %v2939 = vadd.f32 0.0, %v2938
      %v2940 = vpop.f32.mrf.mxu0
      %2941 = vmatprep.mubr.bf16.mxu0 0
      %2942 = vmatmul.mubr.bf16.gmra.mxu0 %v2823
      %v2943 = vpop.f32.mrf.mxu0
      %v2944 = vadd.f32 0.0, %v2943
      %v2945 = vpop.f32.mrf.mxu0
      %v2946 = vpop.f32.mrf.mxu0
      %v2947 = vadd.f32 0.0, %v2946
      %v2948 = vpop.f32.mrf.mxu0
      %2949 = vmatprep.mubr.bf16.mxu0 0
      %2950 = vmatmul.mubr.bf16.gmra.mxu0 %v2826
      %v2951 = vpop.f32.mrf.mxu0
      %v2952 = vadd.f32 0.0, %v2951
      %v2953 = vpop.f32.mrf.mxu0
      %v2954 = vpop.f32.mrf.mxu0
      %v2955 = vadd.f32 0.0, %v2954
      %v2956 = vpop.f32.mrf.mxu0
      %2957 = vmatprep.mubr.bf16.mxu0 0
      %2958 = vmatmul.mubr.bf16.gmra.mxu0 %v2829
      %v2959 = vpop.f32.mrf.mxu0
      %v2960 = vadd.f32 0.0, %v2959
      %v2961 = vpop.f32.mrf.mxu0
      %v2962 = vpop.f32.mrf.mxu0
      %v2963 = vadd.f32 0.0, %v2962
      %v2964 = vpop.f32.mrf.mxu0
      %2965 = vmatprep.mubr.bf16.mxu0 0
      %2966 = vmatmul.mubr.bf16.gmra.mxu0 %v2832
      %v2967 = vpop.f32.mrf.mxu0
      %v2968 = vadd.f32 0.0, %v2967
      %v2969 = vpop.f32.mrf.mxu0
      %v2970 = vpop.f32.mrf.mxu0
      %v2971 = vadd.f32 0.0, %v2970
      %v2972 = vpop.f32.mrf.mxu0
      %2973 = vmatprep.mubr.bf16.mxu0 0
      %2974 = vmatmul.mubr.bf16.gmra.mxu0 %v2835
      %v2975 = vpop.f32.mrf.mxu0
      %v2976 = vadd.f32 0.0, %v2975
      %v2977 = vpop.f32.mrf.mxu0
      %v2978 = vpop.f32.mrf.mxu0
      %v2979 = vadd.f32 0.0, %v2978
      %v2980 = vpop.f32.mrf.mxu0
      %2981 = vmatprep.mubr.bf16.mxu0 0
      %2982 = vmatmul.mubr.bf16.gmra.mxu0 %v2838
      %v2983 = vpop.f32.mrf.mxu0
      %v2984 = vadd.f32 0.0, %v2983
      %v2985 = vpop.f32.mrf.mxu0
      %v2986 = vpop.f32.mrf.mxu0
      %v2987 = vadd.f32 0.0, %v2986
      %v2988 = vpop.f32.mrf.mxu0
      %2989 = vmatprep.mubr.bf16.mxu0 0
      %2990 = vmatmul.mubr.bf16.gmra.mxu0 %v2841
      %v2991 = vpop.f32.mrf.mxu0
      %v2992 = vadd.f32 0.0, %v2991
      %v2993 = vpop.f32.mrf.mxu0
      %v2994 = vpop.f32.mrf.mxu0
      %v2995 = vadd.f32 0.0, %v2994
      %v2996 = vpop.f32.mrf.mxu0
      %2997 = vmatprep.mubr.bf16.mxu0 0
      %2998 = vmatmul.mubr.bf16.gmra.mxu0 %v2844
      %v2999 = vpop.f32.mrf.mxu0
      %v3000 = vadd.f32 0.0, %v2999
      %v3001 = vpop.f32.mrf.mxu0
      %v3002 = vpop.f32.mrf.mxu0
      %v3003 = vadd.f32 0.0, %v3002
      %v3004 = vpop.f32.mrf.mxu0
      %3005 = vmatprep.mubr.bf16.mxu0 0
      %3006 = vmatmul.mubr.bf16.gmra.mxu0 %v2847
      %v3007 = vpop.f32.mrf.mxu0
      %v3008 = vadd.f32 0.0, %v3007
      %v3009 = vpop.f32.mrf.mxu0
      %v3010 = vpop.f32.mrf.mxu0
      %v3011 = vadd.f32 0.0, %v3010
      %v3012 = vpop.f32.mrf.mxu0
      %3013 = vmatprep.mubr.bf16.mxu0 0
      %3014 = vmatmul.mubr.bf16.gmra.mxu0 %v2850
      %v3015 = vpop.f32.mrf.mxu0
      %v3016 = vadd.f32 0.0, %v3015
      %v3017 = vpop.f32.mrf.mxu0
      %v3018 = vpop.f32.mrf.mxu0
      %v3019 = vadd.f32 0.0, %v3018
      %v3020 = vpop.f32.mrf.mxu0
      %3021 = vmatprep.mubr.bf16.mxu0 0
      %3022 = vmatmul.mubr.bf16.gmra.mxu0 %v2853
      %v3023 = vpop.f32.mrf.mxu0
      %v3024 = vadd.f32 0.0, %v3023
      %v3025 = vpop.f32.mrf.mxu0
      %v3026 = vpop.f32.mrf.mxu0
      %v3027 = vadd.f32 0.0, %v3026
      %v3028 = vpop.f32.mrf.mxu0
      %3029 = vmatprep.mubr.bf16.mxu0 0
      %3030 = vmatmul.mubr.bf16.gmra.mxu0 %v2856
      %v3031 = vpop.f32.mrf.mxu0
      %v3032 = vadd.f32 0.0, %v3031
      %v3033 = vpop.f32.mrf.mxu0
      %v3034 = vpop.f32.mrf.mxu0
      %v3035 = vadd.f32 0.0, %v3034
      %v3036 = vpop.f32.mrf.mxu0
      %3037 = vdwg.mxu0
      %v3038 = vadd.f32 %v2710, %v2896
      %v3039 = vadd.f32 %v2711, %v2899
      %v3040 = vadd.f32 %v2712, %v2904
      %v3041 = vadd.f32 %v2713, %v2907
      %v3042 = vadd.f32 %v2714, %v2912
      %v3043 = vadd.f32 %v2715, %v2915
      %v3044 = vadd.f32 %v2716, %v2920
      %v3045 = vadd.f32 %v2717, %v2923
      %v3046 = vadd.f32 %v2718, %v2928
      %v3047 = vadd.f32 %v2719, %v2931
      %v3048 = vadd.f32 %v2720, %v2936
      %v3049 = vadd.f32 %v2721, %v2939
      %v3050 = vadd.f32 %v2722, %v2944
      %v3051 = vadd.f32 %v2723, %v2947
      %v3052 = vadd.f32 %v2724, %v2952
      %v3053 = vadd.f32 %v2725, %v2955
      %v3054 = vadd.f32 %v2726, %v2960
      %v3055 = vadd.f32 %v2727, %v2963
      %v3056 = vadd.f32 %v2728, %v2968
      %v3057 = vadd.f32 %v2729, %v2971
      %v3058 = vadd.f32 %v2730, %v2976
      %v3059 = vadd.f32 %v2731, %v2979
      %v3060 = vadd.f32 %v2732, %v2984
      %v3061 = vadd.f32 %v2733, %v2987
      %v3062 = vadd.f32 %v2734, %v2992
      %v3063 = vadd.f32 %v2735, %v2995
      %v3064 = vadd.f32 %v2736, %v3000
      %v3065 = vadd.f32 %v2737, %v3003
      %v3066 = vadd.f32 %v2738, %v3008
      %v3067 = vadd.f32 %v2739, %v3011
      %v3068 = vadd.f32 %v2740, %v3016
      %v3069 = vadd.f32 %v2741, %v3019
      %v3070 = vadd.f32 %v2742, %v3024
      %v3071 = vadd.f32 %v2743, %v3027
      %v3072 = vadd.f32 %v2744, %v3032
      %v3073 = vadd.f32 %v2745, %v3035
      %3074 = vst [vmem:[#allocation2] sm:$0xff] %v3038
      %3075 = vst [vmem:[#allocation2 + $0x8] sm:$0xff] %v3039
      %3076 = vst [vmem:[#allocation2 + $0x10] sm:$0xff] %v3040
      %3077 = vst [vmem:[#allocation2 + $0x18] sm:$0xff] %v3041
      %3078 = vst [vmem:[#allocation2 + $0x20] sm:$0xff] %v3042
      %3079 = vst [vmem:[#allocation2 + $0x28] sm:$0xff] %v3043
      %3080 = vst [vmem:[#allocation2 + $0x30] sm:$0xff] %v3044
      %3081 = vst [vmem:[#allocation2 + $0x38] sm:$0xff] %v3045
      %3082 = vst [vmem:[#allocation2 + $0x40] sm:$0xff] %v3046
      %3083 = vst [vmem:[#allocation2 + $0x48] sm:$0xff] %v3047
      %3084 = vst [vmem:[#allocation2 + $0x50] sm:$0xff] %v3048
      %3085 = vst [vmem:[#allocation2 + $0x58] sm:$0xff] %v3049
      %3086 = vst [vmem:[#allocation2 + $0x60] sm:$0xff] %v3050
      %3087 = vst [vmem:[#allocation2 + $0x68] sm:$0xff] %v3051
      %3088 = vst [vmem:[#allocation2 + $0x70] sm:$0xff] %v3052
      %3089 = vst [vmem:[#allocation2 + $0x78] sm:$0xff] %v3053
      %3090 = vst [vmem:[#allocation2 + $0x80] sm:$0xff] %v3054
      %3091 = vst [vmem:[#allocation2 + $0x88] sm:$0xff] %v3055
      %3092 = vst [vmem:[#allocation2 + $0x90] sm:$0xff] %v3056
      %3093 = vst [vmem:[#allocation2 + $0x98] sm:$0xff] %v3057
      %3094 = vst [vmem:[#allocation2 + $0xa0] sm:$0xff] %v3058
      %3095 = vst [vmem:[#allocation2 + $0xa8] sm:$0xff] %v3059
      %3096 = vst [vmem:[#allocation2 + $0xb0] sm:$0xff] %v3060
      %3097 = vst [vmem:[#allocation2 + $0xb8] sm:$0xff] %v3061
      %3098 = vst [vmem:[#allocation2 + $0xc0] sm:$0xff] %v3062
      %3099 = vst [vmem:[#allocation2 + $0xc8] sm:$0xff] %v3063
      %3100 = vst [vmem:[#allocation2 + $0xd0] sm:$0xff] %v3064
      %3101 = vst [vmem:[#allocation2 + $0xd8] sm:$0xff] %v3065
      %3102 = vst [vmem:[#allocation2 + $0xe0] sm:$0xff] %v3066
      %3103 = vst [vmem:[#allocation2 + $0xe8] sm:$0xff] %v3067
      %3104 = vst [vmem:[#allocation2 + $0xf0] sm:$0xff] %v3068
      %3105 = vst [vmem:[#allocation2 + $0xf8] sm:$0xff] %v3069
      %3106 = vst [vmem:[#allocation2 + $0x100] sm:$0xff] %v3070
      %3107 = vst [vmem:[#allocation2 + $0x108] sm:$0xff] %v3071
      %3108 = vst [vmem:[#allocation2 + $0x110] sm:$0xff] %v3072
      %3109 = vst [vmem:[#allocation2 + $0x118] sm:$0xff] %v3073
      %v3110 = vld [vmem:[#allocation2] sm:$0xff]
      %v3111 = vld [vmem:[#allocation2 + $0x8] sm:$0xff]
      %v3112 = vld [vmem:[#allocation2 + $0x10] sm:$0xff]
      %v3113 = vld [vmem:[#allocation2 + $0x18] sm:$0xff]
      %v3114 = vld [vmem:[#allocation2 + $0x20] sm:$0xff]
      %v3115 = vld [vmem:[#allocation2 + $0x28] sm:$0xff]
      %v3116 = vld [vmem:[#allocation2 + $0x30] sm:$0xff]
      %v3117 = vld [vmem:[#allocation2 + $0x38] sm:$0xff]
      %v3118 = vld [vmem:[#allocation2 + $0x40] sm:$0xff]
      %v3119 = vld [vmem:[#allocation2 + $0x48] sm:$0xff]
      %v3120 = vld [vmem:[#allocation2 + $0x50] sm:$0xff]
      %v3121 = vld [vmem:[#allocation2 + $0x58] sm:$0xff]
      %v3122 = vld [vmem:[#allocation2 + $0x60] sm:$0xff]
      %v3123 = vld [vmem:[#allocation2 + $0x68] sm:$0xff]
      %v3124 = vld [vmem:[#allocation2 + $0x70] sm:$0xff]
      %v3125 = vld [vmem:[#allocation2 + $0x78] sm:$0xff]
      %v3126 = vld [vmem:[#allocation2 + $0x80] sm:$0xff]
      %v3127 = vld [vmem:[#allocation2 + $0x88] sm:$0xff]
      %v3128 = vld [vmem:[#allocation2 + $0x90] sm:$0xff]
      %v3129 = vld [vmem:[#allocation2 + $0x98] sm:$0xff]
      %v3130 = vld [vmem:[#allocation2 + $0xa0] sm:$0xff]
      %v3131 = vld [vmem:[#allocation2 + $0xa8] sm:$0xff]
      %v3132 = vld [vmem:[#allocation2 + $0xb0] sm:$0xff]
      %v3133 = vld [vmem:[#allocation2 + $0xb8] sm:$0xff]
      %v3134 = vld [vmem:[#allocation2 + $0xc0] sm:$0xff]
      %v3135 = vld [vmem:[#allocation2 + $0xc8] sm:$0xff]
      %v3136 = vld [vmem:[#allocation2 + $0xd0] sm:$0xff]
      %v3137 = vld [vmem:[#allocation2 + $0xd8] sm:$0xff]
      %v3138 = vld [vmem:[#allocation2 + $0xe0] sm:$0xff]
      %v3139 = vld [vmem:[#allocation2 + $0xe8] sm:$0xff]
      %v3140 = vld [vmem:[#allocation2 + $0xf0] sm:$0xff]
      %v3141 = vld [vmem:[#allocation2 + $0xf8] sm:$0xff]
      %v3142 = vld [vmem:[#allocation2 + $0x100] sm:$0xff]
      %v3143 = vld [vmem:[#allocation2 + $0x108] sm:$0xff]
      %v3144 = vld [vmem:[#allocation2 + $0x110] sm:$0xff]
      %v3145 = vld [vmem:[#allocation2 + $0x118] sm:$0xff]
      %s3146 = sadd.s32 %s244, 37
      %s3147 = scalar_lea.vmem [#allocation3], %s3146
      %v3148 = vld [vmem:[%s3147] sm:$0xff]
      %v3149 = vld [vmem:[%s3147 + $0x8] sm:$0xff]
      %v3150 = vld [vmem:[%s3147 + $0x10] sm:$0xff]
      %v3151 = vld [vmem:[%s3147 + $0x18] sm:$0xff]
      %v3152 = vld [vmem:[%s3147 + $0x20] sm:$0xff]
      %v3153 = vld [vmem:[%s3147 + $0x28] sm:$0xff]
      %v3154 = vld [vmem:[%s3147 + $0x30] sm:$0xff]
      %v3155 = vld [vmem:[%s3147 + $0x38] sm:$0xff]
      %v3156 = vld [vmem:[%s3147 + $0x40] sm:$0xff]
      %v3157 = vld [vmem:[%s3147 + $0x48] sm:$0xff]
      %v3158 = vld [vmem:[%s3147 + $0x50] sm:$0xff]
      %v3159 = vld [vmem:[%s3147 + $0x58] sm:$0xff]
      %v3160 = vld [vmem:[%s3147 + $0x60] sm:$0xff]
      %v3161 = vld [vmem:[%s3147 + $0x68] sm:$0xff]
      %v3162 = vld [vmem:[%s3147 + $0x70] sm:$0xff]
      %v3163 = vld [vmem:[%s3147 + $0x78] sm:$0xff]
      %v3164 = vld [vmem:[%s3147 + $0x80] sm:$0xff]
      %v3165 = vld [vmem:[%s3147 + $0x88] sm:$0xff]
      %v3166 = vld [vmem:[%s3147 + $0x90] sm:$0xff]
      %v3167 = vld [vmem:[%s3147 + $0x98] sm:$0xff]
      %v3168 = vld [vmem:[%s3147 + $0xa0] sm:$0xff]
      %v3169 = vld [vmem:[%s3147 + $0xa8] sm:$0xff]
      %v3170 = vld [vmem:[%s3147 + $0xb0] sm:$0xff]
      %v3171 = vld [vmem:[%s3147 + $0xb8] sm:$0xff]
      %v3172 = vld [vmem:[%s3147 + $0xc0] sm:$0xff]
      %v3173 = vld [vmem:[%s3147 + $0xc8] sm:$0xff]
      %v3174 = vld [vmem:[%s3147 + $0xd0] sm:$0xff]
      %v3175 = vld [vmem:[%s3147 + $0xd8] sm:$0xff]
      %v3176 = vld [vmem:[%s3147 + $0xe0] sm:$0xff]
      %v3177 = vld [vmem:[%s3147 + $0xe8] sm:$0xff]
      %v3178 = vld [vmem:[%s3147 + $0xf0] sm:$0xff]
      %v3179 = vld [vmem:[%s3147 + $0xf8] sm:$0xff]
      %v3180 = vld [vmem:[%s3147 + $0x100] sm:$0xff]
      %v3181 = vld [vmem:[%s3147 + $0x108] sm:$0xff]
      %v3182 = vld [vmem:[%s3147 + $0x110] sm:$0xff]
      %v3183 = vld [vmem:[%s3147 + $0x118] sm:$0xff]
      %v3184 = vpack.c.bf16 %v3149, %v3148
      %v3185 = vpack.c.bf16 %v3151, %v3150
      %v3186 = vpack.c.bf16 %v3153, %v3152
      %v3187 = vpack.c.bf16 %v3155, %v3154
      %v3188 = vpack.c.bf16 %v3157, %v3156
      %v3189 = vpack.c.bf16 %v3159, %v3158
      %v3190 = vpack.c.bf16 %v3161, %v3160
      %v3191 = vpack.c.bf16 %v3163, %v3162
      %v3192 = vpack.c.bf16 %v3165, %v3164
      %v3193 = vpack.c.bf16 %v3167, %v3166
      %v3194 = vpack.c.bf16 %v3169, %v3168
      %v3195 = vpack.c.bf16 %v3171, %v3170
      %v3196 = vpack.c.bf16 %v3173, %v3172
      %v3197 = vpack.c.bf16 %v3175, %v3174
      %v3198 = vpack.c.bf16 %v3177, %v3176
      %v3199 = vpack.c.bf16 %v3179, %v3178
      %v3200 = vpack.c.bf16 %v3181, %v3180
      %v3201 = vpack.c.bf16 %v3183, %v3182
      %s3202 = scalar_lea.vmem %s225, 28
      %v3203 = vld [vmem:[%s3202] sm:$0xf]
      %v3205 = vsel %vm438, %v3184, 0
      %v3208 = vsel %vm438, %v3185, 0
      %v3211 = vsel %vm438, %v3186, 0
      %v3214 = vsel %vm438, %v3187, 0
      %v3217 = vsel %vm438, %v3188, 0
      %v3220 = vsel %vm438, %v3189, 0
      %v3223 = vsel %vm438, %v3190, 0
      %v3226 = vsel %vm438, %v3191, 0
      %v3229 = vsel %vm438, %v3192, 0
      %v3232 = vsel %vm438, %v3193, 0
      %v3235 = vsel %vm438, %v3194, 0
      %v3238 = vsel %vm438, %v3195, 0
      %v3241 = vsel %vm438, %v3196, 0
      %v3244 = vsel %vm438, %v3197, 0
      %v3247 = vsel %vm438, %v3198, 0
      %v3250 = vsel %vm438, %v3199, 0
      %v3253 = vsel %vm438, %v3200, 0
      %v3256 = vsel %vm438, %v3201, 0
      %v3259 = vsel %vm493, %v3203, 0
      %3261 = vmatprep.subr.bf16.mxu0 0
      %3262 = vmatpush1.bf16.msra.mxu0 0
      %3263 = vmatprep.subr.bf16.mxu0 0
      %3264 = vmatpush1.bf16.msra.mxu0 0
      %3265 = vmatprep.subr.bf16.mxu0 0
      %3266 = vmatpush1.bf16.msra.mxu0 0
      %3267 = vmatprep.subr.bf16.mxu0 0
      %3268 = vmatpush1.bf16.msra.mxu0 0
      %3269 = vmatprep.subr.bf16.mxu0 0
      %3270 = vmatpush1.bf16.msra.mxu0 0
      %3271 = vmatprep.subr.bf16.mxu0 0
      %3272 = vmatpush1.bf16.msra.mxu0 0
      %3273 = vmatprep.subr.bf16.mxu0 0
      %3274 = vmatpush1.bf16.msra.mxu0 0
      %3275 = vmatprep.subr.bf16.mxu0 0
      %3276 = vmatpush1.bf16.msra.mxu0 %v3259
      %3277 = vmatprep.subr.bf16.mxu0 0
      %3278 = vmatpush2.bf16.msra.mxu0 0
      %3279 = vmatprep.subr.bf16.mxu0 0
      %3280 = vmatpush2.bf16.msra.mxu0 0
      %3281 = vmatprep.subr.bf16.mxu0 0
      %3282 = vmatpush2.bf16.msra.mxu0 0
      %3283 = vmatprep.subr.bf16.mxu0 0
      %3284 = vmatpush2.bf16.msra.mxu0 0
      %3285 = vmatprep.subr.bf16.mxu0 0
      %3286 = vmatpush2.bf16.msra.mxu0 0
      %3287 = vmatprep.subr.bf16.mxu0 0
      %3288 = vmatpush2.bf16.msra.mxu0 0
      %3289 = vmatprep.subr.bf16.mxu0 0
      %3290 = vmatpush2.bf16.msra.mxu0 0
      %3291 = vmatprep.subr.bf16.mxu0 0
      %3292 = vmatpush2.bf16.msra.mxu0 0
      %3293 = vmatprep.mubr.bf16.mxu0 0
      %3294 = vmatmul.mubr.bf16.gmra.mxu0 %v3205
      %v3295 = vpop.f32.mrf.mxu0
      %v3296 = vadd.f32 0.0, %v3295
      %v3297 = vpop.f32.mrf.mxu0
      %v3298 = vpop.f32.mrf.mxu0
      %v3299 = vadd.f32 0.0, %v3298
      %v3300 = vpop.f32.mrf.mxu0
      %3301 = vmatprep.mubr.bf16.mxu0 0
      %3302 = vmatmul.mubr.bf16.gmra.mxu0 %v3208
      %v3303 = vpop.f32.mrf.mxu0
      %v3304 = vadd.f32 0.0, %v3303
      %v3305 = vpop.f32.mrf.mxu0
      %v3306 = vpop.f32.mrf.mxu0
      %v3307 = vadd.f32 0.0, %v3306
      %v3308 = vpop.f32.mrf.mxu0
      %3309 = vmatprep.mubr.bf16.mxu0 0
      %3310 = vmatmul.mubr.bf16.gmra.mxu0 %v3211
      %v3311 = vpop.f32.mrf.mxu0
      %v3312 = vadd.f32 0.0, %v3311
      %v3313 = vpop.f32.mrf.mxu0
      %v3314 = vpop.f32.mrf.mxu0
      %v3315 = vadd.f32 0.0, %v3314
      %v3316 = vpop.f32.mrf.mxu0
      %3317 = vmatprep.mubr.bf16.mxu0 0
      %3318 = vmatmul.mubr.bf16.gmra.mxu0 %v3214
      %v3319 = vpop.f32.mrf.mxu0
      %v3320 = vadd.f32 0.0, %v3319
      %v3321 = vpop.f32.mrf.mxu0
      %v3322 = vpop.f32.mrf.mxu0
      %v3323 = vadd.f32 0.0, %v3322
      %v3324 = vpop.f32.mrf.mxu0
      %3325 = vmatprep.mubr.bf16.mxu0 0
      %3326 = vmatmul.mubr.bf16.gmra.mxu0 %v3217
      %v3327 = vpop.f32.mrf.mxu0
      %v3328 = vadd.f32 0.0, %v3327
      %v3329 = vpop.f32.mrf.mxu0
      %v3330 = vpop.f32.mrf.mxu0
      %v3331 = vadd.f32 0.0, %v3330
      %v3332 = vpop.f32.mrf.mxu0
      %3333 = vmatprep.mubr.bf16.mxu0 0
      %3334 = vmatmul.mubr.bf16.gmra.mxu0 %v3220
      %v3335 = vpop.f32.mrf.mxu0
      %v3336 = vadd.f32 0.0, %v3335
      %v3337 = vpop.f32.mrf.mxu0
      %v3338 = vpop.f32.mrf.mxu0
      %v3339 = vadd.f32 0.0, %v3338
      %v3340 = vpop.f32.mrf.mxu0
      %3341 = vmatprep.mubr.bf16.mxu0 0
      %3342 = vmatmul.mubr.bf16.gmra.mxu0 %v3223
      %v3343 = vpop.f32.mrf.mxu0
      %v3344 = vadd.f32 0.0, %v3343
      %v3345 = vpop.f32.mrf.mxu0
      %v3346 = vpop.f32.mrf.mxu0
      %v3347 = vadd.f32 0.0, %v3346
      %v3348 = vpop.f32.mrf.mxu0
      %3349 = vmatprep.mubr.bf16.mxu0 0
      %3350 = vmatmul.mubr.bf16.gmra.mxu0 %v3226
      %v3351 = vpop.f32.mrf.mxu0
      %v3352 = vadd.f32 0.0, %v3351
      %v3353 = vpop.f32.mrf.mxu0
      %v3354 = vpop.f32.mrf.mxu0
      %v3355 = vadd.f32 0.0, %v3354
      %v3356 = vpop.f32.mrf.mxu0
      %3357 = vmatprep.mubr.bf16.mxu0 0
      %3358 = vmatmul.mubr.bf16.gmra.mxu0 %v3229
      %v3359 = vpop.f32.mrf.mxu0
      %v3360 = vadd.f32 0.0, %v3359
      %v3361 = vpop.f32.mrf.mxu0
      %v3362 = vpop.f32.mrf.mxu0
      %v3363 = vadd.f32 0.0, %v3362
      %v3364 = vpop.f32.mrf.mxu0
      %3365 = vmatprep.mubr.bf16.mxu0 0
      %3366 = vmatmul.mubr.bf16.gmra.mxu0 %v3232
      %v3367 = vpop.f32.mrf.mxu0
      %v3368 = vadd.f32 0.0, %v3367
      %v3369 = vpop.f32.mrf.mxu0
      %v3370 = vpop.f32.mrf.mxu0
      %v3371 = vadd.f32 0.0, %v3370
      %v3372 = vpop.f32.mrf.mxu0
      %3373 = vmatprep.mubr.bf16.mxu0 0
      %3374 = vmatmul.mubr.bf16.gmra.mxu0 %v3235
      %v3375 = vpop.f32.mrf.mxu0
      %v3376 = vadd.f32 0.0, %v3375
      %v3377 = vpop.f32.mrf.mxu0
      %v3378 = vpop.f32.mrf.mxu0
      %v3379 = vadd.f32 0.0, %v3378
      %v3380 = vpop.f32.mrf.mxu0
      %3381 = vmatprep.mubr.bf16.mxu0 0
      %3382 = vmatmul.mubr.bf16.gmra.mxu0 %v3238
      %v3383 = vpop.f32.mrf.mxu0
      %v3384 = vadd.f32 0.0, %v3383
      %v3385 = vpop.f32.mrf.mxu0
      %v3386 = vpop.f32.mrf.mxu0
      %v3387 = vadd.f32 0.0, %v3386
      %v3388 = vpop.f32.mrf.mxu0
      %3389 = vmatprep.mubr.bf16.mxu0 0
      %3390 = vmatmul.mubr.bf16.gmra.mxu0 %v3241
      %v3391 = vpop.f32.mrf.mxu0
      %v3392 = vadd.f32 0.0, %v3391
      %v3393 = vpop.f32.mrf.mxu0
      %v3394 = vpop.f32.mrf.mxu0
      %v3395 = vadd.f32 0.0, %v3394
      %v3396 = vpop.f32.mrf.mxu0
      %3397 = vmatprep.mubr.bf16.mxu0 0
      %3398 = vmatmul.mubr.bf16.gmra.mxu0 %v3244
      %v3399 = vpop.f32.mrf.mxu0
      %v3400 = vadd.f32 0.0, %v3399
      %v3401 = vpop.f32.mrf.mxu0
      %v3402 = vpop.f32.mrf.mxu0
      %v3403 = vadd.f32 0.0, %v3402
      %v3404 = vpop.f32.mrf.mxu0
      %3405 = vmatprep.mubr.bf16.mxu0 0
      %3406 = vmatmul.mubr.bf16.gmra.mxu0 %v3247
      %v3407 = vpop.f32.mrf.mxu0
      %v3408 = vadd.f32 0.0, %v3407
      %v3409 = vpop.f32.mrf.mxu0
      %v3410 = vpop.f32.mrf.mxu0
      %v3411 = vadd.f32 0.0, %v3410
      %v3412 = vpop.f32.mrf.mxu0
      %3413 = vmatprep.mubr.bf16.mxu0 0
      %3414 = vmatmul.mubr.bf16.gmra.mxu0 %v3250
      %v3415 = vpop.f32.mrf.mxu0
      %v3416 = vadd.f32 0.0, %v3415
      %v3417 = vpop.f32.mrf.mxu0
      %v3418 = vpop.f32.mrf.mxu0
      %v3419 = vadd.f32 0.0, %v3418
      %v3420 = vpop.f32.mrf.mxu0
      %3421 = vmatprep.mubr.bf16.mxu0 0
      %3422 = vmatmul.mubr.bf16.gmra.mxu0 %v3253
      %v3423 = vpop.f32.mrf.mxu0
      %v3424 = vadd.f32 0.0, %v3423
      %v3425 = vpop.f32.mrf.mxu0
      %v3426 = vpop.f32.mrf.mxu0
      %v3427 = vadd.f32 0.0, %v3426
      %v3428 = vpop.f32.mrf.mxu0
      %3429 = vmatprep.mubr.bf16.mxu0 0
      %3430 = vmatmul.mubr.bf16.gmra.mxu0 %v3256
      %v3431 = vpop.f32.mrf.mxu0
      %v3432 = vadd.f32 0.0, %v3431
      %v3433 = vpop.f32.mrf.mxu0
      %v3434 = vpop.f32.mrf.mxu0
      %v3435 = vadd.f32 0.0, %v3434
      %v3436 = vpop.f32.mrf.mxu0
      %3437 = vdwg.mxu0
      %v3438 = vadd.f32 %v3110, %v3296
      %v3439 = vadd.f32 %v3111, %v3299
      %v3440 = vadd.f32 %v3112, %v3304
      %v3441 = vadd.f32 %v3113, %v3307
      %v3442 = vadd.f32 %v3114, %v3312
      %v3443 = vadd.f32 %v3115, %v3315
      %v3444 = vadd.f32 %v3116, %v3320
      %v3445 = vadd.f32 %v3117, %v3323
      %v3446 = vadd.f32 %v3118, %v3328
      %v3447 = vadd.f32 %v3119, %v3331
      %v3448 = vadd.f32 %v3120, %v3336
      %v3449 = vadd.f32 %v3121, %v3339
      %v3450 = vadd.f32 %v3122, %v3344
      %v3451 = vadd.f32 %v3123, %v3347
      %v3452 = vadd.f32 %v3124, %v3352
      %v3453 = vadd.f32 %v3125, %v3355
      %v3454 = vadd.f32 %v3126, %v3360
      %v3455 = vadd.f32 %v3127, %v3363
      %v3456 = vadd.f32 %v3128, %v3368
      %v3457 = vadd.f32 %v3129, %v3371
      %v3458 = vadd.f32 %v3130, %v3376
      %v3459 = vadd.f32 %v3131, %v3379
      %v3460 = vadd.f32 %v3132, %v3384
      %v3461 = vadd.f32 %v3133, %v3387
      %v3462 = vadd.f32 %v3134, %v3392
      %v3463 = vadd.f32 %v3135, %v3395
      %v3464 = vadd.f32 %v3136, %v3400
      %v3465 = vadd.f32 %v3137, %v3403
      %v3466 = vadd.f32 %v3138, %v3408
      %v3467 = vadd.f32 %v3139, %v3411
      %v3468 = vadd.f32 %v3140, %v3416
      %v3469 = vadd.f32 %v3141, %v3419
      %v3470 = vadd.f32 %v3142, %v3424
      %v3471 = vadd.f32 %v3143, %v3427
      %v3472 = vadd.f32 %v3144, %v3432
      %v3473 = vadd.f32 %v3145, %v3435
      %3474 = vst [vmem:[#allocation2] sm:$0xff] %v3438
      %3475 = vst [vmem:[#allocation2 + $0x8] sm:$0xff] %v3439
      %3476 = vst [vmem:[#allocation2 + $0x10] sm:$0xff] %v3440
      %3477 = vst [vmem:[#allocation2 + $0x18] sm:$0xff] %v3441
      %3478 = vst [vmem:[#allocation2 + $0x20] sm:$0xff] %v3442
      %3479 = vst [vmem:[#allocation2 + $0x28] sm:$0xff] %v3443
      %3480 = vst [vmem:[#allocation2 + $0x30] sm:$0xff] %v3444
      %3481 = vst [vmem:[#allocation2 + $0x38] sm:$0xff] %v3445
      %3482 = vst [vmem:[#allocation2 + $0x40] sm:$0xff] %v3446
      %3483 = vst [vmem:[#allocation2 + $0x48] sm:$0xff] %v3447
      %3484 = vst [vmem:[#allocation2 + $0x50] sm:$0xff] %v3448
      %3485 = vst [vmem:[#allocation2 + $0x58] sm:$0xff] %v3449
      %3486 = vst [vmem:[#allocation2 + $0x60] sm:$0xff] %v3450
      %3487 = vst [vmem:[#allocation2 + $0x68] sm:$0xff] %v3451
      %3488 = vst [vmem:[#allocation2 + $0x70] sm:$0xff] %v3452
      %3489 = vst [vmem:[#allocation2 + $0x78] sm:$0xff] %v3453
      %3490 = vst [vmem:[#allocation2 + $0x80] sm:$0xff] %v3454
      %3491 = vst [vmem:[#allocation2 + $0x88] sm:$0xff] %v3455
      %3492 = vst [vmem:[#allocation2 + $0x90] sm:$0xff] %v3456
      %3493 = vst [vmem:[#allocation2 + $0x98] sm:$0xff] %v3457
      %3494 = vst [vmem:[#allocation2 + $0xa0] sm:$0xff] %v3458
      %3495 = vst [vmem:[#allocation2 + $0xa8] sm:$0xff] %v3459
      %3496 = vst [vmem:[#allocation2 + $0xb0] sm:$0xff] %v3460
      %3497 = vst [vmem:[#allocation2 + $0xb8] sm:$0xff] %v3461
      %3498 = vst [vmem:[#allocation2 + $0xc0] sm:$0xff] %v3462
      %3499 = vst [vmem:[#allocation2 + $0xc8] sm:$0xff] %v3463
      %3500 = vst [vmem:[#allocation2 + $0xd0] sm:$0xff] %v3464
      %3501 = vst [vmem:[#allocation2 + $0xd8] sm:$0xff] %v3465
      %3502 = vst [vmem:[#allocation2 + $0xe0] sm:$0xff] %v3466
      %3503 = vst [vmem:[#allocation2 + $0xe8] sm:$0xff] %v3467
      %3504 = vst [vmem:[#allocation2 + $0xf0] sm:$0xff] %v3468
      %3505 = vst [vmem:[#allocation2 + $0xf8] sm:$0xff] %v3469
      %3506 = vst [vmem:[#allocation2 + $0x100] sm:$0xff] %v3470
      %3507 = vst [vmem:[#allocation2 + $0x108] sm:$0xff] %v3471
      %3508 = vst [vmem:[#allocation2 + $0x110] sm:$0xff] %v3472
      %3509 = vst [vmem:[#allocation2 + $0x118] sm:$0xff] %v3473
      %v3510 = vld [vmem:[#allocation2] sm:$0xff]
      %v3511 = vld [vmem:[#allocation2 + $0x8] sm:$0xff]
      %v3512 = vld [vmem:[#allocation2 + $0x10] sm:$0xff]
      %v3513 = vld [vmem:[#allocation2 + $0x18] sm:$0xff]
      %v3514 = vld [vmem:[#allocation2 + $0x20] sm:$0xff]
      %v3515 = vld [vmem:[#allocation2 + $0x28] sm:$0xff]
      %v3516 = vld [vmem:[#allocation2 + $0x30] sm:$0xff]
      %v3517 = vld [vmem:[#allocation2 + $0x38] sm:$0xff]
      %v3518 = vld [vmem:[#allocation2 + $0x40] sm:$0xff]
      %v3519 = vld [vmem:[#allocation2 + $0x48] sm:$0xff]
      %v3520 = vld [vmem:[#allocation2 + $0x50] sm:$0xff]
      %v3521 = vld [vmem:[#allocation2 + $0x58] sm:$0xff]
      %v3522 = vld [vmem:[#allocation2 + $0x60] sm:$0xff]
      %v3523 = vld [vmem:[#allocation2 + $0x68] sm:$0xff]
      %v3524 = vld [vmem:[#allocation2 + $0x70] sm:$0xff]
      %v3525 = vld [vmem:[#allocation2 + $0x78] sm:$0xff]
      %v3526 = vld [vmem:[#allocation2 + $0x80] sm:$0xff]
      %v3527 = vld [vmem:[#allocation2 + $0x88] sm:$0xff]
      %v3528 = vld [vmem:[#allocation2 + $0x90] sm:$0xff]
      %v3529 = vld [vmem:[#allocation2 + $0x98] sm:$0xff]
      %v3530 = vld [vmem:[#allocation2 + $0xa0] sm:$0xff]
      %v3531 = vld [vmem:[#allocation2 + $0xa8] sm:$0xff]
      %v3532 = vld [vmem:[#allocation2 + $0xb0] sm:$0xff]
      %v3533 = vld [vmem:[#allocation2 + $0xb8] sm:$0xff]
      %v3534 = vld [vmem:[#allocation2 + $0xc0] sm:$0xff]
      %v3535 = vld [vmem:[#allocation2 + $0xc8] sm:$0xff]
      %v3536 = vld [vmem:[#allocation2 + $0xd0] sm:$0xff]
      %v3537 = vld [vmem:[#allocation2 + $0xd8] sm:$0xff]
      %v3538 = vld [vmem:[#allocation2 + $0xe0] sm:$0xff]
      %v3539 = vld [vmem:[#allocation2 + $0xe8] sm:$0xff]
      %v3540 = vld [vmem:[#allocation2 + $0xf0] sm:$0xff]
      %v3541 = vld [vmem:[#allocation2 + $0xf8] sm:$0xff]
      %v3542 = vld [vmem:[#allocation2 + $0x100] sm:$0xff]
      %v3543 = vld [vmem:[#allocation2 + $0x108] sm:$0xff]
      %v3544 = vld [vmem:[#allocation2 + $0x110] sm:$0xff]
      %v3545 = vld [vmem:[#allocation2 + $0x118] sm:$0xff]
      %s3546 = sadd.s32 %s244, 38
      %s3547 = scalar_lea.vmem [#allocation3], %s3546
      %v3548 = vld [vmem:[%s3547] sm:$0xff]
      %v3549 = vld [vmem:[%s3547 + $0x8] sm:$0xff]
      %v3550 = vld [vmem:[%s3547 + $0x10] sm:$0xff]
      %v3551 = vld [vmem:[%s3547 + $0x18] sm:$0xff]
      %v3552 = vld [vmem:[%s3547 + $0x20] sm:$0xff]
      %v3553 = vld [vmem:[%s3547 + $0x28] sm:$0xff]
      %v3554 = vld [vmem:[%s3547 + $0x30] sm:$0xff]
      %v3555 = vld [vmem:[%s3547 + $0x38] sm:$0xff]
      %v3556 = vld [vmem:[%s3547 + $0x40] sm:$0xff]
      %v3557 = vld [vmem:[%s3547 + $0x48] sm:$0xff]
      %v3558 = vld [vmem:[%s3547 + $0x50] sm:$0xff]
      %v3559 = vld [vmem:[%s3547 + $0x58] sm:$0xff]
      %v3560 = vld [vmem:[%s3547 + $0x60] sm:$0xff]
      %v3561 = vld [vmem:[%s3547 + $0x68] sm:$0xff]
      %v3562 = vld [vmem:[%s3547 + $0x70] sm:$0xff]
      %v3563 = vld [vmem:[%s3547 + $0x78] sm:$0xff]
      %v3564 = vld [vmem:[%s3547 + $0x80] sm:$0xff]
      %v3565 = vld [vmem:[%s3547 + $0x88] sm:$0xff]
      %v3566 = vld [vmem:[%s3547 + $0x90] sm:$0xff]
      %v3567 = vld [vmem:[%s3547 + $0x98] sm:$0xff]
      %v3568 = vld [vmem:[%s3547 + $0xa0] sm:$0xff]
      %v3569 = vld [vmem:[%s3547 + $0xa8] sm:$0xff]
      %v3570 = vld [vmem:[%s3547 + $0xb0] sm:$0xff]
      %v3571 = vld [vmem:[%s3547 + $0xb8] sm:$0xff]
      %v3572 = vld [vmem:[%s3547 + $0xc0] sm:$0xff]
      %v3573 = vld [vmem:[%s3547 + $0xc8] sm:$0xff]
      %v3574 = vld [vmem:[%s3547 + $0xd0] sm:$0xff]
      %v3575 = vld [vmem:[%s3547 + $0xd8] sm:$0xff]
      %v3576 = vld [vmem:[%s3547 + $0xe0] sm:$0xff]
      %v3577 = vld [vmem:[%s3547 + $0xe8] sm:$0xff]
      %v3578 = vld [vmem:[%s3547 + $0xf0] sm:$0xff]
      %v3579 = vld [vmem:[%s3547 + $0xf8] sm:$0xff]
      %v3580 = vld [vmem:[%s3547 + $0x100] sm:$0xff]
      %v3581 = vld [vmem:[%s3547 + $0x108] sm:$0xff]
      %v3582 = vld [vmem:[%s3547 + $0x110] sm:$0xff]
      %v3583 = vld [vmem:[%s3547 + $0x118] sm:$0xff]
      %v3584 = vpack.c.bf16 %v3549, %v3548
      %v3585 = vpack.c.bf16 %v3551, %v3550
      %v3586 = vpack.c.bf16 %v3553, %v3552
      %v3587 = vpack.c.bf16 %v3555, %v3554
      %v3588 = vpack.c.bf16 %v3557, %v3556
      %v3589 = vpack.c.bf16 %v3559, %v3558
      %v3590 = vpack.c.bf16 %v3561, %v3560
      %v3591 = vpack.c.bf16 %v3563, %v3562
      %v3592 = vpack.c.bf16 %v3565, %v3564
      %v3593 = vpack.c.bf16 %v3567, %v3566
      %v3594 = vpack.c.bf16 %v3569, %v3568
      %v3595 = vpack.c.bf16 %v3571, %v3570
      %v3596 = vpack.c.bf16 %v3573, %v3572
      %v3597 = vpack.c.bf16 %v3575, %v3574
      %v3598 = vpack.c.bf16 %v3577, %v3576
      %v3599 = vpack.c.bf16 %v3579, %v3578
      %v3600 = vpack.c.bf16 %v3581, %v3580
      %v3601 = vpack.c.bf16 %v3583, %v3582
      %s3602 = scalar_lea.vmem %s225, 32
      %v3603 = vld [vmem:[%s3602] sm:$0xf]
      %v3605 = vsel %vm438, %v3584, 0
      %v3608 = vsel %vm438, %v3585, 0
      %v3611 = vsel %vm438, %v3586, 0
      %v3614 = vsel %vm438, %v3587, 0
      %v3617 = vsel %vm438, %v3588, 0
      %v3620 = vsel %vm438, %v3589, 0
      %v3623 = vsel %vm438, %v3590, 0
      %v3626 = vsel %vm438, %v3591, 0
      %v3629 = vsel %vm438, %v3592, 0
      %v3632 = vsel %vm438, %v3593, 0
      %v3635 = vsel %vm438, %v3594, 0
      %v3638 = vsel %vm438, %v3595, 0
      %v3641 = vsel %vm438, %v3596, 0
      %v3644 = vsel %vm438, %v3597, 0
      %v3647 = vsel %vm438, %v3598, 0
      %v3650 = vsel %vm438, %v3599, 0
      %v3653 = vsel %vm438, %v3600, 0
      %v3656 = vsel %vm438, %v3601, 0
      %v3659 = vsel %vm493, %v3603, 0
      %3661 = vmatprep.subr.bf16.mxu0 0
      %3662 = vmatpush1.bf16.msra.mxu0 0
      %3663 = vmatprep.subr.bf16.mxu0 0
      %3664 = vmatpush1.bf16.msra.mxu0 0
      %3665 = vmatprep.subr.bf16.mxu0 0
      %3666 = vmatpush1.bf16.msra.mxu0 0
      %3667 = vmatprep.subr.bf16.mxu0 0
      %3668 = vmatpush1.bf16.msra.mxu0 0
      %3669 = vmatprep.subr.bf16.mxu0 0
      %3670 = vmatpush1.bf16.msra.mxu0 0
      %3671 = vmatprep.subr.bf16.mxu0 0
      %3672 = vmatpush1.bf16.msra.mxu0 0
      %3673 = vmatprep.subr.bf16.mxu0 0
      %3674 = vmatpush1.bf16.msra.mxu0 0
      %3675 = vmatprep.subr.bf16.mxu0 0
      %3676 = vmatpush1.bf16.msra.mxu0 %v3659
      %3677 = vmatprep.subr.bf16.mxu0 0
      %3678 = vmatpush2.bf16.msra.mxu0 0
      %3679 = vmatprep.subr.bf16.mxu0 0
      %3680 = vmatpush2.bf16.msra.mxu0 0
      %3681 = vmatprep.subr.bf16.mxu0 0
      %3682 = vmatpush2.bf16.msra.mxu0 0
      %3683 = vmatprep.subr.bf16.mxu0 0
      %3684 = vmatpush2.bf16.msra.mxu0 0
      %3685 = vmatprep.subr.bf16.mxu0 0
      %3686 = vmatpush2.bf16.msra.mxu0 0
      %3687 = vmatprep.subr.bf16.mxu0 0
      %3688 = vmatpush2.bf16.msra.mxu0 0
      %3689 = vmatprep.subr.bf16.mxu0 0
      %3690 = vmatpush2.bf16.msra.mxu0 0
      %3691 = vmatprep.subr.bf16.mxu0 0
      %3692 = vmatpush2.bf16.msra.mxu0 0
      %3693 = vmatprep.mubr.bf16.mxu0 0
      %3694 = vmatmul.mubr.bf16.gmra.mxu0 %v3605
      %v3695 = vpop.f32.mrf.mxu0
      %v3696 = vadd.f32 0.0, %v3695
      %v3697 = vpop.f32.mrf.mxu0
      %v3698 = vpop.f32.mrf.mxu0
      %v3699 = vadd.f32 0.0, %v3698
      %v3700 = vpop.f32.mrf.mxu0
      %3701 = vmatprep.mubr.bf16.mxu0 0
      %3702 = vmatmul.mubr.bf16.gmra.mxu0 %v3608
      %v3703 = vpop.f32.mrf.mxu0
      %v3704 = vadd.f32 0.0, %v3703
      %v3705 = vpop.f32.mrf.mxu0
      %v3706 = vpop.f32.mrf.mxu0
      %v3707 = vadd.f32 0.0, %v3706
      %v3708 = vpop.f32.mrf.mxu0
      %3709 = vmatprep.mubr.bf16.mxu0 0
      %3710 = vmatmul.mubr.bf16.gmra.mxu0 %v3611
      %v3711 = vpop.f32.mrf.mxu0
      %v3712 = vadd.f32 0.0, %v3711
      %v3713 = vpop.f32.mrf.mxu0
      %v3714 = vpop.f32.mrf.mxu0
      %v3715 = vadd.f32 0.0, %v3714
      %v3716 = vpop.f32.mrf.mxu0
      %3717 = vmatprep.mubr.bf16.mxu0 0
      %3718 = vmatmul.mubr.bf16.gmra.mxu0 %v3614
      %v3719 = vpop.f32.mrf.mxu0
      %v3720 = vadd.f32 0.0, %v3719
      %v3721 = vpop.f32.mrf.mxu0
      %v3722 = vpop.f32.mrf.mxu0
      %v3723 = vadd.f32 0.0, %v3722
      %v3724 = vpop.f32.mrf.mxu0
      %3725 = vmatprep.mubr.bf16.mxu0 0
      %3726 = vmatmul.mubr.bf16.gmra.mxu0 %v3617
      %v3727 = vpop.f32.mrf.mxu0
      %v3728 = vadd.f32 0.0, %v3727
      %v3729 = vpop.f32.mrf.mxu0
      %v3730 = vpop.f32.mrf.mxu0
      %v3731 = vadd.f32 0.0, %v3730
      %v3732 = vpop.f32.mrf.mxu0
      %3733 = vmatprep.mubr.bf16.mxu0 0
      %3734 = vmatmul.mubr.bf16.gmra.mxu0 %v3620
      %v3735 = vpop.f32.mrf.mxu0
      %v3736 = vadd.f32 0.0, %v3735
      %v3737 = vpop.f32.mrf.mxu0
      %v3738 = vpop.f32.mrf.mxu0
      %v3739 = vadd.f32 0.0, %v3738
      %v3740 = vpop.f32.mrf.mxu0
      %3741 = vmatprep.mubr.bf16.mxu0 0
      %3742 = vmatmul.mubr.bf16.gmra.mxu0 %v3623
      %v3743 = vpop.f32.mrf.mxu0
      %v3744 = vadd.f32 0.0, %v3743
      %v3745 = vpop.f32.mrf.mxu0
      %v3746 = vpop.f32.mrf.mxu0
      %v3747 = vadd.f32 0.0, %v3746
      %v3748 = vpop.f32.mrf.mxu0
      %3749 = vmatprep.mubr.bf16.mxu0 0
      %3750 = vmatmul.mubr.bf16.gmra.mxu0 %v3626
      %v3751 = vpop.f32.mrf.mxu0
      %v3752 = vadd.f32 0.0, %v3751
      %v3753 = vpop.f32.mrf.mxu0
      %v3754 = vpop.f32.mrf.mxu0
      %v3755 = vadd.f32 0.0, %v3754
      %v3756 = vpop.f32.mrf.mxu0
      %3757 = vmatprep.mubr.bf16.mxu0 0
      %3758 = vmatmul.mubr.bf16.gmra.mxu0 %v3629
      %v3759 = vpop.f32.mrf.mxu0
      %v3760 = vadd.f32 0.0, %v3759
      %v3761 = vpop.f32.mrf.mxu0
      %v3762 = vpop.f32.mrf.mxu0
      %v3763 = vadd.f32 0.0, %v3762
      %v3764 = vpop.f32.mrf.mxu0
      %3765 = vmatprep.mubr.bf16.mxu0 0
      %3766 = vmatmul.mubr.bf16.gmra.mxu0 %v3632
      %v3767 = vpop.f32.mrf.mxu0
      %v3768 = vadd.f32 0.0, %v3767
      %v3769 = vpop.f32.mrf.mxu0
      %v3770 = vpop.f32.mrf.mxu0
      %v3771 = vadd.f32 0.0, %v3770
      %v3772 = vpop.f32.mrf.mxu0
      %3773 = vmatprep.mubr.bf16.mxu0 0
      %3774 = vmatmul.mubr.bf16.gmra.mxu0 %v3635
      %v3775 = vpop.f32.mrf.mxu0
      %v3776 = vadd.f32 0.0, %v3775
      %v3777 = vpop.f32.mrf.mxu0
      %v3778 = vpop.f32.mrf.mxu0
      %v3779 = vadd.f32 0.0, %v3778
      %v3780 = vpop.f32.mrf.mxu0
      %3781 = vmatprep.mubr.bf16.mxu0 0
      %3782 = vmatmul.mubr.bf16.gmra.mxu0 %v3638
      %v3783 = vpop.f32.mrf.mxu0
      %v3784 = vadd.f32 0.0, %v3783
      %v3785 = vpop.f32.mrf.mxu0
      %v3786 = vpop.f32.mrf.mxu0
      %v3787 = vadd.f32 0.0, %v3786
      %v3788 = vpop.f32.mrf.mxu0
      %3789 = vmatprep.mubr.bf16.mxu0 0
      %3790 = vmatmul.mubr.bf16.gmra.mxu0 %v3641
      %v3791 = vpop.f32.mrf.mxu0
      %v3792 = vadd.f32 0.0, %v3791
      %v3793 = vpop.f32.mrf.mxu0
      %v3794 = vpop.f32.mrf.mxu0
      %v3795 = vadd.f32 0.0, %v3794
      %v3796 = vpop.f32.mrf.mxu0
      %3797 = vmatprep.mubr.bf16.mxu0 0
      %3798 = vmatmul.mubr.bf16.gmra.mxu0 %v3644
      %v3799 = vpop.f32.mrf.mxu0
      %v3800 = vadd.f32 0.0, %v3799
      %v3801 = vpop.f32.mrf.mxu0
      %v3802 = vpop.f32.mrf.mxu0
      %v3803 = vadd.f32 0.0, %v3802
      %v3804 = vpop.f32.mrf.mxu0
      %3805 = vmatprep.mubr.bf16.mxu0 0
      %3806 = vmatmul.mubr.bf16.gmra.mxu0 %v3647
      %v3807 = vpop.f32.mrf.mxu0
      %v3808 = vadd.f32 0.0, %v3807
      %v3809 = vpop.f32.mrf.mxu0
      %v3810 = vpop.f32.mrf.mxu0
      %v3811 = vadd.f32 0.0, %v3810
      %v3812 = vpop.f32.mrf.mxu0
      %3813 = vmatprep.mubr.bf16.mxu0 0
      %3814 = vmatmul.mubr.bf16.gmra.mxu0 %v3650
      %v3815 = vpop.f32.mrf.mxu0
      %v3816 = vadd.f32 0.0, %v3815
      %v3817 = vpop.f32.mrf.mxu0
      %v3818 = vpop.f32.mrf.mxu0
      %v3819 = vadd.f32 0.0, %v3818
      %v3820 = vpop.f32.mrf.mxu0
      %3821 = vmatprep.mubr.bf16.mxu0 0
      %3822 = vmatmul.mubr.bf16.gmra.mxu0 %v3653
      %v3823 = vpop.f32.mrf.mxu0
      %v3824 = vadd.f32 0.0, %v3823
      %v3825 = vpop.f32.mrf.mxu0
      %v3826 = vpop.f32.mrf.mxu0
      %v3827 = vadd.f32 0.0, %v3826
      %v3828 = vpop.f32.mrf.mxu0
      %3829 = vmatprep.mubr.bf16.mxu0 0
      %3830 = vmatmul.mubr.bf16.gmra.mxu0 %v3656
      %v3831 = vpop.f32.mrf.mxu0
      %v3832 = vadd.f32 0.0, %v3831
      %v3833 = vpop.f32.mrf.mxu0
      %v3834 = vpop.f32.mrf.mxu0
      %v3835 = vadd.f32 0.0, %v3834
      %v3836 = vpop.f32.mrf.mxu0
      %3837 = vdwg.mxu0
      %v3838 = vadd.f32 %v3510, %v3696
      %v3839 = vadd.f32 %v3511, %v3699
      %v3840 = vadd.f32 %v3512, %v3704
      %v3841 = vadd.f32 %v3513, %v3707
      %v3842 = vadd.f32 %v3514, %v3712
      %v3843 = vadd.f32 %v3515, %v3715
      %v3844 = vadd.f32 %v3516, %v3720
      %v3845 = vadd.f32 %v3517, %v3723
      %v3846 = vadd.f32 %v3518, %v3728
      %v3847 = vadd.f32 %v3519, %v3731
      %v3848 = vadd.f32 %v3520, %v3736
      %v3849 = vadd.f32 %v3521, %v3739
      %v3850 = vadd.f32 %v3522, %v3744
      %v3851 = vadd.f32 %v3523, %v3747
      %v3852 = vadd.f32 %v3524, %v3752
      %v3853 = vadd.f32 %v3525, %v3755
      %v3854 = vadd.f32 %v3526, %v3760
      %v3855 = vadd.f32 %v3527, %v3763
      %v3856 = vadd.f32 %v3528, %v3768
      %v3857 = vadd.f32 %v3529, %v3771
      %v3858 = vadd.f32 %v3530, %v3776
      %v3859 = vadd.f32 %v3531, %v3779
      %v3860 = vadd.f32 %v3532, %v3784
      %v3861 = vadd.f32 %v3533, %v3787
      %v3862 = vadd.f32 %v3534, %v3792
      %v3863 = vadd.f32 %v3535, %v3795
      %v3864 = vadd.f32 %v3536, %v3800
      %v3865 = vadd.f32 %v3537, %v3803
      %v3866 = vadd.f32 %v3538, %v3808
      %v3867 = vadd.f32 %v3539, %v3811
      %v3868 = vadd.f32 %v3540, %v3816
      %v3869 = vadd.f32 %v3541, %v3819
      %v3870 = vadd.f32 %v3542, %v3824
      %v3871 = vadd.f32 %v3543, %v3827
      %v3872 = vadd.f32 %v3544, %v3832
      %v3873 = vadd.f32 %v3545, %v3835
      %3874 = vst [vmem:[#allocation2] sm:$0xff] %v3838
      %3875 = vst [vmem:[#allocation2 + $0x8] sm:$0xff] %v3839
      %3876 = vst [vmem:[#allocation2 + $0x10] sm:$0xff] %v3840
      %3877 = vst [vmem:[#allocation2 + $0x18] sm:$0xff] %v3841
      %3878 = vst [vmem:[#allocation2 + $0x20] sm:$0xff] %v3842
      %3879 = vst [vmem:[#allocation2 + $0x28] sm:$0xff] %v3843
      %3880 = vst [vmem:[#allocation2 + $0x30] sm:$0xff] %v3844
      %3881 = vst [vmem:[#allocation2 + $0x38] sm:$0xff] %v3845
      %3882 = vst [vmem:[#allocation2 + $0x40] sm:$0xff] %v3846
      %3883 = vst [vmem:[#allocation2 + $0x48] sm:$0xff] %v3847
      %3884 = vst [vmem:[#allocation2 + $0x50] sm:$0xff] %v3848
      %3885 = vst [vmem:[#allocation2 + $0x58] sm:$0xff] %v3849
      %3886 = vst [vmem:[#allocation2 + $0x60] sm:$0xff] %v3850
      %3887 = vst [vmem:[#allocation2 + $0x68] sm:$0xff] %v3851
      %3888 = vst [vmem:[#allocation2 + $0x70] sm:$0xff] %v3852
      %3889 = vst [vmem:[#allocation2 + $0x78] sm:$0xff] %v3853
      %3890 = vst [vmem:[#allocation2 + $0x80] sm:$0xff] %v3854
      %3891 = vst [vmem:[#allocation2 + $0x88] sm:$0xff] %v3855
      %3892 = vst [vmem:[#allocation2 + $0x90] sm:$0xff] %v3856
      %3893 = vst [vmem:[#allocation2 + $0x98] sm:$0xff] %v3857
      %3894 = vst [vmem:[#allocation2 + $0xa0] sm:$0xff] %v3858
      %3895 = vst [vmem:[#allocation2 + $0xa8] sm:$0xff] %v3859
      %3896 = vst [vmem:[#allocation2 + $0xb0] sm:$0xff] %v3860
      %3897 = vst [vmem:[#allocation2 + $0xb8] sm:$0xff] %v3861
      %3898 = vst [vmem:[#allocation2 + $0xc0] sm:$0xff] %v3862
      %3899 = vst [vmem:[#allocation2 + $0xc8] sm:$0xff] %v3863
      %3900 = vst [vmem:[#allocation2 + $0xd0] sm:$0xff] %v3864
      %3901 = vst [vmem:[#allocation2 + $0xd8] sm:$0xff] %v3865
      %3902 = vst [vmem:[#allocation2 + $0xe0] sm:$0xff] %v3866
      %3903 = vst [vmem:[#allocation2 + $0xe8] sm:$0xff] %v3867
      %3904 = vst [vmem:[#allocation2 + $0xf0] sm:$0xff] %v3868
      %3905 = vst [vmem:[#allocation2 + $0xf8] sm:$0xff] %v3869
      %3906 = vst [vmem:[#allocation2 + $0x100] sm:$0xff] %v3870
      %3907 = vst [vmem:[#allocation2 + $0x108] sm:$0xff] %v3871
      %3908 = vst [vmem:[#allocation2 + $0x110] sm:$0xff] %v3872
      %3909 = vst [vmem:[#allocation2 + $0x118] sm:$0xff] %v3873
      %v3910 = vld [vmem:[%s229] sm:$0x3]
      %v3911 = vld [vmem:[#allocation2] sm:$0xff]
      %v3912 = vld [vmem:[#allocation2 + $0x8] sm:$0xff]
      %v3913 = vld [vmem:[#allocation2 + $0x10] sm:$0xff]
      %v3914 = vld [vmem:[#allocation2 + $0x18] sm:$0xff]
      %v3915 = vld [vmem:[#allocation2 + $0x20] sm:$0xff]
      %v3916 = vld [vmem:[#allocation2 + $0x28] sm:$0xff]
      %v3917 = vld [vmem:[#allocation2 + $0x30] sm:$0xff]
      %v3918 = vld [vmem:[#allocation2 + $0x38] sm:$0xff]
      %v3919 = vld [vmem:[#allocation2 + $0x40] sm:$0xff]
      %v3920 = vld [vmem:[#allocation2 + $0x48] sm:$0xff]
      %v3921 = vld [vmem:[#allocation2 + $0x50] sm:$0xff]
      %v3922 = vld [vmem:[#allocation2 + $0x58] sm:$0xff]
      %v3923 = vld [vmem:[#allocation2 + $0x60] sm:$0xff]
      %v3924 = vld [vmem:[#allocation2 + $0x68] sm:$0xff]
      %v3925 = vld [vmem:[#allocation2 + $0x70] sm:$0xff]
      %v3926 = vld [vmem:[#allocation2 + $0x78] sm:$0xff]
      %v3927 = vld [vmem:[#allocation2 + $0x80] sm:$0xff]
      %v3928 = vld [vmem:[#allocation2 + $0x88] sm:$0xff]
      %v3929 = vld [vmem:[#allocation2 + $0x90] sm:$0xff]
      %v3930 = vld [vmem:[#allocation2 + $0x98] sm:$0xff]
      %v3931 = vld [vmem:[#allocation2 + $0xa0] sm:$0xff]
      %v3932 = vld [vmem:[#allocation2 + $0xa8] sm:$0xff]
      %v3933 = vld [vmem:[#allocation2 + $0xb0] sm:$0xff]
      %v3934 = vld [vmem:[#allocation2 + $0xb8] sm:$0xff]
      %v3935 = vld [vmem:[#allocation2 + $0xc0] sm:$0xff]
      %v3936 = vld [vmem:[#allocation2 + $0xc8] sm:$0xff]
      %v3937 = vld [vmem:[#allocation2 + $0xd0] sm:$0xff]
      %v3938 = vld [vmem:[#allocation2 + $0xd8] sm:$0xff]
      %v3939 = vld [vmem:[#allocation2 + $0xe0] sm:$0xff]
      %v3940 = vld [vmem:[#allocation2 + $0xe8] sm:$0xff]
      %v3941 = vld [vmem:[#allocation2 + $0xf0] sm:$0xff]
      %v3942 = vld [vmem:[#allocation2 + $0xf8] sm:$0xff]
      %v3943 = vld [vmem:[#allocation2 + $0x100] sm:$0xff]
      %v3944 = vld [vmem:[#allocation2 + $0x108] sm:$0xff]
      %v3945 = vld [vmem:[#allocation2 + $0x110] sm:$0xff]
      %v3946 = vld [vmem:[#allocation2 + $0x118] sm:$0xff]
      %v3947 = vlaneseq
      %v3948 = vshrl.u32 %v3947, 7
      %v3949 = vsub.s32 0, %v3948
      %v3950 = vrot.slane %v3910, %v3949
      %v3951 = vmul.f32 %v3911, %v3950
      %v3952 = vmul.f32 %v3912, %v3950
      %v3953 = vmul.f32 %v3913, %v3950
      %v3954 = vmul.f32 %v3914, %v3950
      %v3955 = vmul.f32 %v3915, %v3950
      %v3956 = vmul.f32 %v3916, %v3950
      %v3957 = vmul.f32 %v3917, %v3950
      %v3958 = vmul.f32 %v3918, %v3950
      %v3959 = vmul.f32 %v3919, %v3950
      %v3960 = vmul.f32 %v3920, %v3950
      %v3961 = vmul.f32 %v3921, %v3950
      %v3962 = vmul.f32 %v3922, %v3950
      %v3963 = vmul.f32 %v3923, %v3950
      %v3964 = vmul.f32 %v3924, %v3950
      %v3965 = vmul.f32 %v3925, %v3950
      %v3966 = vmul.f32 %v3926, %v3950
      %v3967 = vmul.f32 %v3927, %v3950
      %v3968 = vmul.f32 %v3928, %v3950
      %v3969 = vmul.f32 %v3929, %v3950
      %v3970 = vmul.f32 %v3930, %v3950
      %v3971 = vmul.f32 %v3931, %v3950
      %v3972 = vmul.f32 %v3932, %v3950
      %v3973 = vmul.f32 %v3933, %v3950
      %v3974 = vmul.f32 %v3934, %v3950
      %v3975 = vmul.f32 %v3935, %v3950
      %v3976 = vmul.f32 %v3936, %v3950
      %v3977 = vmul.f32 %v3937, %v3950
      %v3978 = vmul.f32 %v3938, %v3950
      %v3979 = vmul.f32 %v3939, %v3950
      %v3980 = vmul.f32 %v3940, %v3950
      %v3981 = vmul.f32 %v3941, %v3950
      %v3982 = vmul.f32 %v3942, %v3950
      %v3983 = vmul.f32 %v3943, %v3950
      %v3984 = vmul.f32 %v3944, %v3950
      %v3985 = vmul.f32 %v3945, %v3950
      %v3986 = vmul.f32 %v3946, %v3950
      %v3987 = vlaneseq
      %v3988 = vshrl.u32 %v3987, 7
      %v3989 = vsub.s32 1, %v3988
      %v3990 = vrot.slane %v3910, %v3989
      %v3991 = vadd.f32 %v3951, %v3990
      %v3992 = vadd.f32 %v3952, %v3990
      %v3993 = vadd.f32 %v3953, %v3990
      %v3994 = vadd.f32 %v3954, %v3990
      %v3995 = vadd.f32 %v3955, %v3990
      %v3996 = vadd.f32 %v3956, %v3990
      %v3997 = vadd.f32 %v3957, %v3990
      %v3998 = vadd.f32 %v3958, %v3990
      %v3999 = vadd.f32 %v3959, %v3990
      %v4000 = vadd.f32 %v3960, %v3990
      %v4001 = vadd.f32 %v3961, %v3990
      %v4002 = vadd.f32 %v3962, %v3990
      %v4003 = vadd.f32 %v3963, %v3990
      %v4004 = vadd.f32 %v3964, %v3990
      %v4005 = vadd.f32 %v3965, %v3990
      %v4006 = vadd.f32 %v3966, %v3990
      %v4007 = vadd.f32 %v3967, %v3990
      %v4008 = vadd.f32 %v3968, %v3990
      %v4009 = vadd.f32 %v3969, %v3990
      %v4010 = vadd.f32 %v3970, %v3990
      %v4011 = vadd.f32 %v3971, %v3990
      %v4012 = vadd.f32 %v3972, %v3990
      %v4013 = vadd.f32 %v3973, %v3990
      %v4014 = vadd.f32 %v3974, %v3990
      %v4015 = vadd.f32 %v3975, %v3990
      %v4016 = vadd.f32 %v3976, %v3990
      %v4017 = vadd.f32 %v3977, %v3990
      %v4018 = vadd.f32 %v3978, %v3990
      %v4019 = vadd.f32 %v3979, %v3990
      %v4020 = vadd.f32 %v3980, %v3990
      %v4021 = vadd.f32 %v3981, %v3990
      %v4022 = vadd.f32 %v3982, %v3990
      %v4023 = vadd.f32 %v3983, %v3990
      %v4024 = vadd.f32 %v3984, %v3990
      %v4025 = vadd.f32 %v3985, %v3990
      %v4026 = vadd.f32 %v3986, %v3990
      %v4027 = vmax.f32 %v3991, 0.0
      %v4028 = vmax.f32 %v3992, 0.0
      %v4029 = vmax.f32 %v3993, 0.0
      %v4030 = vmax.f32 %v3994, 0.0
      %v4031 = vmax.f32 %v3995, 0.0
      %v4032 = vmax.f32 %v3996, 0.0
      %v4033 = vmax.f32 %v3997, 0.0
      %v4034 = vmax.f32 %v3998, 0.0
      %v4035 = vmax.f32 %v3999, 0.0
      %v4036 = vmax.f32 %v4000, 0.0
      %v4037 = vmax.f32 %v4001, 0.0
      %v4038 = vmax.f32 %v4002, 0.0
      %v4039 = vmax.f32 %v4003, 0.0
      %v4040 = vmax.f32 %v4004, 0.0
      %v4041 = vmax.f32 %v4005, 0.0
      %v4042 = vmax.f32 %v4006, 0.0
      %v4043 = vmax.f32 %v4007, 0.0
      %v4044 = vmax.f32 %v4008, 0.0
      %v4045 = vmax.f32 %v4009, 0.0
      %v4046 = vmax.f32 %v4010, 0.0
      %v4047 = vmax.f32 %v4011, 0.0
      %v4048 = vmax.f32 %v4012, 0.0
      %v4049 = vmax.f32 %v4013, 0.0
      %v4050 = vmax.f32 %v4014, 0.0
      %v4051 = vmax.f32 %v4015, 0.0
      %v4052 = vmax.f32 %v4016, 0.0
      %v4053 = vmax.f32 %v4017, 0.0
      %v4054 = vmax.f32 %v4018, 0.0
      %v4055 = vmax.f32 %v4019, 0.0
      %v4056 = vmax.f32 %v4020, 0.0
      %v4057 = vmax.f32 %v4021, 0.0
      %v4058 = vmax.f32 %v4022, 0.0
      %v4059 = vmax.f32 %v4023, 0.0
      %v4060 = vmax.f32 %v4024, 0.0
      %v4061 = vmax.f32 %v4025, 0.0
      %v4062 = vmax.f32 %v4026, 0.0
      %4063 = vst [vmem:[%s241] sm:$0xff] %v4027
      %4064 = vst [vmem:[%s241 + $0x8] sm:$0xff] %v4028
      %4065 = vst [vmem:[%s241 + $0x10] sm:$0xff] %v4029
      %4066 = vst [vmem:[%s241 + $0x18] sm:$0xff] %v4030
      %4067 = vst [vmem:[%s241 + $0x20] sm:$0xff] %v4031
      %4068 = vst [vmem:[%s241 + $0x28] sm:$0xff] %v4032
      %4069 = vst [vmem:[%s241 + $0x30] sm:$0xff] %v4033
      %4070 = vst [vmem:[%s241 + $0x38] sm:$0xff] %v4034
      %4071 = vst [vmem:[%s241 + $0x40] sm:$0xff] %v4035
      %4072 = vst [vmem:[%s241 + $0x48] sm:$0xff] %v4036
      %4073 = vst [vmem:[%s241 + $0x50] sm:$0xff] %v4037
      %4074 = vst [vmem:[%s241 + $0x58] sm:$0xff] %v4038
      %4075 = vst [vmem:[%s241 + $0x60] sm:$0xff] %v4039
      %4076 = vst [vmem:[%s241 + $0x68] sm:$0xff] %v4040
      %4077 = vst [vmem:[%s241 + $0x70] sm:$0xff] %v4041
      %4078 = vst [vmem:[%s241 + $0x78] sm:$0xff] %v4042
      %4079 = vst [vmem:[%s241 + $0x80] sm:$0xff] %v4043
      %4080 = vst [vmem:[%s241 + $0x88] sm:$0xff] %v4044
      %4081 = vst [vmem:[%s241 + $0x90] sm:$0xff] %v4045
      %4082 = vst [vmem:[%s241 + $0x98] sm:$0xff] %v4046
      %4083 = vst [vmem:[%s241 + $0xa0] sm:$0xff] %v4047
      %4084 = vst [vmem:[%s241 + $0xa8] sm:$0xff] %v4048
      %4085 = vst [vmem:[%s241 + $0xb0] sm:$0xff] %v4049
      %4086 = vst [vmem:[%s241 + $0xb8] sm:$0xff] %v4050
      %4087 = vst [vmem:[%s241 + $0xc0] sm:$0xff] %v4051
      %4088 = vst [vmem:[%s241 + $0xc8] sm:$0xff] %v4052
      %4089 = vst [vmem:[%s241 + $0xd0] sm:$0xff] %v4053
      %4090 = vst [vmem:[%s241 + $0xd8] sm:$0xff] %v4054
      %4091 = vst [vmem:[%s241 + $0xe0] sm:$0xff] %v4055
      %4092 = vst [vmem:[%s241 + $0xe8] sm:$0xff] %v4056
      %4093 = vst [vmem:[%s241 + $0xf0] sm:$0xff] %v4057
      %4094 = vst [vmem:[%s241 + $0xf8] sm:$0xff] %v4058
      %4095 = vst [vmem:[%s241 + $0x100] sm:$0xff] %v4059
      %4096 = vst [vmem:[%s241 + $0x108] sm:$0xff] %v4060
      %4097 = vst [vmem:[%s241 + $0x110] sm:$0xff] %v4061
      %4098 = vst [vmem:[%s241 + $0x118] sm:$0xff] %v4062
      %s4099 = smul.u32 36, %s21
      %p4100 = scmp.lt.s32.totalorder %s19, 1
      %s4101 = scalar_select %p4100, %s19, 1
      %p4102 = scmp.lt.s32.totalorder %s4099, 35
      %s4103 = scalar_select %p4102, %s4099, 35
      %p4104 = scmp.lt.s32.totalorder %s20, 0
      %s4105 = scalar_select %p4104, %s20, 0
      %s4106 = sadd.s32 %s4105, %s4103
      %s4107 = smul.addr %s4101, 36
      %s4108 = sadd.s32 %s4106, %s4107
      %s4109 = smul.addr %s4108, 8
      %s4110 = scalar_lea.vmem %s3, %s4109
      // Predicated region
      $region37: #{conv_block_forward.1} parent=31 // pred_check
        %p4111 = pneg %p133
      $region38: #{conv_block_forward.1} parent=31 // pred_check_branch
        %4113 = sbr.rel (%p4111) target = $region40
      $region39: #{conv_block_forward.1} parent=31 // pred_region
        %s4114 = smul.u32 36, %s21
      $region40: #{conv_block_forward.1} parent=31 // pred_fallthru
        _
    $region32: #{conv_block_forward.1} parent=5 // pred_fallthru
      _
    %p4115 = scmp.le.s32.totalorder 2, %s9
    // Predicated region
    $region41: #{conv_block_forward.1} parent=5 // pred_check
      %p4116 = pneg %p4115
    $region42: #{conv_block_forward.1} parent=5 // pred_check_branch
      %4118 = sbr.rel (%p4116) target = $region44
    $region43: #{conv_block_forward.1} parent=5 // pred_region
      %s4119 = ssub.s32 %s9, 2
      // Predicated region
      $region45: #{conv_block_forward.1} parent=43 // pred_check
        %p4120 = pneg %p139
      $region46: #{conv_block_forward.1} parent=43 // pred_check_branch
        %4122 = sbr.rel (%p4120) target = $region48
      $region47: #{conv_block_forward.1} parent=43 // pred_region
        %s4123 = smul.u32 36, %s24
        %p4124 = scmp.lt.s32.totalorder %s22, 1
        %s4125 = scalar_select %p4124, %s22, 1
        %p4126 = scmp.lt.s32.totalorder %s4123, 35
        %s4127 = scalar_select %p4126, %s4123, 35
        %p4128 = scmp.lt.s32.totalorder %s23, 0
        %s4129 = scalar_select %p4128, %s23, 0
        %s4130 = sadd.s32 %s4129, %s4127
        %s4131 = smul.addr %s4125, 36
        %s4132 = sadd.s32 %s4130, %s4131
        %s4133 = smul.addr %s4132, 8
        %s4134 = scalar_lea.vmem %s3, %s4133
      $region48: #{conv_block_forward.1} parent=43 // pred_fallthru
        _
    $region44: #{conv_block_forward.1} parent=5 // pred_fallthru
      _
  $region6: #{conv_block_forward.1} parent=0 // loop_footer
    %s13 = sadd.s32 1, %s9
  $region7: #{conv_block_forward.1} parent=0 // loop_footer_branch
    %8 = sbr.rel target = $region3
  $region8: #{conv_block_forward.1} parent=0 // loop_exit
    _

</llo_original>
